<compile_context>
chip_gen: v5e
topology: v5e:2x2
jax: 0.10.0
libtpu: 0.0.40
codegen_flags: <defaults>
</compile_context>

<pallas_src>
import functools

import jax
import jax.numpy as jnp
from jax.experimental import pallas as pl
from jax.experimental.pallas import tpu as pltpu


# ----------------------------------------------------------------------------- #
# helpers
# ----------------------------------------------------------------------------- #
_PAIR_CHUNK = 16384  # lane chunk for the pair-loss kernels (multiple of 128)

_CP_PAIR = pltpu.CompilerParams(
    dimension_semantics=("parallel", "arbitrary"),
)


def _round_up(x, m):
    return ((x + m - 1) // m) * m


def _img_compiler_params(H, W):
    # Whole-image blocks: per-step VMEM ~ (in + out planes, double-buffered) + temporaries.
    # TODO(synk): row-tile pass 2 (grid=(N, H//TH) with a 1-2 row halo) for very large
    # images on v7x (64 MiB physical VMEM); whole-image blocks are fine for moderate sizes.
    plane = H * W * 4
    limit = int(min(48 * 2**20, max(32 * 2**20, 64 * plane)))
    return pltpu.CompilerParams(
        dimension_semantics=("parallel",),
        vmem_limit_bytes=limit,
    )


def _sh(x, dr, dc):
    """Value at (r, c) becomes x(r + dr, c + dc); wrap-around rows/cols are handled by
    the callers' border masks.  Static-shift rolls lower to slice+concat in registers."""
    y = x
    if dr != 0:
        y = jnp.roll(y, -dr, axis=0)
    if dc != 0:
        y = jnp.roll(y, -dc, axis=1)
    return y


def _sobel_full(x):
    """Full-plane separable 3x3 Sobel (cross-correlation); border rows/cols are garbage
    (wrap-around) and must be masked by the caller."""
    xu = _sh(x, -1, 0)                     # x(r-1, c)
    xd = _sh(x, 1, 0)                      # x(r+1, c)
    colsum = xu + 2.0 * x + xd             # [1, 2, 1]^T along rows
    rdiff = xu - xd                        # x(r-1, c) - x(r+1, c)
    gx = _sh(colsum, 0, 1) - _sh(colsum, 0, -1)
    gy = _sh(rdiff, 0, -1) + 2.0 * rdiff + _sh(rdiff, 0, 1)
    return gx, gy


def _keep_mask(H, W, pad):
    r = jax.lax.broadcasted_iota(jnp.int32, (H, W), 0)
    c = jax.lax.broadcasted_iota(jnp.int32, (H, W), 1)
    return ((r >= pad) & (r < H - pad) & (c >= pad) & (c < W - pad)).astype(jnp.float32)


def _core_mask(H, W):
    r = jax.lax.broadcasted_iota(jnp.int32, (H, W), 0)
    c = jax.lax.broadcasted_iota(jnp.int32, (H, W), 1)
    return ((r < H - 1) & (c < W - 1)).astype(jnp.float32)


# ----------------------------------------------------------------------------- #
# Pallas kernels
# ----------------------------------------------------------------------------- #
def _image_depth_edge_kernel(img_ref, dep_ref, ei_ref, ci_ref, si_ref, ed_ref, dmax_ref):
    """Sobel edges of image channel 0 and of gt depth, fused |cos|/|sin| of the image
    gradient direction, and the per-image max of the depth edges (lane 0)."""
    H, W = dep_ref.shape[2], dep_ref.shape[3]
    interior = _keep_mask(H, W, 1)

    gx, gy = _sobel_full(img_ref[0, 0])
    e = jnp.sqrt(gx * gx + gy * gy) * interior
    den = jnp.maximum(e, 1e-30)
    # theta = atan2(gy, gx); |cos| = |gx|/|g|, |sin| = |gy|/|g|; atan2(0,0)=0 -> cos=1,sin=0
    ei_ref[0] = e
    ci_ref[0] = jnp.where(e > 0.0, jnp.abs(gx) / den, 1.0)
    si_ref[0] = jnp.where(e > 0.0, jnp.abs(gy) / den, 0.0)

    gx, gy = _sobel_full(dep_ref[0, 0])
    ed = jnp.sqrt(gx * gx + gy * gy) * interior
    ed_ref[0] = ed
    lane = jax.lax.broadcasted_iota(jnp.int32, dmax_ref.shape, 2)
    dmax_ref[...] = jnp.where(lane == 0, jnp.max(ed), 0.0)


def _normals_edge_kernel(pred_ref, gt_ref, f_ref, inorm_ref, tnorm_ref,
                         en_ref, cn_ref, sn_ref, *, mask_value):
    """Fused: back-projection + surface normals of pred & gt depth + grouped Sobel over
    the (in-register) gt normals (edges_normal, |cos|, |sin|) + 5-pixel border zeroing.

    TODO(synk): the original LeReS surface_normal_from_depth (patch least-squares normals)
    is external to this module; approximated with cross products of forward differences of
    back-projected 3D points (centered principal point), invalid pixels zeroed.
    """
    H, W = gt_ref.shape[2], gt_ref.shape[3]
    b = pl.program_id(0)
    inv_f = 1.0 / f_ref[b]

    zp = pred_ref[0, 0]
    zg = gt_ref[0, 0]
    colf = (jax.lax.broadcasted_iota(jnp.int32, (H, W), 1).astype(jnp.float32)
            - (W - 1) / 2.0)
    rowf = (jax.lax.broadcasted_iota(jnp.int32, (H, W), 0).astype(jnp.float32)
            - (H - 1) / 2.0)
    # forward differences exist on the (H-1, W-1) core; the last row/col normals are zero
    valid = jnp.where(zg > mask_value, 1.0, 0.0) * _core_mask(H, W)

    def normals(z):
        z_r = _sh(z, 0, 1)            # z(r, c+1)
        z_d = _sh(z, 1, 0)            # z(r+1, c)
        z1 = z_r - z                  # d/dc z
        z2 = z_d - z                  # d/dr z
        x1 = (z1 * colf + z_r) * inv_f
        y1 = z1 * rowf * inv_f
        x2 = z2 * colf * inv_f
        y2 = (z2 * rowf + z_d) * inv_f
        nx = y1 * z2 - z1 * y2
        ny = z1 * x2 - x1 * z2
        nz = x1 * y2 - y1 * x2
        inv = jax.lax.rsqrt(nx * nx + ny * ny + nz * nz + 1e-12)
        return (nx * inv * valid, ny * inv * valid, nz * inv * valid)

    pn = normals(zp)
    tn = normals(zg)
    for ch in range(3):
        inorm_ref[0, ch] = pn[ch]
        tnorm_ref[0, ch] = tn[ch]

    # grouped Sobel over the in-register target normals (no VMEM round trip)
    gx_acc = jnp.zeros((H, W), jnp.float32)
    gy_acc = jnp.zeros((H, W), jnp.float32)
    for ch in range(3):
        gx, gy = _sobel_full(tn[ch])
        gx_acc = gx_acc + jnp.abs(gx)
        gy_acc = gy_acc + jnp.abs(gy)
    gxm = gx_acc * (1.0 / 3.0)
    gym = gy_acc * (1.0 / 3.0)

    interior = _keep_mask(H, W, 1)
    e = jnp.sqrt(gxm * gxm + gym * gym) * interior
    den = jnp.maximum(e, 1e-30)
    cn_ref[0] = jnp.where(e > 0.0, gxm / den, 1.0)   # gxm, gym >= 0
    sn_ref[0] = jnp.where(e > 0.0, gym / den, 0.0)
    # reference: edges_normal[mask_img_border] = 0 (5-pixel frame around the image)
    en_ref[0] = e * _keep_mask(H, W, 5)


def _dilate_mask_kernel(ed_ref, thr_ref, ei_ref, en_ref, eim_ref, enm_ref, mx_ref):
    """edges_mask_dilate = (3x3 ones conv of (edges_depth >= thr), pad=1) > 0; zero
    edges_img / edges_normal where dilated; emit per-image maxima of the masked edges."""
    thr = thr_ref[0]
    m = jnp.where(ed_ref[0] >= thr, 1.0, 0.0)
    # edges_depth has a zero 1-px border, so wrap-around rolls contribute zeros whenever
    # thr > 0; for thr == 0 the mask is all-ones anyway -> dilation unaffected.
    mv = jnp.maximum(m, jnp.maximum(_sh(m, -1, 0), _sh(m, 1, 0)))
    dil = jnp.maximum(mv, jnp.maximum(_sh(mv, 0, -1), _sh(mv, 0, 1))) > 0.0

    eim = jnp.where(dil, 0.0, ei_ref[0])
    enm = jnp.where(dil, 0.0, en_ref[0])
    eim_ref[0] = eim
    enm_ref[0] = enm
    lane = jax.lax.broadcasted_iota(jnp.int32, mx_ref.shape, 2)
    mx_ref[...] = (jnp.where(lane == 0, jnp.max(eim), 0.0)
                   + jnp.where(lane == 1, jnp.max(enm), 0.0))


def _edge_pair_kernel(a_ref, b_ref, m_ref, o_ref, *, t1, t2):
    """Edge-guided pair loss partial sums accumulated across lane chunks into (1,1,128):
    lanes 0..3 = [sum|tc-ic| on cos75, count75, sum|tc-ic| on cos10, count10].
    a_ref/b_ref blocks are (1, 6, chunk): rows 0..2 pred normals, rows 3..5 gt normals."""
    c = pl.program_id(1)

    @pl.when(c == 0)
    def _init():
        o_ref[...] = jnp.zeros(o_ref.shape, jnp.float32)

    sa = a_ref[0]
    sb = b_ref[0]
    ic = jnp.abs(sa[0:1] * sb[0:1] + sa[1:2] * sb[1:2] + sa[2:3] * sb[2:3])
    tc = jnp.abs(sa[3:4] * sb[3:4] + sa[4:5] * sb[4:5] + sa[5:6] * sb[5:6])
    mm = m_ref[0]
    diff = jnp.abs(tc - ic)
    m75 = jnp.where(tc < t1, 1.0, 0.0) * mm
    m10 = jnp.where(tc > t2, 1.0, 0.0) * mm
    s75 = jnp.sum(diff * m75)
    c75 = jnp.sum(m75)
    s10 = jnp.sum(diff * m10)
    c10 = jnp.sum(m10)

    lane = jax.lax.broadcasted_iota(jnp.int32, o_ref.shape, 2)
    o_ref[...] += (jnp.where(lane == 0, s75, 0.0)
                   + jnp.where(lane == 1, c75, 0.0)
                   + jnp.where(lane == 2, s10, 0.0)
                   + jnp.where(lane == 3, c10, 0.0))


def _rand_pair_kernel(m2_ref, a_ref, b_ref, o_ref, *, chunk):
    """Random-pair loss partial sum: sum |tc-ic| over the first m2 pairs (per batch)."""
    b = pl.program_id(0)
    c = pl.program_id(1)

    @pl.when(c == 0)
    def _init():
        o_ref[...] = jnp.zeros(o_ref.shape, jnp.float32)

    sa = a_ref[0]
    sb = b_ref[0]
    ic = jnp.abs(sa[0:1] * sb[0:1] + sa[1:2] * sb[1:2] + sa[2:3] * sb[2:3])
    tc = jnp.abs(sa[3:4] * sb[3:4] + sa[4:5] * sb[4:5] + sa[5:6] * sb[5:6])

    m2 = m2_ref[b]
    gidx = c * chunk + jax.lax.broadcasted_iota(jnp.int32, tc.shape, 1)
    valid = jnp.where(gidx < m2, 1.0, 0.0)
    s = jnp.sum(jnp.abs(tc - ic) * valid)

    lane = jax.lax.broadcasted_iota(jnp.int32, o_ref.shape, 2)
    o_ref[...] += jnp.where(lane == 0, s, 0.0)


# ----------------------------------------------------------------------------- #
# Static-capacity sampling glue (device-side, jittable, vmapped over batch)
# ----------------------------------------------------------------------------- #
def _edge_guided_sample(edges, abscos, abssin, masks, emax, key, *, h, w, cap):
    """Returns fixed-capacity pair indices A, B (3*cap,) and a validity mask."""
    edge_mask = edges >= emax * 0.1
    minlen = jnp.sum(edge_mask).astype(jnp.int32)                 # >= 1 always
    # edge pixel flat positions, edge pixels first (stable sort, row-major within groups)
    edges_loc = jnp.argsort(jnp.logical_not(edge_mask).astype(jnp.int32))

    k1, k2 = jax.random.split(key)
    index_anchors = jax.random.randint(k1, (cap,), 0, jnp.maximum(minlen, 1))
    anchor_pos = edges_loc[index_anchors].astype(jnp.int32)
    ac = abscos[anchor_pos]
    asn = abssin[anchor_pos]
    row_anchors = anchor_pos // w
    col_anchors = anchor_pos - row_anchors * w

    distance = jax.random.randint(k2, (4, cap), 3, 20).astype(jnp.float32)
    sign = jnp.concatenate([-jnp.ones((2, cap), jnp.float32),
                            jnp.ones((2, cap), jnp.float32)], axis=0)
    distance = distance * sign

    col = col_anchors[None, :] + jnp.round(distance * ac[None, :]).astype(jnp.int32)
    row = row_anchors[None, :] + jnp.round(distance * asn[None, :]).astype(jnp.int32)
    col = jnp.clip(col, 0, w - 1)
    row = jnp.clip(row, 0, h - 1)
    idx = row * w + col                                           # (4, cap)

    A = jnp.concatenate([idx[0], idx[1], idx[2]], axis=0)         # (3*cap,)
    B = jnp.concatenate([idx[1], idx[2], idx[3]], axis=0)
    active = jnp.arange(cap, dtype=jnp.int32) < minlen            # first min(minlen,cap) anchors
    active3 = jnp.concatenate([active, active, active], axis=0)
    valid = masks[A] & masks[B] & active3
    return A, B, valid


def _random_pair_indices(masks, key, *, cap):
    """Fixed-capacity random pairs among valid pixels (valid pixels first, random order)."""
    HW = masks.shape[0]
    pr = jax.random.uniform(key, (HW,), jnp.float32)
    pr = jnp.where(masks, pr, 2.0)
    perm = jnp.argsort(pr)
    return perm[0:2 * cap:2], perm[1:2 * cap:2]


# ----------------------------------------------------------------------------- #
# The module
# ----------------------------------------------------------------------------- #
class EdgeguidedNormalRegressionLoss:
    def __init__(self, point_pairs=10000, cos_theta1=0.3, cos_theta2=0.95,
                 cos_theta3=0.5, cos_theta4=0.86, mask_value=-1e-08,
                 max_threshold=10.1):
        self.point_pairs = int(point_pairs)
        self.mask_value = float(mask_value)
        self.max_threshold = max_threshold
        self.cos_theta1 = float(cos_theta1)
        self.cos_theta2 = float(cos_theta2)
        self.cos_theta3 = cos_theta3
        self.cos_theta4 = cos_theta4
        # (the 3x3 all-ones dilation kernel is hard-coded inside _dilate_mask_kernel)
        self._jit_forward = jax.jit(self._forward_impl)

    # ------------------------------------------------------------------ #
    def _forward_impl(self, pred_depths, gt_depths, images, focal_length, key):
        f32 = jnp.float32
        N, _, H, W = gt_depths.shape
        HW = H * W
        pred_depths = pred_depths.astype(f32)
        gt_depths = gt_depths.astype(f32)
        images = images.astype(f32)
        focal = focal_length.reshape(N).astype(f32)
        cp_img = _img_compiler_params(H, W)

        # ---- pass 1: image / depth Sobel edges (+ per-image depth-edge max) ----- #
        edges_img0, abscos_img, abssin_img, edges_depth, dmax = pl.pallas_call(
            _image_depth_edge_kernel,
            out_shape=(jax.ShapeDtypeStruct((N, H, W), f32),
                       jax.ShapeDtypeStruct((N, H, W), f32),
                       jax.ShapeDtypeStruct((N, H, W), f32),
                       jax.ShapeDtypeStruct((N, H, W), f32),
                       jax.ShapeDtypeStruct((N, 1, 128), f32)),
            grid=(N,),
            in_specs=[pl.BlockSpec((1, 1, H, W), lambda i: (i, 0, 0, 0)),
                      pl.BlockSpec((1, 1, H, W), lambda i: (i, 0, 0, 0))],
            out_specs=(pl.BlockSpec((1, H, W), lambda i: (i, 0, 0)),
                       pl.BlockSpec((1, H, W), lambda i: (i, 0, 0)),
                       pl.BlockSpec((1, H, W), lambda i: (i, 0, 0)),
                       pl.BlockSpec((1, H, W), lambda i: (i, 0, 0)),
                       pl.BlockSpec((1, 1, 128), lambda i: (i, 0, 0))),
            compiler_params=cp_img,
        )(images, gt_depths)

        # ---- pass 2: fused surface normals (pred & gt) + gt normal edges -------- #
        inputs_n, targets_n, edges_normal0, abscos_n, abssin_n = pl.pallas_call(
            functools.partial(_normals_edge_kernel, mask_value=self.mask_value),
            out_shape=(jax.ShapeDtypeStruct((N, 3, H, W), f32),
                       jax.ShapeDtypeStruct((N, 3, H, W), f32),
                       jax.ShapeDtypeStruct((N, H, W), f32),
                       jax.ShapeDtypeStruct((N, H, W), f32),
                       jax.ShapeDtypeStruct((N, H, W), f32)),
            grid=(N,),
            in_specs=[pl.BlockSpec((1, 1, H, W), lambda i: (i, 0, 0, 0)),
                      pl.BlockSpec((1, 1, H, W), lambda i: (i, 0, 0, 0)),
                      pl.BlockSpec(memory_space=pltpu.MemorySpace.SMEM)],
            out_specs=(pl.BlockSpec((1, 3, H, W), lambda i: (i, 0, 0, 0)),
                       pl.BlockSpec((1, 3, H, W), lambda i: (i, 0, 0, 0)),
                       pl.BlockSpec((1, H, W), lambda i: (i, 0, 0)),
                       pl.BlockSpec((1, H, W), lambda i: (i, 0, 0)),
                       pl.BlockSpec((1, H, W), lambda i: (i, 0, 0))),
            compiler_params=cp_img,
        )(pred_depths, gt_depths, focal)

        # ---- pass 3: global depth-edge threshold + dilation masking (in place) -- #
        thr = (0.1 * jnp.max(dmax[:, 0, 0])).reshape(1).astype(f32)
        edges_img, edges_normal, emax = pl.pallas_call(
            _dilate_mask_kernel,
            out_shape=(jax.ShapeDtypeStruct((N, H, W), f32),
                       jax.ShapeDtypeStruct((N, H, W), f32),
                       jax.ShapeDtypeStruct((N, 1, 128), f32)),
            grid=(N,),
            in_specs=[pl.BlockSpec((1, H, W), lambda i: (i, 0, 0)),
                      pl.BlockSpec(memory_space=pltpu.MemorySpace.SMEM),
                      pl.BlockSpec((1, H, W), lambda i: (i, 0, 0)),
                      pl.BlockSpec((1, H, W), lambda i: (i, 0, 0))],
            out_specs=(pl.BlockSpec((1, H, W), lambda i: (i, 0, 0)),
                       pl.BlockSpec((1, H, W), lambda i: (i, 0, 0)),
                       pl.BlockSpec((1, 1, 128), lambda i: (i, 0, 0))),
            input_output_aliases={2: 0, 3: 1},
            compiler_params=cp_img,
        )(edges_depth, thr, edges_img0, edges_normal0)
        ei_max = emax[:, 0, 0]
        en_max = emax[:, 0, 1]

        # ---- flatten for sampling (free contiguous reshapes) --------------------- #
        inputs_f = inputs_n.reshape(N, 3, HW)
        targets_f = targets_n.reshape(N, 3, HW)
        stacked = jnp.concatenate([inputs_f, targets_f], axis=1)     # (N, 6, HW)
        ei_f = edges_img.reshape(N, HW)
        ci_f = abscos_img.reshape(N, HW)
        si_f = abssin_img.reshape(N, HW)
        en_f = edges_normal.reshape(N, HW)
        cn_f = abscos_n.reshape(N, HW)
        sn_f = abssin_n.reshape(N, HW)
        masks_f = gt_depths.reshape(N, HW) > self.mask_value

        keys = jax.random.split(key, 3 * N)
        k_img, k_nrm, k_rnd = keys[0:N], keys[N:2 * N], keys[2 * N:3 * N]

        # ---- edge-guided pair sampling (static capacity, masked) ---------------- #
        # anchor capacity capped at O(point_pairs) (reference uses all edge pixels).
        cap = max(min(HW, _round_up(max(self.point_pairs, 128), 128)), 128)
        cap = min(cap, HW)
        samp = jax.vmap(functools.partial(_edge_guided_sample, h=H, w=W, cap=cap),
                        in_axes=(0, 0, 0, 0, 0, 0))
        A1, B1, v1 = samp(ei_f, ci_f, si_f, masks_f, ei_max, k_img)
        A2, B2, v2 = samp(en_f, cn_f, sn_f, masks_f, en_max, k_nrm)
        A = jnp.concatenate([A1, A2], axis=1)
        B = jnp.concatenate([B1, B2], axis=1)
        valid = jnp.concatenate([v1, v2], axis=1)

        L = A.shape[1]                               # 6 * cap (static)
        chunk = min(_round_up(L, 128), _PAIR_CHUNK)
        Lp = _round_up(L, chunk)
        A = jnp.pad(A, ((0, 0), (0, Lp - L)))
        B = jnp.pad(B, ((0, 0), (0, Lp - L)))
        valid = jnp.pad(valid, ((0, 0), (0, Lp - L)))

        gat = jax.vmap(lambda x, idx: x[:, idx])
        SA = gat(stacked, A)                          # (N, 6, Lp)
        SB = gat(stacked, B)
        vmask = valid.astype(f32)[:, None, :]         # (N, 1, Lp)

        pair_out = pl.pallas_call(
            functools.partial(_edge_pair_kernel,
                              t1=self.cos_theta1, t2=self.cos_theta2),
            out_shape=jax.ShapeDtypeStruct((N, 1, 128), f32),
            grid=(N, Lp // chunk),
            in_specs=[pl.BlockSpec((1, 6, chunk), lambda i, c: (i, 0, c)),
                      pl.BlockSpec((1, 6, chunk), lambda i, c: (i, 0, c)),
                      pl.BlockSpec((1, 1, chunk), lambda i, c: (i, 0, c))],
            out_specs=pl.BlockSpec((1, 1, 128), lambda i, c: (i, 0, 0)),
            compiler_params=_CP_PAIR,
        )(SA, SB, vmask)

        s75, c75 = pair_out[:, 0, 0], pair_out[:, 0, 1]
        s10, c10 = pair_out[:, 0, 2], pair_out[:, 0, 3]

        # ---- random pair sampling (device-side, fixed capacity, masked by count) - #
        ne = jnp.sum(masks_f, axis=1).astype(f32)
        m2 = jnp.minimum(jnp.round(c75 + c10), jnp.floor(ne * 0.5))   # effective pair count
        capr = max(min(HW // 2, 6 * cap), 1)
        m2 = jnp.minimum(m2, float(capr))
        m2_i = m2.astype(jnp.int32)

        ridx = jax.vmap(functools.partial(_random_pair_indices, cap=capr),
                        in_axes=(0, 0))
        ia_idx, ib_idx = ridx(masks_f, k_rnd)
        chunk_r = min(_round_up(capr, 128), _PAIR_CHUNK)
        Lr = _round_up(capr, chunk_r)
        ia_idx = jnp.pad(ia_idx, ((0, 0), (0, Lr - capr)))
        ib_idx = jnp.pad(ib_idx, ((0, 0), (0, Lr - capr)))
        RA = gat(stacked, ia_idx)
        RB = gat(stacked, ib_idx)

        rand_out = pl.pallas_call(
            functools.partial(_rand_pair_kernel, chunk=chunk_r),
            out_shape=jax.ShapeDtypeStruct((N, 1, 128), f32),
            grid=(N, Lr // chunk_r),
            in_specs=[pl.BlockSpec(memory_space=pltpu.MemorySpace.SMEM),
                      pl.BlockSpec((1, 6, chunk_r), lambda i, c: (i, 0, c)),
                      pl.BlockSpec((1, 6, chunk_r), lambda i, c: (i, 0, c))],
            out_specs=pl.BlockSpec((1, 1, 128), lambda i, c: (i, 0, 0)),
            compiler_params=_CP_PAIR,
        )(m2_i, RA, RB)
        rsum = rand_out[:, 0, 0]

        per_image = (s75 / (c75 + 1e-08)
                     + s10 / (c10 + 1e-08)
                     + rsum / (m2 + 1e-08))
        return jnp.sum(per_image) / N

    # ------------------------------------------------------------------ #
    def forward(self, pred_depths, gt_depths, images, focal_length, key=None):
        if key is None:
            key = jax.random.PRNGKey(0)
        return self._jit_forward(pred_depths, gt_depths, images, focal_length, key)

    __call__ = forward


# ----------------------------------------------------------------------------- #
# Demo
# ----------------------------------------------------------------------------- #
if __name__ == "__main__":
    key = jax.random.PRNGKey(0)
    k1, k2, k3, k4 = jax.random.split(key, 4)
    N, H, W = 2, 16, 16
    pred_depths = jax.random.uniform(k1, (N, 1, H, W), jnp.float32, 0.5, 5.0)
    gt_depths = jax.random.uniform(k2, (N, 1, H, W), jnp.float32, 0.5, 5.0)
    images = jax.random.uniform(k3, (N, 3, H, W), jnp.float32, 0.0, 1.0)
    focal_length = jnp.full((N,), 300.0, jnp.float32)

    loss_mod = EdgeguidedNormalRegressionLoss()
    loss = loss_mod(pred_depths, gt_depths, images, focal_length, key=k4)
    jax.block_until_ready(loss)
    print("KERNEL_OK")
</pallas_src>

<mosaic_0001>
module attributes {stable_mosaic.version = 11 : i64} {
  func.func @_image_depth_edge_kernel(%arg0: i32, %arg1: memref<1x1x16x16xf32, #tpu.memory_space<vmem>>, %arg2: memref<1x1x16x16xf32, #tpu.memory_space<vmem>>, %arg3: memref<1x16x16xf32, #tpu.memory_space<vmem>>, %arg4: memref<1x16x16xf32, #tpu.memory_space<vmem>>, %arg5: memref<1x16x16xf32, #tpu.memory_space<vmem>>, %arg6: memref<1x16x16xf32, #tpu.memory_space<vmem>>, %arg7: memref<1x1x128xf32, #tpu.memory_space<vmem>>) attributes {dimension_semantics = [#tpu.dimension_semantics<parallel>], iteration_bounds = array<i64: 2>, scalar_prefetch = 0 : i64, scratch_operands = 0 : i64, tpu.core_type = #tpu.core_type<tc>, window_params = [{transform_indices = @transform_0, window_bounds = array<i64: 1, 1, 16, 16>}, {transform_indices = @transform_1, window_bounds = array<i64: 1, 1, 16, 16>}, {transform_indices = @transform_2, window_bounds = array<i64: 1, 16, 16>}, {transform_indices = @transform_3, window_bounds = array<i64: 1, 16, 16>}, {transform_indices = @transform_4, window_bounds = array<i64: 1, 16, 16>}, {transform_indices = @transform_5, window_bounds = array<i64: 1, 16, 16>}, {transform_indices = @transform_6, window_bounds = array<i64: 1, 1, 128>}]} {
    %0 = tpu.iota {dimensions = array<i32: 0>} : vector<16x16xi32>
    %1 = tpu.iota {dimensions = array<i32: 1>} : vector<16x16xi32>
    %c1_i32 = arith.constant 1 : i32
    %2 = vector.broadcast %c1_i32 : i32 to vector<16x16xi32>
    %3 = arith.cmpi sge, %0, %2 : vector<16x16xi32>
    %c15_i32 = arith.constant 15 : i32
    %4 = vector.broadcast %c15_i32 : i32 to vector<16x16xi32>
    %5 = arith.cmpi slt, %0, %4 : vector<16x16xi32>
    %6 = arith.andi %3, %5 : vector<16x16xi1>
    %c1_i32_0 = arith.constant 1 : i32
    %7 = vector.broadcast %c1_i32_0 : i32 to vector<16x16xi32>
    %8 = arith.cmpi sge, %1, %7 : vector<16x16xi32>
    %9 = arith.andi %6, %8 : vector<16x16xi1>
    %c15_i32_1 = arith.constant 15 : i32
    %10 = vector.broadcast %c15_i32_1 : i32 to vector<16x16xi32>
    %11 = arith.cmpi slt, %1, %10 : vector<16x16xi32>
    %12 = arith.andi %9, %11 : vector<16x16xi1>
    %13 = arith.extui %12 : vector<16x16xi1> to vector<16x16xi32>
    %14 = arith.sitofp %13 : vector<16x16xi32> to vector<16x16xf32>
    %c0 = arith.constant 0 : index
    %c0_2 = arith.constant 0 : index
    %c0_3 = arith.constant 0 : index
    %c0_4 = arith.constant 0 : index
    %15 = vector.load %arg1[%c0, %c0_2, %c0_3, %c0_4] : memref<1x1x16x16xf32, #tpu.memory_space<vmem>>, vector<1x1x16x16xf32>
    %16 = vector.shape_cast %15 : vector<1x1x16x16xf32> to vector<16x16xf32>
    %17 = vector.extract_strided_slice %16 {offsets = [15, 0], sizes = [1, 16], strides = [1, 1]} : vector<16x16xf32> to vector<1x16xf32>
    %18 = vector.extract_strided_slice %16 {offsets = [0, 0], sizes = [15, 16], strides = [1, 1]} : vector<16x16xf32> to vector<15x16xf32>
    %19 = tpu.concatenate %17, %18 in 0 : vector<1x16xf32>, vector<15x16xf32> -> vector<16x16xf32>
    %20 = vector.extract_strided_slice %16 {offsets = [1, 0], sizes = [15, 16], strides = [1, 1]} : vector<16x16xf32> to vector<15x16xf32>
    %21 = vector.extract_strided_slice %16 {offsets = [0, 0], sizes = [1, 16], strides = [1, 1]} : vector<16x16xf32> to vector<1x16xf32>
    %22 = tpu.concatenate %20, %21 in 0 : vector<15x16xf32>, vector<1x16xf32> -> vector<16x16xf32>
    %cst = arith.constant 2.000000e+00 : f32
    %23 = vector.broadcast %cst : f32 to vector<16x16xf32>
    %24 = arith.mulf %23, %16 : vector<16x16xf32>
    %25 = arith.addf %19, %24 : vector<16x16xf32>
    %26 = arith.addf %25, %22 : vector<16x16xf32>
    %27 = arith.subf %19, %22 : vector<16x16xf32>
    %28 = vector.extract_strided_slice %26 {offsets = [0, 1], sizes = [16, 15], strides = [1, 1]} : vector<16x16xf32> to vector<16x15xf32>
    %29 = vector.extract_strided_slice %26 {offsets = [0, 0], sizes = [16, 1], strides = [1, 1]} : vector<16x16xf32> to vector<16x1xf32>
    %30 = tpu.concatenate %28, %29 in 1 : vector<16x15xf32>, vector<16x1xf32> -> vector<16x16xf32>
    %31 = vector.extract_strided_slice %26 {offsets = [0, 15], sizes = [16, 1], strides = [1, 1]} : vector<16x16xf32> to vector<16x1xf32>
    %32 = vector.extract_strided_slice %26 {offsets = [0, 0], sizes = [16, 15], strides = [1, 1]} : vector<16x16xf32> to vector<16x15xf32>
    %33 = tpu.concatenate %31, %32 in 1 : vector<16x1xf32>, vector<16x15xf32> -> vector<16x16xf32>
    %34 = arith.subf %30, %33 : vector<16x16xf32>
    %35 = vector.extract_strided_slice %27 {offsets = [0, 15], sizes = [16, 1], strides = [1, 1]} : vector<16x16xf32> to vector<16x1xf32>
    %36 = vector.extract_strided_slice %27 {offsets = [0, 0], sizes = [16, 15], strides = [1, 1]} : vector<16x16xf32> to vector<16x15xf32>
    %37 = tpu.concatenate %35, %36 in 1 : vector<16x1xf32>, vector<16x15xf32> -> vector<16x16xf32>
    %cst_5 = arith.constant 2.000000e+00 : f32
    %38 = vector.broadcast %cst_5 : f32 to vector<16x16xf32>
    %39 = arith.mulf %38, %27 : vector<16x16xf32>
    %40 = arith.addf %37, %39 : vector<16x16xf32>
    %41 = vector.extract_strided_slice %27 {offsets = [0, 1], sizes = [16, 15], strides = [1, 1]} : vector<16x16xf32> to vector<16x15xf32>
    %42 = vector.extract_strided_slice %27 {offsets = [0, 0], sizes = [16, 1], strides = [1, 1]} : vector<16x16xf32> to vector<16x1xf32>
    %43 = tpu.concatenate %41, %42 in 1 : vector<16x15xf32>, vector<16x1xf32> -> vector<16x16xf32>
    %44 = arith.addf %40, %43 : vector<16x16xf32>
    %45 = arith.mulf %34, %34 : vector<16x16xf32>
    %46 = arith.mulf %44, %44 : vector<16x16xf32>
    %47 = arith.addf %45, %46 : vector<16x16xf32>
    %48 = math.sqrt %47 : vector<16x16xf32>
    %49 = arith.mulf %48, %14 : vector<16x16xf32>
    %cst_6 = arith.constant 1.000000e-30 : f32
    %50 = vector.broadcast %cst_6 : f32 to vector<16x16xf32>
    %51 = arith.maximumf %49, %50 : vector<16x16xf32>
    %c0_7 = arith.constant 0 : index
    %c0_8 = arith.constant 0 : index
    %c0_9 = arith.constant 0 : index
    %52 = vector.load %arg3[%c0_7, %c0_8, %c0_9] : memref<1x16x16xf32, #tpu.memory_space<vmem>>, vector<1x16x16xf32>
    %53 = vector.shape_cast %52 : vector<1x16x16xf32> to vector<16x16xf32>
    %54 = vector.shape_cast %49 : vector<16x16xf32> to vector<1x16x16xf32>
    tpu.vector_store %arg3[%c0_7, %c0_8, %c0_9], %54 {strides = array<i32>} : memref<1x16x16xf32, #tpu.memory_space<vmem>>, vector<1x16x16xf32>,
    %cst_10 = arith.constant 0.000000e+00 : f32
    %55 = vector.broadcast %cst_10 : f32 to vector<16x16xf32>
    %56 = arith.cmpf ogt, %49, %55 : vector<16x16xf32>
    %57 = math.absf %34 : vector<16x16xf32>
    %58 = arith.divf %57, %51 : vector<16x16xf32>
    %cst_11 = arith.constant 1.000000e+00 : f32
    %59 = vector.broadcast %cst_11 : f32 to vector<16x16xf32>
    %60 = arith.select %56, %58, %59 : vector<16x16xi1>, vector<16x16xf32>
    %c0_12 = arith.constant 0 : index
    %c0_13 = arith.constant 0 : index
    %c0_14 = arith.constant 0 : index
    %61 = vector.load %arg4[%c0_12, %c0_13, %c0_14] : memref<1x16x16xf32, #tpu.memory_space<vmem>>, vector<1x16x16xf32>
    %62 = vector.shape_cast %61 : vector<1x16x16xf32> to vector<16x16xf32>
    %63 = vector.shape_cast %60 : vector<16x16xf32> to vector<1x16x16xf32>
    tpu.vector_store %arg4[%c0_12, %c0_13, %c0_14], %63 {strides = array<i32>} : memref<1x16x16xf32, #tpu.memory_space<vmem>>, vector<1x16x16xf32>,
    %cst_15 = arith.constant 0.000000e+00 : f32
    %64 = vector.broadcast %cst_15 : f32 to vector<16x16xf32>
    %65 = arith.cmpf ogt, %49, %64 : vector<16x16xf32>
    %66 = math.absf %44 : vector<16x16xf32>
    %67 = arith.divf %66, %51 : vector<16x16xf32>
    %cst_16 = arith.constant 0.000000e+00 : f32
    %68 = vector.broadcast %cst_16 : f32 to vector<16x16xf32>
    %69 = arith.select %65, %67, %68 : vector<16x16xi1>, vector<16x16xf32>
    %c0_17 = arith.constant 0 : index
    %c0_18 = arith.constant 0 : index
    %c0_19 = arith.constant 0 : index
    %70 = vector.load %arg5[%c0_17, %c0_18, %c0_19] : memref<1x16x16xf32, #tpu.memory_space<vmem>>, vector<1x16x16xf32>
    %71 = vector.shape_cast %70 : vector<1x16x16xf32> to vector<16x16xf32>
    %72 = vector.shape_cast %69 : vector<16x16xf32> to vector<1x16x16xf32>
    tpu.vector_store %arg5[%c0_17, %c0_18, %c0_19], %72 {strides = array<i32>} : memref<1x16x16xf32, #tpu.memory_space<vmem>>, vector<1x16x16xf32>,
    %c0_20 = arith.constant 0 : index
    %c0_21 = arith.constant 0 : index
    %c0_22 = arith.constant 0 : index
    %c0_23 = arith.constant 0 : index
    %73 = vector.load %arg2[%c0_20, %c0_21, %c0_22, %c0_23] : memref<1x1x16x16xf32, #tpu.memory_space<vmem>>, vector<1x1x16x16xf32>
    %74 = vector.shape_cast %73 : vector<1x1x16x16xf32> to vector<16x16xf32>
    %75 = vector.extract_strided_slice %74 {offsets = [15, 0], sizes = [1, 16], strides = [1, 1]} : vector<16x16xf32> to vector<1x16xf32>
    %76 = vector.extract_strided_slice %74 {offsets = [0, 0], sizes = [15, 16], strides = [1, 1]} : vector<16x16xf32> to vector<15x16xf32>
    %77 = tpu.concatenate %75, %76 in 0 : vector<1x16xf32>, vector<15x16xf32> -> vector<16x16xf32>
    %78 = vector.extract_strided_slice %74 {offsets = [1, 0], sizes = [15, 16], strides = [1, 1]} : vector<16x16xf32> to vector<15x16xf32>
    %79 = vector.extract_strided_slice %74 {offsets = [0, 0], sizes = [1, 16], strides = [1, 1]} : vector<16x16xf32> to vector<1x16xf32>
    %80 = tpu.concatenate %78, %79 in 0 : vector<15x16xf32>, vector<1x16xf32> -> vector<16x16xf32>
    %cst_24 = arith.constant 2.000000e+00 : f32
    %81 = vector.broadcast %cst_24 : f32 to vector<16x16xf32>
    %82 = arith.mulf %81, %74 : vector<16x16xf32>
    %83 = arith.addf %77, %82 : vector<16x16xf32>
    %84 = arith.addf %83, %80 : vector<16x16xf32>
    %85 = arith.subf %77, %80 : vector<16x16xf32>
    %86 = vector.extract_strided_slice %84 {offsets = [0, 1], sizes = [16, 15], strides = [1, 1]} : vector<16x16xf32> to vector<16x15xf32>
    %87 = vector.extract_strided_slice %84 {offsets = [0, 0], sizes = [16, 1], strides = [1, 1]} : vector<16x16xf32> to vector<16x1xf32>
    %88 = tpu.concatenate %86, %87 in 1 : vector<16x15xf32>, vector<16x1xf32> -> vector<16x16xf32>
    %89 = vector.extract_strided_slice %84 {offsets = [0, 15], sizes = [16, 1], strides = [1, 1]} : vector<16x16xf32> to vector<16x1xf32>
    %90 = vector.extract_strided_slice %84 {offsets = [0, 0], sizes = [16, 15], strides = [1, 1]} : vector<16x16xf32> to vector<16x15xf32>
    %91 = tpu.concatenate %89, %90 in 1 : vector<16x1xf32>, vector<16x15xf32> -> vector<16x16xf32>
    %92 = arith.subf %88, %91 : vector<16x16xf32>
    %93 = vector.extract_strided_slice %85 {offsets = [0, 15], sizes = [16, 1], strides = [1, 1]} : vector<16x16xf32> to vector<16x1xf32>
    %94 = vector.extract_strided_slice %85 {offsets = [0, 0], sizes = [16, 15], strides = [1, 1]} : vector<16x16xf32> to vector<16x15xf32>
    %95 = tpu.concatenate %93, %94 in 1 : vector<16x1xf32>, vector<16x15xf32> -> vector<16x16xf32>
    %cst_25 = arith.constant 2.000000e+00 : f32
    %96 = vector.broadcast %cst_25 : f32 to vector<16x16xf32>
    %97 = arith.mulf %96, %85 : vector<16x16xf32>
    %98 = arith.addf %95, %97 : vector<16x16xf32>
    %99 = vector.extract_strided_slice %85 {offsets = [0, 1], sizes = [16, 15], strides = [1, 1]} : vector<16x16xf32> to vector<16x15xf32>
    %100 = vector.extract_strided_slice %85 {offsets = [0, 0], sizes = [16, 1], strides = [1, 1]} : vector<16x16xf32> to vector<16x1xf32>
    %101 = tpu.concatenate %99, %100 in 1 : vector<16x15xf32>, vector<16x1xf32> -> vector<16x16xf32>
    %102 = arith.addf %98, %101 : vector<16x16xf32>
    %103 = arith.mulf %92, %92 : vector<16x16xf32>
    %104 = arith.mulf %102, %102 : vector<16x16xf32>
    %105 = arith.addf %103, %104 : vector<16x16xf32>
    %106 = math.sqrt %105 : vector<16x16xf32>
    %107 = arith.mulf %106, %14 : vector<16x16xf32>
    %c0_26 = arith.constant 0 : index
    %c0_27 = arith.constant 0 : index
    %c0_28 = arith.constant 0 : index
    %108 = vector.load %arg6[%c0_26, %c0_27, %c0_28] : memref<1x16x16xf32, #tpu.memory_space<vmem>>, vector<1x16x16xf32>
    %109 = vector.shape_cast %108 : vector<1x16x16xf32> to vector<16x16xf32>
    %110 = vector.shape_cast %107 : vector<16x16xf32> to vector<1x16x16xf32>
    tpu.vector_store %arg6[%c0_26, %c0_27, %c0_28], %110 {strides = array<i32>} : memref<1x16x16xf32, #tpu.memory_space<vmem>>, vector<1x16x16xf32>,
    %111 = tpu.iota {dimensions = array<i32: 2>} : vector<1x1x128xi32>
    %c0_i32 = arith.constant 0 : i32
    %112 = vector.broadcast %c0_i32 : i32 to vector<1x1x128xi32>
    %113 = arith.cmpi eq, %111, %112 : vector<1x1x128xi32>
    %114 = vector.shape_cast %107 : vector<16x16xf32> to vector<1x16x16xf32>
    %cst_29 = arith.constant dense<0xFF800000> : vector<1xf32>
    %115 = vector.multi_reduction <maximumf>, %114, %cst_29 [1, 2] : vector<1x16x16xf32> to vector<1xf32>
    %116 = vector.shape_cast %115 : vector<1xf32> to vector<1x1x1xf32>
    %117 = vector.extract %116[0, 0, 0] : f32 from vector<1x1x1xf32>
    %cst_30 = arith.constant 0.000000e+00 : f32
    %118 = vector.broadcast %117 : f32 to vector<1x1x128xf32>
    %119 = vector.broadcast %cst_30 : f32 to vector<1x1x128xf32>
    %120 = arith.select %113, %118, %119 : vector<1x1x128xi1>, vector<1x1x128xf32>
    %c0_31 = arith.constant 0 : index
    %c0_32 = arith.constant 0 : index
    %c0_33 = arith.constant 0 : index
    %121 = vector.load %arg7[%c0_31, %c0_32, %c0_33] : memref<1x1x128xf32, #tpu.memory_space<vmem>>, vector<1x1x128xf32>
    tpu.vector_store %arg7[%c0_31, %c0_32, %c0_33], %120 {strides = array<i32>} : memref<1x1x128xf32, #tpu.memory_space<vmem>>, vector<1x1x128xf32>,
    return
  }
  func.func @transform_0(%arg0: i32) -> (i32, i32, i32, i32) {
    %c0_i32 = arith.constant 0 : i32
    %c0_i32_0 = arith.constant 0 : i32
    %c0_i32_1 = arith.constant 0 : i32
    %c0_i32_2 = arith.constant 0 : i32
    return %arg0, %c0_i32, %c0_i32_0, %c0_i32_1 : i32, i32, i32, i32
  }
  func.func @transform_1(%arg0: i32) -> (i32, i32, i32, i32) {
    %c0_i32 = arith.constant 0 : i32
    %c0_i32_0 = arith.constant 0 : i32
    %c0_i32_1 = arith.constant 0 : i32
    %c0_i32_2 = arith.constant 0 : i32
    return %arg0, %c0_i32, %c0_i32_0, %c0_i32_1 : i32, i32, i32, i32
  }
  func.func @transform_2(%arg0: i32) -> (i32, i32, i32) {
    %c0_i32 = arith.constant 0 : i32
    %c0_i32_0 = arith.constant 0 : i32
    %c0_i32_1 = arith.constant 0 : i32
    return %arg0, %c0_i32, %c0_i32_0 : i32, i32, i32
  }
  func.func @transform_3(%arg0: i32) -> (i32, i32, i32) {
    %c0_i32 = arith.constant 0 : i32
    %c0_i32_0 = arith.constant 0 : i32
    %c0_i32_1 = arith.constant 0 : i32
    return %arg0, %c0_i32, %c0_i32_0 : i32, i32, i32
  }
  func.func @transform_4(%arg0: i32) -> (i32, i32, i32) {
    %c0_i32 = arith.constant 0 : i32
    %c0_i32_0 = arith.constant 0 : i32
    %c0_i32_1 = arith.constant 0 : i32
    return %arg0, %c0_i32, %c0_i32_0 : i32, i32, i32
  }
  func.func @transform_5(%arg0: i32) -> (i32, i32, i32) {
    %c0_i32 = arith.constant 0 : i32
    %c0_i32_0 = arith.constant 0 : i32
    %c0_i32_1 = arith.constant 0 : i32
    return %arg0, %c0_i32, %c0_i32_0 : i32, i32, i32
  }
  func.func @transform_6(%arg0: i32) -> (i32, i32, i32) {
    %c0_i32 = arith.constant 0 : i32
    %c0_i32_0 = arith.constant 0 : i32
    %c0_i32_1 = arith.constant 0 : i32
    return %arg0, %c0_i32, %c0_i32_0 : i32, i32, i32
  }
}

module attributes {stable_mosaic.version = 11 : i64} {
  func.func @_normals_edge_kernel(%arg0: i32, %arg1: memref<1x1x16x16xf32, #tpu.memory_space<vmem>>, %arg2: memref<1x1x16x16xf32, #tpu.memory_space<vmem>>, %arg3: memref<2xf32, #tpu.memory_space<smem>>, %arg4: memref<1x3x16x16xf32, #tpu.memory_space<vmem>>, %arg5: memref<1x3x16x16xf32, #tpu.memory_space<vmem>>, %arg6: memref<1x16x16xf32, #tpu.memory_space<vmem>>, %arg7: memref<1x16x16xf32, #tpu.memory_space<vmem>>, %arg8: memref<1x16x16xf32, #tpu.memory_space<vmem>>) attributes {dimension_semantics = [#tpu.dimension_semantics<parallel>], iteration_bounds = array<i64: 2>, scalar_prefetch = 0 : i64, scratch_operands = 0 : i64, tpu.core_type = #tpu.core_type<tc>, window_params = [{transform_indices = @transform_0, window_bounds = array<i64: 1, 1, 16, 16>}, {transform_indices = @transform_1, window_bounds = array<i64: 1, 1, 16, 16>}, {transform_indices = @transform_2, window_bounds = array<i64: 2>}, {transform_indices = @transform_3, window_bounds = array<i64: 1, 3, 16, 16>}, {transform_indices = @transform_4, window_bounds = array<i64: 1, 3, 16, 16>}, {transform_indices = @transform_5, window_bounds = array<i64: 1, 16, 16>}, {transform_indices = @transform_6, window_bounds = array<i64: 1, 16, 16>}, {transform_indices = @transform_7, window_bounds = array<i64: 1, 16, 16>}]} {
    %0 = arith.index_cast %arg0 : i32 to index
    %1 = memref.load %arg3[%0] : memref<2xf32, #tpu.memory_space<smem>>
    %cst = arith.constant 1.000000e+00 : f32
    %2 = arith.divf %cst, %1 : f32
    %c0 = arith.constant 0 : index
    %c0_0 = arith.constant 0 : index
    %c0_1 = arith.constant 0 : index
    %c0_2 = arith.constant 0 : index
    %3 = vector.load %arg1[%c0, %c0_0, %c0_1, %c0_2] : memref<1x1x16x16xf32, #tpu.memory_space<vmem>>, vector<1x1x16x16xf32>
    %4 = vector.shape_cast %3 : vector<1x1x16x16xf32> to vector<16x16xf32>
    %c0_3 = arith.constant 0 : index
    %c0_4 = arith.constant 0 : index
    %c0_5 = arith.constant 0 : index
    %c0_6 = arith.constant 0 : index
    %5 = vector.load %arg2[%c0_3, %c0_4, %c0_5, %c0_6] : memref<1x1x16x16xf32, #tpu.memory_space<vmem>>, vector<1x1x16x16xf32>
    %6 = vector.shape_cast %5 : vector<1x1x16x16xf32> to vector<16x16xf32>
    %7 = tpu.iota {dimensions = array<i32: 1>} : vector<16x16xi32>
    %8 = arith.sitofp %7 : vector<16x16xi32> to vector<16x16xf32>
    %cst_7 = arith.constant 7.500000e+00 : f32
    %9 = vector.broadcast %cst_7 : f32 to vector<16x16xf32>
    %10 = arith.subf %8, %9 : vector<16x16xf32>
    %11 = tpu.iota {dimensions = array<i32: 0>} : vector<16x16xi32>
    %12 = arith.sitofp %11 : vector<16x16xi32> to vector<16x16xf32>
    %cst_8 = arith.constant 7.500000e+00 : f32
    %13 = vector.broadcast %cst_8 : f32 to vector<16x16xf32>
    %14 = arith.subf %12, %13 : vector<16x16xf32>
    %cst_9 = arith.constant -9.99999993E-9 : f32
    %15 = vector.broadcast %cst_9 : f32 to vector<16x16xf32>
    %16 = arith.cmpf ogt, %6, %15 : vector<16x16xf32>
    %cst_10 = arith.constant 1.000000e+00 : f32
    %cst_11 = arith.constant 0.000000e+00 : f32
    %17 = vector.broadcast %cst_10 : f32 to vector<16x16xf32>
    %18 = vector.broadcast %cst_11 : f32 to vector<16x16xf32>
    %19 = arith.select %16, %17, %18 : vector<16x16xi1>, vector<16x16xf32>
    %20 = tpu.iota {dimensions = array<i32: 0>} : vector<16x16xi32>
    %21 = tpu.iota {dimensions = array<i32: 1>} : vector<16x16xi32>
    %c15_i32 = arith.constant 15 : i32
    %22 = vector.broadcast %c15_i32 : i32 to vector<16x16xi32>
    %23 = arith.cmpi slt, %20, %22 : vector<16x16xi32>
    %c15_i32_12 = arith.constant 15 : i32
    %24 = vector.broadcast %c15_i32_12 : i32 to vector<16x16xi32>
    %25 = arith.cmpi slt, %21, %24 : vector<16x16xi32>
    %26 = arith.andi %23, %25 : vector<16x16xi1>
    %27 = arith.extui %26 : vector<16x16xi1> to vector<16x16xi32>
    %28 = arith.sitofp %27 : vector<16x16xi32> to vector<16x16xf32>
    %29 = arith.mulf %19, %28 : vector<16x16xf32>
    %30 = vector.extract_strided_slice %4 {offsets = [0, 1], sizes = [16, 15], strides = [1, 1]} : vector<16x16xf32> to vector<16x15xf32>
    %31 = vector.extract_strided_slice %4 {offsets = [0, 0], sizes = [16, 1], strides = [1, 1]} : vector<16x16xf32> to vector<16x1xf32>
    %32 = tpu.concatenate %30, %31 in 1 : vector<16x15xf32>, vector<16x1xf32> -> vector<16x16xf32>
    %33 = vector.extract_strided_slice %4 {offsets = [1, 0], sizes = [15, 16], strides = [1, 1]} : vector<16x16xf32> to vector<15x16xf32>
    %34 = vector.extract_strided_slice %4 {offsets = [0, 0], sizes = [1, 16], strides = [1, 1]} : vector<16x16xf32> to vector<1x16xf32>
    %35 = tpu.concatenate %33, %34 in 0 : vector<15x16xf32>, vector<1x16xf32> -> vector<16x16xf32>
    %36 = arith.subf %32, %4 : vector<16x16xf32>
    %37 = arith.subf %35, %4 : vector<16x16xf32>
    %38 = arith.mulf %36, %10 : vector<16x16xf32>
    %39 = arith.addf %38, %32 : vector<16x16xf32>
    %40 = vector.broadcast %2 : f32 to vector<16x16xf32>
    %41 = arith.mulf %39, %40 : vector<16x16xf32>
    %42 = arith.mulf %36, %14 : vector<16x16xf32>
    %43 = vector.broadcast %2 : f32 to vector<16x16xf32>
    %44 = arith.mulf %42, %43 : vector<16x16xf32>
    %45 = arith.mulf %37, %10 : vector<16x16xf32>
    %46 = vector.broadcast %2 : f32 to vector<16x16xf32>
    %47 = arith.mulf %45, %46 : vector<16x16xf32>
    %48 = arith.mulf %37, %14 : vector<16x16xf32>
    %49 = arith.addf %48, %35 : vector<16x16xf32>
    %50 = vector.broadcast %2 : f32 to vector<16x16xf32>
    %51 = arith.mulf %49, %50 : vector<16x16xf32>
    %52 = arith.mulf %44, %37 : vector<16x16xf32>
    %53 = arith.mulf %36, %51 : vector<16x16xf32>
    %54 = arith.subf %52, %53 : vector<16x16xf32>
    %55 = arith.mulf %36, %47 : vector<16x16xf32>
    %56 = arith.mulf %41, %37 : vector<16x16xf32>
    %57 = arith.subf %55, %56 : vector<16x16xf32>
    %58 = arith.mulf %41, %51 : vector<16x16xf32>
    %59 = arith.mulf %44, %47 : vector<16x16xf32>
    %60 = arith.subf %58, %59 : vector<16x16xf32>
    %61 = arith.mulf %54, %54 : vector<16x16xf32>
    %62 = arith.mulf %57, %57 : vector<16x16xf32>
    %63 = arith.addf %61, %62 : vector<16x16xf32>
    %64 = arith.mulf %60, %60 : vector<16x16xf32>
    %65 = arith.addf %63, %64 : vector<16x16xf32>
    %cst_13 = arith.constant 9.99999996E-13 : f32
    %66 = vector.broadcast %cst_13 : f32 to vector<16x16xf32>
    %67 = arith.addf %65, %66 : vector<16x16xf32>
    %68 = math.rsqrt %67 : vector<16x16xf32>
    %69 = arith.mulf %54, %68 : vector<16x16xf32>
    %70 = arith.mulf %69, %29 : vector<16x16xf32>
    %71 = arith.mulf %57, %68 : vector<16x16xf32>
    %72 = arith.mulf %71, %29 : vector<16x16xf32>
    %73 = arith.mulf %60, %68 : vector<16x16xf32>
    %74 = arith.mulf %73, %29 : vector<16x16xf32>
    %75 = vector.extract_strided_slice %6 {offsets = [0, 1], sizes = [16, 15], strides = [1, 1]} : vector<16x16xf32> to vector<16x15xf32>
    %76 = vector.extract_strided_slice %6 {offsets = [0, 0], sizes = [16, 1], strides = [1, 1]} : vector<16x16xf32> to vector<16x1xf32>
    %77 = tpu.concatenate %75, %76 in 1 : vector<16x15xf32>, vector<16x1xf32> -> vector<16x16xf32>
    %78 = vector.extract_strided_slice %6 {offsets = [1, 0], sizes = [15, 16], strides = [1, 1]} : vector<16x16xf32> to vector<15x16xf32>
    %79 = vector.extract_strided_slice %6 {offsets = [0, 0], sizes = [1, 16], strides = [1, 1]} : vector<16x16xf32> to vector<1x16xf32>
    %80 = tpu.concatenate %78, %79 in 0 : vector<15x16xf32>, vector<1x16xf32> -> vector<16x16xf32>
    %81 = arith.subf %77, %6 : vector<16x16xf32>
    %82 = arith.subf %80, %6 : vector<16x16xf32>
    %83 = arith.mulf %81, %10 : vector<16x16xf32>
    %84 = arith.addf %83, %77 : vector<16x16xf32>
    %85 = vector.broadcast %2 : f32 to vector<16x16xf32>
    %86 = arith.mulf %84, %85 : vector<16x16xf32>
    %87 = arith.mulf %81, %14 : vector<16x16xf32>
    %88 = vector.broadcast %2 : f32 to vector<16x16xf32>
    %89 = arith.mulf %87, %88 : vector<16x16xf32>
    %90 = arith.mulf %82, %10 : vector<16x16xf32>
    %91 = vector.broadcast %2 : f32 to vector<16x16xf32>
    %92 = arith.mulf %90, %91 : vector<16x16xf32>
    %93 = arith.mulf %82, %14 : vector<16x16xf32>
    %94 = arith.addf %93, %80 : vector<16x16xf32>
    %95 = vector.broadcast %2 : f32 to vector<16x16xf32>
    %96 = arith.mulf %94, %95 : vector<16x16xf32>
    %97 = arith.mulf %89, %82 : vector<16x16xf32>
    %98 = arith.mulf %81, %96 : vector<16x16xf32>
    %99 = arith.subf %97, %98 : vector<16x16xf32>
    %100 = arith.mulf %81, %92 : vector<16x16xf32>
    %101 = arith.mulf %86, %82 : vector<16x16xf32>
    %102 = arith.subf %100, %101 : vector<16x16xf32>
    %103 = arith.mulf %86, %96 : vector<16x16xf32>
    %104 = arith.mulf %89, %92 : vector<16x16xf32>
    %105 = arith.subf %103, %104 : vector<16x16xf32>
    %106 = arith.mulf %99, %99 : vector<16x16xf32>
    %107 = arith.mulf %102, %102 : vector<16x16xf32>
    %108 = arith.addf %106, %107 : vector<16x16xf32>
    %109 = arith.mulf %105, %105 : vector<16x16xf32>
    %110 = arith.addf %108, %109 : vector<16x16xf32>
    %cst_14 = arith.constant 9.99999996E-13 : f32
    %111 = vector.broadcast %cst_14 : f32 to vector<16x16xf32>
    %112 = arith.addf %110, %111 : vector<16x16xf32>
    %113 = math.rsqrt %112 : vector<16x16xf32>
    %114 = arith.mulf %99, %113 : vector<16x16xf32>
    %115 = arith.mulf %114, %29 : vector<16x16xf32>
    %116 = arith.mulf %102, %113 : vector<16x16xf32>
    %117 = arith.mulf %116, %29 : vector<16x16xf32>
    %118 = arith.mulf %105, %113 : vector<16x16xf32>
    %119 = arith.mulf %118, %29 : vector<16x16xf32>
    %c0_15 = arith.constant 0 : index
    %c0_16 = arith.constant 0 : index
    %c0_17 = arith.constant 0 : index
    %c0_18 = arith.constant 0 : index
    %120 = vector.load %arg4[%c0_15, %c0_16, %c0_17, %c0_18] : memref<1x3x16x16xf32, #tpu.memory_space<vmem>>, vector<1x1x16x16xf32>
    %121 = vector.shape_cast %120 : vector<1x1x16x16xf32> to vector<16x16xf32>
    %122 = vector.shape_cast %70 : vector<16x16xf32> to vector<1x1x16x16xf32>
    tpu.vector_store %arg4[%c0_15, %c0_16, %c0_17, %c0_18], %122 {strides = array<i32>} : memref<1x3x16x16xf32, #tpu.memory_space<vmem>>, vector<1x1x16x16xf32>,
    %c0_19 = arith.constant 0 : index
    %c0_20 = arith.constant 0 : index
    %c0_21 = arith.constant 0 : index
    %c0_22 = arith.constant 0 : index
    %123 = vector.load %arg5[%c0_19, %c0_20, %c0_21, %c0_22] : memref<1x3x16x16xf32, #tpu.memory_space<vmem>>, vector<1x1x16x16xf32>
    %124 = vector.shape_cast %123 : vector<1x1x16x16xf32> to vector<16x16xf32>
    %125 = vector.shape_cast %115 : vector<16x16xf32> to vector<1x1x16x16xf32>
    tpu.vector_store %arg5[%c0_19, %c0_20, %c0_21, %c0_22], %125 {strides = array<i32>} : memref<1x3x16x16xf32, #tpu.memory_space<vmem>>, vector<1x1x16x16xf32>,
    %c0_23 = arith.constant 0 : index
    %c1 = arith.constant 1 : index
    %c0_24 = arith.constant 0 : index
    %c0_25 = arith.constant 0 : index
    %126 = vector.load %arg4[%c0_23, %c1, %c0_24, %c0_25] : memref<1x3x16x16xf32, #tpu.memory_space<vmem>>, vector<1x1x16x16xf32>
    %127 = vector.shape_cast %126 : vector<1x1x16x16xf32> to vector<16x16xf32>
    %128 = vector.shape_cast %72 : vector<16x16xf32> to vector<1x1x16x16xf32>
    tpu.vector_store %arg4[%c0_23, %c1, %c0_24, %c0_25], %128 {strides = array<i32>} : memref<1x3x16x16xf32, #tpu.memory_space<vmem>>, vector<1x1x16x16xf32>,
    %c0_26 = arith.constant 0 : index
    %c1_27 = arith.constant 1 : index
    %c0_28 = arith.constant 0 : index
    %c0_29 = arith.constant 0 : index
    %129 = vector.load %arg5[%c0_26, %c1_27, %c0_28, %c0_29] : memref<1x3x16x16xf32, #tpu.memory_space<vmem>>, vector<1x1x16x16xf32>
    %130 = vector.shape_cast %129 : vector<1x1x16x16xf32> to vector<16x16xf32>
    %131 = vector.shape_cast %117 : vector<16x16xf32> to vector<1x1x16x16xf32>
    tpu.vector_store %arg5[%c0_26, %c1_27, %c0_28, %c0_29], %131 {strides = array<i32>} : memref<1x3x16x16xf32, #tpu.memory_space<vmem>>, vector<1x1x16x16xf32>,
    %c0_30 = arith.constant 0 : index
    %c2 = arith.constant 2 : index
    %c0_31 = arith.constant 0 : index
    %c0_32 = arith.constant 0 : index
    %132 = vector.load %arg4[%c0_30, %c2, %c0_31, %c0_32] : memref<1x3x16x16xf32, #tpu.memory_space<vmem>>, vector<1x1x16x16xf32>
    %133 = vector.shape_cast %132 : vector<1x1x16x16xf32> to vector<16x16xf32>
    %134 = vector.shape_cast %74 : vector<16x16xf32> to vector<1x1x16x16xf32>
    tpu.vector_store %arg4[%c0_30, %c2, %c0_31, %c0_32], %134 {strides = array<i32>} : memref<1x3x16x16xf32, #tpu.memory_space<vmem>>, vector<1x1x16x16xf32>,
    %c0_33 = arith.constant 0 : index
    %c2_34 = arith.constant 2 : index
    %c0_35 = arith.constant 0 : index
    %c0_36 = arith.constant 0 : index
    %135 = vector.load %arg5[%c0_33, %c2_34, %c0_35, %c0_36] : memref<1x3x16x16xf32, #tpu.memory_space<vmem>>, vector<1x1x16x16xf32>
    %136 = vector.shape_cast %135 : vector<1x1x16x16xf32> to vector<16x16xf32>
    %137 = vector.shape_cast %119 : vector<16x16xf32> to vector<1x1x16x16xf32>
    tpu.vector_store %arg5[%c0_33, %c2_34, %c0_35, %c0_36], %137 {strides = array<i32>} : memref<1x3x16x16xf32, #tpu.memory_space<vmem>>, vector<1x1x16x16xf32>,
    %cst_37 = arith.constant 0.000000e+00 : f32
    %138 = vector.broadcast %cst_37 : f32 to vector<16x16xf32>
    %cst_38 = arith.constant 0.000000e+00 : f32
    %139 = vector.broadcast %cst_38 : f32 to vector<16x16xf32>
    %140 = vector.extract_strided_slice %115 {offsets = [15, 0], sizes = [1, 16], strides = [1, 1]} : vector<16x16xf32> to vector<1x16xf32>
    %141 = vector.extract_strided_slice %115 {offsets = [0, 0], sizes = [15, 16], strides = [1, 1]} : vector<16x16xf32> to vector<15x16xf32>
    %142 = tpu.concatenate %140, %141 in 0 : vector<1x16xf32>, vector<15x16xf32> -> vector<16x16xf32>
    %143 = vector.extract_strided_slice %115 {offsets = [1, 0], sizes = [15, 16], strides = [1, 1]} : vector<16x16xf32> to vector<15x16xf32>
    %144 = vector.extract_strided_slice %115 {offsets = [0, 0], sizes = [1, 16], strides = [1, 1]} : vector<16x16xf32> to vector<1x16xf32>
    %145 = tpu.concatenate %143, %144 in 0 : vector<15x16xf32>, vector<1x16xf32> -> vector<16x16xf32>
    %cst_39 = arith.constant 2.000000e+00 : f32
    %146 = vector.broadcast %cst_39 : f32 to vector<16x16xf32>
    %147 = arith.mulf %146, %115 : vector<16x16xf32>
    %148 = arith.addf %142, %147 : vector<16x16xf32>
    %149 = arith.addf %148, %145 : vector<16x16xf32>
    %150 = arith.subf %142, %145 : vector<16x16xf32>
    %151 = vector.extract_strided_slice %149 {offsets = [0, 1], sizes = [16, 15], strides = [1, 1]} : vector<16x16xf32> to vector<16x15xf32>
    %152 = vector.extract_strided_slice %149 {offsets = [0, 0], sizes = [16, 1], strides = [1, 1]} : vector<16x16xf32> to vector<16x1xf32>
    %153 = tpu.concatenate %151, %152 in 1 : vector<16x15xf32>, vector<16x1xf32> -> vector<16x16xf32>
    %154 = vector.extract_strided_slice %149 {offsets = [0, 15], sizes = [16, 1], strides = [1, 1]} : vector<16x16xf32> to vector<16x1xf32>
    %155 = vector.extract_strided_slice %149 {offsets = [0, 0], sizes = [16, 15], strides = [1, 1]} : vector<16x16xf32> to vector<16x15xf32>
    %156 = tpu.concatenate %154, %155 in 1 : vector<16x1xf32>, vector<16x15xf32> -> vector<16x16xf32>
    %157 = arith.subf %153, %156 : vector<16x16xf32>
    %158 = vector.extract_strided_slice %150 {offsets = [0, 15], sizes = [16, 1], strides = [1, 1]} : vector<16x16xf32> to vector<16x1xf32>
    %159 = vector.extract_strided_slice %150 {offsets = [0, 0], sizes = [16, 15], strides = [1, 1]} : vector<16x16xf32> to vector<16x15xf32>
    %160 = tpu.concatenate %158, %159 in 1 : vector<16x1xf32>, vector<16x15xf32> -> vector<16x16xf32>
    %cst_40 = arith.constant 2.000000e+00 : f32
    %161 = vector.broadcast %cst_40 : f32 to vector<16x16xf32>
    %162 = arith.mulf %161, %150 : vector<16x16xf32>
    %163 = arith.addf %160, %162 : vector<16x16xf32>
    %164 = vector.extract_strided_slice %150 {offsets = [0, 1], sizes = [16, 15], strides = [1, 1]} : vector<16x16xf32> to vector<16x15xf32>
    %165 = vector.extract_strided_slice %150 {offsets = [0, 0], sizes = [16, 1], strides = [1, 1]} : vector<16x16xf32> to vector<16x1xf32>
    %166 = tpu.concatenate %164, %165 in 1 : vector<16x15xf32>, vector<16x1xf32> -> vector<16x16xf32>
    %167 = arith.addf %163, %166 : vector<16x16xf32>
    %168 = math.absf %157 : vector<16x16xf32>
    %169 = arith.addf %138, %168 : vector<16x16xf32>
    %170 = math.absf %167 : vector<16x16xf32>
    %171 = arith.addf %139, %170 : vector<16x16xf32>
    %172 = vector.extract_strided_slice %117 {offsets = [15, 0], sizes = [1, 16], strides = [1, 1]} : vector<16x16xf32> to vector<1x16xf32>
    %173 = vector.extract_strided_slice %117 {offsets = [0, 0], sizes = [15, 16], strides = [1, 1]} : vector<16x16xf32> to vector<15x16xf32>
    %174 = tpu.concatenate %172, %173 in 0 : vector<1x16xf32>, vector<15x16xf32> -> vector<16x16xf32>
    %175 = vector.extract_strided_slice %117 {offsets = [1, 0], sizes = [15, 16], strides = [1, 1]} : vector<16x16xf32> to vector<15x16xf32>
    %176 = vector.extract_strided_slice %117 {offsets = [0, 0], sizes = [1, 16], strides = [1, 1]} : vector<16x16xf32> to vector<1x16xf32>
    %177 = tpu.concatenate %175, %176 in 0 : vector<15x16xf32>, vector<1x16xf32> -> vector<16x16xf32>
    %cst_41 = arith.constant 2.000000e+00 : f32
    %178 = vector.broadcast %cst_41 : f32 to vector<16x16xf32>
    %179 = arith.mulf %178, %117 : vector<16x16xf32>
    %180 = arith.addf %174, %179 : vector<16x16xf32>
    %181 = arith.addf %180, %177 : vector<16x16xf32>
    %182 = arith.subf %174, %177 : vector<16x16xf32>
    %183 = vector.extract_strided_slice %181 {offsets = [0, 1], sizes = [16, 15], strides = [1, 1]} : vector<16x16xf32> to vector<16x15xf32>
    %184 = vector.extract_strided_slice %181 {offsets = [0, 0], sizes = [16, 1], strides = [1, 1]} : vector<16x16xf32> to vector<16x1xf32>
    %185 = tpu.concatenate %183, %184 in 1 : vector<16x15xf32>, vector<16x1xf32> -> vector<16x16xf32>
    %186 = vector.extract_strided_slice %181 {offsets = [0, 15], sizes = [16, 1], strides = [1, 1]} : vector<16x16xf32> to vector<16x1xf32>
    %187 = vector.extract_strided_slice %181 {offsets = [0, 0], sizes = [16, 15], strides = [1, 1]} : vector<16x16xf32> to vector<16x15xf32>
    %188 = tpu.concatenate %186, %187 in 1 : vector<16x1xf32>, vector<16x15xf32> -> vector<16x16xf32>
    %189 = arith.subf %185, %188 : vector<16x16xf32>
    %190 = vector.extract_strided_slice %182 {offsets = [0, 15], sizes = [16, 1], strides = [1, 1]} : vector<16x16xf32> to vector<16x1xf32>
    %191 = vector.extract_strided_slice %182 {offsets = [0, 0], sizes = [16, 15], strides = [1, 1]} : vector<16x16xf32> to vector<16x15xf32>
    %192 = tpu.concatenate %190, %191 in 1 : vector<16x1xf32>, vector<16x15xf32> -> vector<16x16xf32>
    %cst_42 = arith.constant 2.000000e+00 : f32
    %193 = vector.broadcast %cst_42 : f32 to vector<16x16xf32>
    %194 = arith.mulf %193, %182 : vector<16x16xf32>
    %195 = arith.addf %192, %194 : vector<16x16xf32>
    %196 = vector.extract_strided_slice %182 {offsets = [0, 1], sizes = [16, 15], strides = [1, 1]} : vector<16x16xf32> to vector<16x15xf32>
    %197 = vector.extract_strided_slice %182 {offsets = [0, 0], sizes = [16, 1], strides = [1, 1]} : vector<16x16xf32> to vector<16x1xf32>
    %198 = tpu.concatenate %196, %197 in 1 : vector<16x15xf32>, vector<16x1xf32> -> vector<16x16xf32>
    %199 = arith.addf %195, %198 : vector<16x16xf32>
    %200 = math.absf %189 : vector<16x16xf32>
    %201 = arith.addf %169, %200 : vector<16x16xf32>
    %202 = math.absf %199 : vector<16x16xf32>
    %203 = arith.addf %171, %202 : vector<16x16xf32>
    %204 = vector.extract_strided_slice %119 {offsets = [15, 0], sizes = [1, 16], strides = [1, 1]} : vector<16x16xf32> to vector<1x16xf32>
    %205 = vector.extract_strided_slice %119 {offsets = [0, 0], sizes = [15, 16], strides = [1, 1]} : vector<16x16xf32> to vector<15x16xf32>
    %206 = tpu.concatenate %204, %205 in 0 : vector<1x16xf32>, vector<15x16xf32> -> vector<16x16xf32>
    %207 = vector.extract_strided_slice %119 {offsets = [1, 0], sizes = [15, 16], strides = [1, 1]} : vector<16x16xf32> to vector<15x16xf32>
    %208 = vector.extract_strided_slice %119 {offsets = [0, 0], sizes = [1, 16], strides = [1, 1]} : vector<16x16xf32> to vector<1x16xf32>
    %209 = tpu.concatenate %207, %208 in 0 : vector<15x16xf32>, vector<1x16xf32> -> vector<16x16xf32>
    %cst_43 = arith.constant 2.000000e+00 : f32
    %210 = vector.broadcast %cst_43 : f32 to vector<16x16xf32>
    %211 = arith.mulf %210, %119 : vector<16x16xf32>
    %212 = arith.addf %206, %211 : vector<16x16xf32>
    %213 = arith.addf %212, %209 : vector<16x16xf32>
    %214 = arith.subf %206, %209 : vector<16x16xf32>
    %215 = vector.extract_strided_slice %213 {offsets = [0, 1], sizes = [16, 15], strides = [1, 1]} : vector<16x16xf32> to vector<16x15xf32>
    %216 = vector.extract_strided_slice %213 {offsets = [0, 0], sizes = [16, 1], strides = [1, 1]} : vector<16x16xf32> to vector<16x1xf32>
    %217 = tpu.concatenate %215, %216 in 1 : vector<16x15xf32>, vector<16x1xf32> -> vector<16x16xf32>
    %218 = vector.extract_strided_slice %213 {offsets = [0, 15], sizes = [16, 1], strides = [1, 1]} : vector<16x16xf32> to vector<16x1xf32>
    %219 = vector.extract_strided_slice %213 {offsets = [0, 0], sizes = [16, 15], strides = [1, 1]} : vector<16x16xf32> to vector<16x15xf32>
    %220 = tpu.concatenate %218, %219 in 1 : vector<16x1xf32>, vector<16x15xf32> -> vector<16x16xf32>
    %221 = arith.subf %217, %220 : vector<16x16xf32>
    %222 = vector.extract_strided_slice %214 {offsets = [0, 15], sizes = [16, 1], strides = [1, 1]} : vector<16x16xf32> to vector<16x1xf32>
    %223 = vector.extract_strided_slice %214 {offsets = [0, 0], sizes = [16, 15], strides = [1, 1]} : vector<16x16xf32> to vector<16x15xf32>
    %224 = tpu.concatenate %222, %223 in 1 : vector<16x1xf32>, vector<16x15xf32> -> vector<16x16xf32>
    %cst_44 = arith.constant 2.000000e+00 : f32
    %225 = vector.broadcast %cst_44 : f32 to vector<16x16xf32>
    %226 = arith.mulf %225, %214 : vector<16x16xf32>
    %227 = arith.addf %224, %226 : vector<16x16xf32>
    %228 = vector.extract_strided_slice %214 {offsets = [0, 1], sizes = [16, 15], strides = [1, 1]} : vector<16x16xf32> to vector<16x15xf32>
    %229 = vector.extract_strided_slice %214 {offsets = [0, 0], sizes = [16, 1], strides = [1, 1]} : vector<16x16xf32> to vector<16x1xf32>
    %230 = tpu.concatenate %228, %229 in 1 : vector<16x15xf32>, vector<16x1xf32> -> vector<16x16xf32>
    %231 = arith.addf %227, %230 : vector<16x16xf32>
    %232 = math.absf %221 : vector<16x16xf32>
    %233 = arith.addf %201, %232 : vector<16x16xf32>
    %234 = math.absf %231 : vector<16x16xf32>
    %235 = arith.addf %203, %234 : vector<16x16xf32>
    %cst_45 = arith.constant 0.333333343 : f32
    %236 = vector.broadcast %cst_45 : f32 to vector<16x16xf32>
    %237 = arith.mulf %233, %236 : vector<16x16xf32>
    %cst_46 = arith.constant 0.333333343 : f32
    %238 = vector.broadcast %cst_46 : f32 to vector<16x16xf32>
    %239 = arith.mulf %235, %238 : vector<16x16xf32>
    %240 = tpu.iota {dimensions = array<i32: 0>} : vector<16x16xi32>
    %241 = tpu.iota {dimensions = array<i32: 1>} : vector<16x16xi32>
    %c1_i32 = arith.constant 1 : i32
    %242 = vector.broadcast %c1_i32 : i32 to vector<16x16xi32>
    %243 = arith.cmpi sge, %240, %242 : vector<16x16xi32>
    %c15_i32_47 = arith.constant 15 : i32
    %244 = vector.broadcast %c15_i32_47 : i32 to vector<16x16xi32>
    %245 = arith.cmpi slt, %240, %244 : vector<16x16xi32>
    %246 = arith.andi %243, %245 : vector<16x16xi1>
    %c1_i32_48 = arith.constant 1 : i32
    %247 = vector.broadcast %c1_i32_48 : i32 to vector<16x16xi32>
    %248 = arith.cmpi sge, %241, %247 : vector<16x16xi32>
    %249 = arith.andi %246, %248 : vector<16x16xi1>
    %c15_i32_49 = arith.constant 15 : i32
    %250 = vector.broadcast %c15_i32_49 : i32 to vector<16x16xi32>
    %251 = arith.cmpi slt, %241, %250 : vector<16x16xi32>
    %252 = arith.andi %249, %251 : vector<16x16xi1>
    %253 = arith.extui %252 : vector<16x16xi1> to vector<16x16xi32>
    %254 = arith.sitofp %253 : vector<16x16xi32> to vector<16x16xf32>
    %255 = arith.mulf %237, %237 : vector<16x16xf32>
    %256 = arith.mulf %239, %239 : vector<16x16xf32>
    %257 = arith.addf %255, %256 : vector<16x16xf32>
    %258 = math.sqrt %257 : vector<16x16xf32>
    %259 = arith.mulf %258, %254 : vector<16x16xf32>
    %cst_50 = arith.constant 1.000000e-30 : f32
    %260 = vector.broadcast %cst_50 : f32 to vector<16x16xf32>
    %261 = arith.maximumf %259, %260 : vector<16x16xf32>
    %cst_51 = arith.constant 0.000000e+00 : f32
    %262 = vector.broadcast %cst_51 : f32 to vector<16x16xf32>
    %263 = arith.cmpf ogt, %259, %262 : vector<16x16xf32>
    %264 = arith.divf %237, %261 : vector<16x16xf32>
    %cst_52 = arith.constant 1.000000e+00 : f32
    %265 = vector.broadcast %cst_52 : f32 to vector<16x16xf32>
    %266 = arith.select %263, %264, %265 : vector<16x16xi1>, vector<16x16xf32>
    %c0_53 = arith.constant 0 : index
    %c0_54 = arith.constant 0 : index
    %c0_55 = arith.constant 0 : index
    %267 = vector.load %arg7[%c0_53, %c0_54, %c0_55] : memref<1x16x16xf32, #tpu.memory_space<vmem>>, vector<1x16x16xf32>
    %268 = vector.shape_cast %267 : vector<1x16x16xf32> to vector<16x16xf32>
    %269 = vector.shape_cast %266 : vector<16x16xf32> to vector<1x16x16xf32>
    tpu.vector_store %arg7[%c0_53, %c0_54, %c0_55], %269 {strides = array<i32>} : memref<1x16x16xf32, #tpu.memory_space<vmem>>, vector<1x16x16xf32>,
    %cst_56 = arith.constant 0.000000e+00 : f32
    %270 = vector.broadcast %cst_56 : f32 to vector<16x16xf32>
    %271 = arith.cmpf ogt, %259, %270 : vector<16x16xf32>
    %272 = arith.divf %239, %261 : vector<16x16xf32>
    %cst_57 = arith.constant 0.000000e+00 : f32
    %273 = vector.broadcast %cst_57 : f32 to vector<16x16xf32>
    %274 = arith.select %271, %272, %273 : vector<16x16xi1>, vector<16x16xf32>
    %c0_58 = arith.constant 0 : index
    %c0_59 = arith.constant 0 : index
    %c0_60 = arith.constant 0 : index
    %275 = vector.load %arg8[%c0_58, %c0_59, %c0_60] : memref<1x16x16xf32, #tpu.memory_space<vmem>>, vector<1x16x16xf32>
    %276 = vector.shape_cast %275 : vector<1x16x16xf32> to vector<16x16xf32>
    %277 = vector.shape_cast %274 : vector<16x16xf32> to vector<1x16x16xf32>
    tpu.vector_store %arg8[%c0_58, %c0_59, %c0_60], %277 {strides = array<i32>} : memref<1x16x16xf32, #tpu.memory_space<vmem>>, vector<1x16x16xf32>,
    %278 = tpu.iota {dimensions = array<i32: 0>} : vector<16x16xi32>
    %279 = tpu.iota {dimensions = array<i32: 1>} : vector<16x16xi32>
    %c5_i32 = arith.constant 5 : i32
    %280 = vector.broadcast %c5_i32 : i32 to vector<16x16xi32>
    %281 = arith.cmpi sge, %278, %280 : vector<16x16xi32>
    %c11_i32 = arith.constant 11 : i32
    %282 = vector.broadcast %c11_i32 : i32 to vector<16x16xi32>
    %283 = arith.cmpi slt, %278, %282 : vector<16x16xi32>
    %284 = arith.andi %281, %283 : vector<16x16xi1>
    %c5_i32_61 = arith.constant 5 : i32
    %285 = vector.broadcast %c5_i32_61 : i32 to vector<16x16xi32>
    %286 = arith.cmpi sge, %279, %285 : vector<16x16xi32>
    %287 = arith.andi %284, %286 : vector<16x16xi1>
    %c11_i32_62 = arith.constant 11 : i32
    %288 = vector.broadcast %c11_i32_62 : i32 to vector<16x16xi32>
    %289 = arith.cmpi slt, %279, %288 : vector<16x16xi32>
    %290 = arith.andi %287, %289 : vector<16x16xi1>
    %291 = arith.extui %290 : vector<16x16xi1> to vector<16x16xi32>
    %292 = arith.sitofp %291 : vector<16x16xi32> to vector<16x16xf32>
    %293 = arith.mulf %259, %292 : vector<16x16xf32>
    %c0_63 = arith.constant 0 : index
    %c0_64 = arith.constant 0 : index
    %c0_65 = arith.constant 0 : index
    %294 = vector.load %arg6[%c0_63, %c0_64, %c0_65] : memref<1x16x16xf32, #tpu.memory_space<vmem>>, vector<1x16x16xf32>
    %295 = vector.shape_cast %294 : vector<1x16x16xf32> to vector<16x16xf32>
    %296 = vector.shape_cast %293 : vector<16x16xf32> to vector<1x16x16xf32>
    tpu.vector_store %arg6[%c0_63, %c0_64, %c0_65], %296 {strides = array<i32>} : memref<1x16x16xf32, #tpu.memory_space<vmem>>, vector<1x16x16xf32>,
    return
  }
  func.func @transform_0(%arg0: i32) -> (i32, i32, i32, i32) {
    %c0_i32 = arith.constant 0 : i32
    %c0_i32_0 = arith.constant 0 : i32
    %c0_i32_1 = arith.constant 0 : i32
    %c0_i32_2 = arith.constant 0 : i32
    return %arg0, %c0_i32, %c0_i32_0, %c0_i32_1 : i32, i32, i32, i32
  }
  func.func @transform_1(%arg0: i32) -> (i32, i32, i32, i32) {
    %c0_i32 = arith.constant 0 : i32
    %c0_i32_0 = arith.constant 0 : i32
    %c0_i32_1 = arith.constant 0 : i32
    %c0_i32_2 = arith.constant 0 : i32
    return %arg0, %c0_i32, %c0_i32_0, %c0_i32_1 : i32, i32, i32, i32
  }
  func.func @transform_2(%arg0: i32) -> i32 {
    %c0_i32 = arith.constant 0 : i32
    %c0_i32_0 = arith.constant 0 : i32
    return %c0_i32 : i32
  }
  func.func @transform_3(%arg0: i32) -> (i32, i32, i32, i32) {
    %c0_i32 = arith.constant 0 : i32
    %c0_i32_0 = arith.constant 0 : i32
    %c0_i32_1 = arith.constant 0 : i32
    %c0_i32_2 = arith.constant 0 : i32
    return %arg0, %c0_i32, %c0_i32_0, %c0_i32_1 : i32, i32, i32, i32
  }
  func.func @transform_4(%arg0: i32) -> (i32, i32, i32, i32) {
    %c0_i32 = arith.constant 0 : i32
    %c0_i32_0 = arith.constant 0 : i32
    %c0_i32_1 = arith.constant 0 : i32
    %c0_i32_2 = arith.constant 0 : i32
    return %arg0, %c0_i32, %c0_i32_0, %c0_i32_1 : i32, i32, i32, i32
  }
  func.func @transform_5(%arg0: i32) -> (i32, i32, i32) {
    %c0_i32 = arith.constant 0 : i32
    %c0_i32_0 = arith.constant 0 : i32
    %c0_i32_1 = arith.constant 0 : i32
    return %arg0, %c0_i32, %c0_i32_0 : i32, i32, i32
  }
  func.func @transform_6(%arg0: i32) -> (i32, i32, i32) {
    %c0_i32 = arith.constant 0 : i32
    %c0_i32_0 = arith.constant 0 : i32
    %c0_i32_1 = arith.constant 0 : i32
    return %arg0, %c0_i32, %c0_i32_0 : i32, i32, i32
  }
  func.func @transform_7(%arg0: i32) -> (i32, i32, i32) {
    %c0_i32 = arith.constant 0 : i32
    %c0_i32_0 = arith.constant 0 : i32
    %c0_i32_1 = arith.constant 0 : i32
    return %arg0, %c0_i32, %c0_i32_0 : i32, i32, i32
  }
}

module attributes {stable_mosaic.version = 11 : i64} {
  func.func @_dilate_mask_kernel(%arg0: i32, %arg1: memref<1x16x16xf32, #tpu.memory_space<vmem>>, %arg2: memref<1xf32, #tpu.memory_space<smem>>, %arg3: memref<1x16x16xf32, #tpu.memory_space<vmem>>, %arg4: memref<1x16x16xf32, #tpu.memory_space<vmem>>, %arg5: memref<1x16x16xf32, #tpu.memory_space<vmem>>, %arg6: memref<1x16x16xf32, #tpu.memory_space<vmem>>, %arg7: memref<1x1x128xf32, #tpu.memory_space<vmem>>) attributes {dimension_semantics = [#tpu.dimension_semantics<parallel>], iteration_bounds = array<i64: 2>, scalar_prefetch = 0 : i64, scratch_operands = 0 : i64, tpu.core_type = #tpu.core_type<tc>, window_params = [{transform_indices = @transform_0, window_bounds = array<i64: 1, 16, 16>}, {transform_indices = @transform_1, window_bounds = array<i64: 1>}, {transform_indices = @transform_2, window_bounds = array<i64: 1, 16, 16>}, {transform_indices = @transform_3, window_bounds = array<i64: 1, 16, 16>}, {transform_indices = @transform_4, window_bounds = array<i64: 1, 16, 16>}, {transform_indices = @transform_5, window_bounds = array<i64: 1, 16, 16>}, {transform_indices = @transform_6, window_bounds = array<i64: 1, 1, 128>}]} {
    %c0 = arith.constant 0 : index
    %0 = memref.load %arg2[%c0] : memref<1xf32, #tpu.memory_space<smem>>
    %c0_0 = arith.constant 0 : index
    %c0_1 = arith.constant 0 : index
    %c0_2 = arith.constant 0 : index
    %1 = vector.load %arg1[%c0_0, %c0_1, %c0_2] : memref<1x16x16xf32, #tpu.memory_space<vmem>>, vector<1x16x16xf32>
    %2 = vector.shape_cast %1 : vector<1x16x16xf32> to vector<16x16xf32>
    %3 = vector.broadcast %0 : f32 to vector<16x16xf32>
    %4 = arith.cmpf oge, %2, %3 : vector<16x16xf32>
    %cst = arith.constant 1.000000e+00 : f32
    %cst_3 = arith.constant 0.000000e+00 : f32
    %5 = vector.broadcast %cst : f32 to vector<16x16xf32>
    %6 = vector.broadcast %cst_3 : f32 to vector<16x16xf32>
    %7 = arith.select %4, %5, %6 : vector<16x16xi1>, vector<16x16xf32>
    %8 = vector.extract_strided_slice %7 {offsets = [15, 0], sizes = [1, 16], strides = [1, 1]} : vector<16x16xf32> to vector<1x16xf32>
    %9 = vector.extract_strided_slice %7 {offsets = [0, 0], sizes = [15, 16], strides = [1, 1]} : vector<16x16xf32> to vector<15x16xf32>
    %10 = tpu.concatenate %8, %9 in 0 : vector<1x16xf32>, vector<15x16xf32> -> vector<16x16xf32>
    %11 = vector.extract_strided_slice %7 {offsets = [1, 0], sizes = [15, 16], strides = [1, 1]} : vector<16x16xf32> to vector<15x16xf32>
    %12 = vector.extract_strided_slice %7 {offsets = [0, 0], sizes = [1, 16], strides = [1, 1]} : vector<16x16xf32> to vector<1x16xf32>
    %13 = tpu.concatenate %11, %12 in 0 : vector<15x16xf32>, vector<1x16xf32> -> vector<16x16xf32>
    %14 = arith.maximumf %10, %13 : vector<16x16xf32>
    %15 = arith.maximumf %7, %14 : vector<16x16xf32>
    %16 = vector.extract_strided_slice %15 {offsets = [0, 15], sizes = [16, 1], strides = [1, 1]} : vector<16x16xf32> to vector<16x1xf32>
    %17 = vector.extract_strided_slice %15 {offsets = [0, 0], sizes = [16, 15], strides = [1, 1]} : vector<16x16xf32> to vector<16x15xf32>
    %18 = tpu.concatenate %16, %17 in 1 : vector<16x1xf32>, vector<16x15xf32> -> vector<16x16xf32>
    %19 = vector.extract_strided_slice %15 {offsets = [0, 1], sizes = [16, 15], strides = [1, 1]} : vector<16x16xf32> to vector<16x15xf32>
    %20 = vector.extract_strided_slice %15 {offsets = [0, 0], sizes = [16, 1], strides = [1, 1]} : vector<16x16xf32> to vector<16x1xf32>
    %21 = tpu.concatenate %19, %20 in 1 : vector<16x15xf32>, vector<16x1xf32> -> vector<16x16xf32>
    %22 = arith.maximumf %18, %21 : vector<16x16xf32>
    %23 = arith.maximumf %15, %22 : vector<16x16xf32>
    %cst_4 = arith.constant 0.000000e+00 : f32
    %24 = vector.broadcast %cst_4 : f32 to vector<16x16xf32>
    %25 = arith.cmpf ogt, %23, %24 : vector<16x16xf32>
    %c0_5 = arith.constant 0 : index
    %c0_6 = arith.constant 0 : index
    %c0_7 = arith.constant 0 : index
    %26 = vector.load %arg3[%c0_5, %c0_6, %c0_7] : memref<1x16x16xf32, #tpu.memory_space<vmem>>, vector<1x16x16xf32>
    %27 = vector.shape_cast %26 : vector<1x16x16xf32> to vector<16x16xf32>
    %cst_8 = arith.constant 0.000000e+00 : f32
    %28 = vector.broadcast %cst_8 : f32 to vector<16x16xf32>
    %29 = arith.select %25, %28, %27 : vector<16x16xi1>, vector<16x16xf32>
    %c0_9 = arith.constant 0 : index
    %c0_10 = arith.constant 0 : index
    %c0_11 = arith.constant 0 : index
    %30 = vector.load %arg4[%c0_9, %c0_10, %c0_11] : memref<1x16x16xf32, #tpu.memory_space<vmem>>, vector<1x16x16xf32>
    %31 = vector.shape_cast %30 : vector<1x16x16xf32> to vector<16x16xf32>
    %cst_12 = arith.constant 0.000000e+00 : f32
    %32 = vector.broadcast %cst_12 : f32 to vector<16x16xf32>
    %33 = arith.select %25, %32, %31 : vector<16x16xi1>, vector<16x16xf32>
    %c0_13 = arith.constant 0 : index
    %c0_14 = arith.constant 0 : index
    %c0_15 = arith.constant 0 : index
    %34 = vector.load %arg5[%c0_13, %c0_14, %c0_15] : memref<1x16x16xf32, #tpu.memory_space<vmem>>, vector<1x16x16xf32>
    %35 = vector.shape_cast %34 : vector<1x16x16xf32> to vector<16x16xf32>
    %36 = vector.shape_cast %29 : vector<16x16xf32> to vector<1x16x16xf32>
    tpu.vector_store %arg5[%c0_13, %c0_14, %c0_15], %36 {strides = array<i32>} : memref<1x16x16xf32, #tpu.memory_space<vmem>>, vector<1x16x16xf32>,
    %c0_16 = arith.constant 0 : index
    %c0_17 = arith.constant 0 : index
    %c0_18 = arith.constant 0 : index
    %37 = vector.load %arg6[%c0_16, %c0_17, %c0_18] : memref<1x16x16xf32, #tpu.memory_space<vmem>>, vector<1x16x16xf32>
    %38 = vector.shape_cast %37 : vector<1x16x16xf32> to vector<16x16xf32>
    %39 = vector.shape_cast %33 : vector<16x16xf32> to vector<1x16x16xf32>
    tpu.vector_store %arg6[%c0_16, %c0_17, %c0_18], %39 {strides = array<i32>} : memref<1x16x16xf32, #tpu.memory_space<vmem>>, vector<1x16x16xf32>,
    %40 = tpu.iota {dimensions = array<i32: 2>} : vector<1x1x128xi32>
    %c0_i32 = arith.constant 0 : i32
    %41 = vector.broadcast %c0_i32 : i32 to vector<1x1x128xi32>
    %42 = arith.cmpi eq, %40, %41 : vector<1x1x128xi32>
    %43 = vector.shape_cast %29 : vector<16x16xf32> to vector<1x16x16xf32>
    %cst_19 = arith.constant dense<0xFF800000> : vector<1xf32>
    %44 = vector.multi_reduction <maximumf>, %43, %cst_19 [1, 2] : vector<1x16x16xf32> to vector<1xf32>
    %45 = vector.shape_cast %44 : vector<1xf32> to vector<1x1x1xf32>
    %46 = vector.extract %45[0, 0, 0] : f32 from vector<1x1x1xf32>
    %cst_20 = arith.constant 0.000000e+00 : f32
    %47 = vector.broadcast %46 : f32 to vector<1x1x128xf32>
    %48 = vector.broadcast %cst_20 : f32 to vector<1x1x128xf32>
    %49 = arith.select %42, %47, %48 : vector<1x1x128xi1>, vector<1x1x128xf32>
    %c1_i32 = arith.constant 1 : i32
    %50 = vector.broadcast %c1_i32 : i32 to vector<1x1x128xi32>
    %51 = arith.cmpi eq, %40, %50 : vector<1x1x128xi32>
    %52 = vector.shape_cast %33 : vector<16x16xf32> to vector<1x16x16xf32>
    %cst_21 = arith.constant dense<0xFF800000> : vector<1xf32>
    %53 = vector.multi_reduction <maximumf>, %52, %cst_21 [1, 2] : vector<1x16x16xf32> to vector<1xf32>
    %54 = vector.shape_cast %53 : vector<1xf32> to vector<1x1x1xf32>
    %55 = vector.extract %54[0, 0, 0] : f32 from vector<1x1x1xf32>
    %cst_22 = arith.constant 0.000000e+00 : f32
    %56 = vector.broadcast %55 : f32 to vector<1x1x128xf32>
    %57 = vector.broadcast %cst_22 : f32 to vector<1x1x128xf32>
    %58 = arith.select %51, %56, %57 : vector<1x1x128xi1>, vector<1x1x128xf32>
    %59 = arith.addf %49, %58 : vector<1x1x128xf32>
    %c0_23 = arith.constant 0 : index
    %c0_24 = arith.constant 0 : index
    %c0_25 = arith.constant 0 : index
    %60 = vector.load %arg7[%c0_23, %c0_24, %c0_25] : memref<1x1x128xf32, #tpu.memory_space<vmem>>, vector<1x1x128xf32>
    tpu.vector_store %arg7[%c0_23, %c0_24, %c0_25], %59 {strides = array<i32>} : memref<1x1x128xf32, #tpu.memory_space<vmem>>, vector<1x1x128xf32>,
    return
  }
  func.func @transform_0(%arg0: i32) -> (i32, i32, i32) {
    %c0_i32 = arith.constant 0 : i32
    %c0_i32_0 = arith.constant 0 : i32
    %c0_i32_1 = arith.constant 0 : i32
    return %arg0, %c0_i32, %c0_i32_0 : i32, i32, i32
  }
  func.func @transform_1(%arg0: i32) -> i32 {
    %c0_i32 = arith.constant 0 : i32
    %c0_i32_0 = arith.constant 0 : i32
    return %c0_i32 : i32
  }
  func.func @transform_2(%arg0: i32) -> (i32, i32, i32) {
    %c0_i32 = arith.constant 0 : i32
    %c0_i32_0 = arith.constant 0 : i32
    %c0_i32_1 = arith.constant 0 : i32
    return %arg0, %c0_i32, %c0_i32_0 : i32, i32, i32
  }
  func.func @transform_3(%arg0: i32) -> (i32, i32, i32) {
    %c0_i32 = arith.constant 0 : i32
    %c0_i32_0 = arith.constant 0 : i32
    %c0_i32_1 = arith.constant 0 : i32
    return %arg0, %c0_i32, %c0_i32_0 : i32, i32, i32
  }
  func.func @transform_4(%arg0: i32) -> (i32, i32, i32) {
    %c0_i32 = arith.constant 0 : i32
    %c0_i32_0 = arith.constant 0 : i32
    %c0_i32_1 = arith.constant 0 : i32
    return %arg0, %c0_i32, %c0_i32_0 : i32, i32, i32
  }
  func.func @transform_5(%arg0: i32) -> (i32, i32, i32) {
    %c0_i32 = arith.constant 0 : i32
    %c0_i32_0 = arith.constant 0 : i32
    %c0_i32_1 = arith.constant 0 : i32
    return %arg0, %c0_i32, %c0_i32_0 : i32, i32, i32
  }
  func.func @transform_6(%arg0: i32) -> (i32, i32, i32) {
    %c0_i32 = arith.constant 0 : i32
    %c0_i32_0 = arith.constant 0 : i32
    %c0_i32_1 = arith.constant 0 : i32
    return %arg0, %c0_i32, %c0_i32_0 : i32, i32, i32
  }
}

module attributes {stable_mosaic.version = 11 : i64} {
  func.func @_edge_pair_kernel(%arg0: i32, %arg1: i32, %arg2: memref<1x6x1536xf32, #tpu.memory_space<vmem>>, %arg3: memref<1x6x1536xf32, #tpu.memory_space<vmem>>, %arg4: memref<1x1x1536xf32, #tpu.memory_space<vmem>>, %arg5: memref<1x1x128xf32, #tpu.memory_space<vmem>>) attributes {dimension_semantics = [#tpu.dimension_semantics<parallel>, #tpu.dimension_semantics<arbitrary>], iteration_bounds = array<i64: 2, 1>, scalar_prefetch = 0 : i64, scratch_operands = 0 : i64, tpu.core_type = #tpu.core_type<tc>, window_params = [{transform_indices = @transform_0, window_bounds = array<i64: 1, 6, 1536>}, {transform_indices = @transform_1, window_bounds = array<i64: 1, 6, 1536>}, {transform_indices = @transform_2, window_bounds = array<i64: 1, 1, 1536>}, {transform_indices = @transform_3, window_bounds = array<i64: 1, 1, 128>}]} {
    %c0_i32 = arith.constant 0 : i32
    %0 = arith.cmpi eq, %arg1, %c0_i32 : i32
    %1 = arith.extui %0 : i1 to i32
    %c0_i32_0 = arith.constant 0 : i32
    %2 = arith.cmpi ne, %1, %c0_i32_0 : i32
    scf.if %2 {
      %cst_29 = arith.constant 0.000000e+00 : f32
      %92 = vector.broadcast %cst_29 : f32 to vector<1x1x128xf32>
      %c0_30 = arith.constant 0 : index
      %c0_31 = arith.constant 0 : index
      %c0_32 = arith.constant 0 : index
      %93 = vector.load %arg5[%c0_30, %c0_31, %c0_32] : memref<1x1x128xf32, #tpu.memory_space<vmem>>, vector<1x1x128xf32>
      tpu.vector_store %arg5[%c0_30, %c0_31, %c0_32], %92 {strides = array<i32>} : memref<1x1x128xf32, #tpu.memory_space<vmem>>, vector<1x1x128xf32>,
    } else {
    }
    %c0 = arith.constant 0 : index
    %c0_1 = arith.constant 0 : index
    %c0_2 = arith.constant 0 : index
    %3 = vector.load %arg2[%c0, %c0_1, %c0_2] : memref<1x6x1536xf32, #tpu.memory_space<vmem>>, vector<1x6x1536xf32>
    %4 = vector.shape_cast %3 : vector<1x6x1536xf32> to vector<6x1536xf32>
    %c0_3 = arith.constant 0 : index
    %c0_4 = arith.constant 0 : index
    %c0_5 = arith.constant 0 : index
    %5 = vector.load %arg3[%c0_3, %c0_4, %c0_5] : memref<1x6x1536xf32, #tpu.memory_space<vmem>>, vector<1x6x1536xf32>
    %6 = vector.shape_cast %5 : vector<1x6x1536xf32> to vector<6x1536xf32>
    %7 = vector.extract_strided_slice %4 {offsets = [0, 0], sizes = [1, 1536], strides = [1, 1]} : vector<6x1536xf32> to vector<1x1536xf32>
    %8 = vector.extract_strided_slice %6 {offsets = [0, 0], sizes = [1, 1536], strides = [1, 1]} : vector<6x1536xf32> to vector<1x1536xf32>
    %9 = arith.mulf %7, %8 : vector<1x1536xf32>
    %10 = vector.extract_strided_slice %4 {offsets = [1, 0], sizes = [1, 1536], strides = [1, 1]} : vector<6x1536xf32> to vector<1x1536xf32>
    %11 = vector.extract_strided_slice %6 {offsets = [1, 0], sizes = [1, 1536], strides = [1, 1]} : vector<6x1536xf32> to vector<1x1536xf32>
    %12 = arith.mulf %10, %11 : vector<1x1536xf32>
    %13 = arith.addf %9, %12 : vector<1x1536xf32>
    %14 = vector.extract_strided_slice %4 {offsets = [2, 0], sizes = [1, 1536], strides = [1, 1]} : vector<6x1536xf32> to vector<1x1536xf32>
    %15 = vector.extract_strided_slice %6 {offsets = [2, 0], sizes = [1, 1536], strides = [1, 1]} : vector<6x1536xf32> to vector<1x1536xf32>
    %16 = arith.mulf %14, %15 : vector<1x1536xf32>
    %17 = arith.addf %13, %16 : vector<1x1536xf32>
    %18 = math.absf %17 : vector<1x1536xf32>
    %19 = vector.extract_strided_slice %4 {offsets = [3, 0], sizes = [1, 1536], strides = [1, 1]} : vector<6x1536xf32> to vector<1x1536xf32>
    %20 = vector.extract_strided_slice %6 {offsets = [3, 0], sizes = [1, 1536], strides = [1, 1]} : vector<6x1536xf32> to vector<1x1536xf32>
    %21 = arith.mulf %19, %20 : vector<1x1536xf32>
    %22 = vector.extract_strided_slice %4 {offsets = [4, 0], sizes = [1, 1536], strides = [1, 1]} : vector<6x1536xf32> to vector<1x1536xf32>
    %23 = vector.extract_strided_slice %6 {offsets = [4, 0], sizes = [1, 1536], strides = [1, 1]} : vector<6x1536xf32> to vector<1x1536xf32>
    %24 = arith.mulf %22, %23 : vector<1x1536xf32>
    %25 = arith.addf %21, %24 : vector<1x1536xf32>
    %26 = vector.extract_strided_slice %4 {offsets = [5, 0], sizes = [1, 1536], strides = [1, 1]} : vector<6x1536xf32> to vector<1x1536xf32>
    %27 = vector.extract_strided_slice %6 {offsets = [5, 0], sizes = [1, 1536], strides = [1, 1]} : vector<6x1536xf32> to vector<1x1536xf32>
    %28 = arith.mulf %26, %27 : vector<1x1536xf32>
    %29 = arith.addf %25, %28 : vector<1x1536xf32>
    %30 = math.absf %29 : vector<1x1536xf32>
    %c0_6 = arith.constant 0 : index
    %c0_7 = arith.constant 0 : index
    %c0_8 = arith.constant 0 : index
    %31 = vector.load %arg4[%c0_6, %c0_7, %c0_8] : memref<1x1x1536xf32, #tpu.memory_space<vmem>>, vector<1x1x1536xf32>
    %32 = vector.shape_cast %31 : vector<1x1x1536xf32> to vector<1x1536xf32>
    %33 = arith.subf %30, %18 : vector<1x1536xf32>
    %34 = math.absf %33 : vector<1x1536xf32>
    %cst = arith.constant 3.000000e-01 : f32
    %35 = vector.broadcast %cst : f32 to vector<1x1536xf32>
    %36 = arith.cmpf olt, %30, %35 : vector<1x1536xf32>
    %cst_9 = arith.constant 1.000000e+00 : f32
    %cst_10 = arith.constant 0.000000e+00 : f32
    %37 = vector.broadcast %cst_9 : f32 to vector<1x1536xf32>
    %38 = vector.broadcast %cst_10 : f32 to vector<1x1536xf32>
    %39 = arith.select %36, %37, %38 : vector<1x1536xi1>, vector<1x1536xf32>
    %40 = arith.mulf %39, %32 : vector<1x1536xf32>
    %cst_11 = arith.constant 0.949999988 : f32
    %41 = vector.broadcast %cst_11 : f32 to vector<1x1536xf32>
    %42 = arith.cmpf ogt, %30, %41 : vector<1x1536xf32>
    %cst_12 = arith.constant 1.000000e+00 : f32
    %cst_13 = arith.constant 0.000000e+00 : f32
    %43 = vector.broadcast %cst_12 : f32 to vector<1x1536xf32>
    %44 = vector.broadcast %cst_13 : f32 to vector<1x1536xf32>
    %45 = arith.select %42, %43, %44 : vector<1x1536xi1>, vector<1x1536xf32>
    %46 = arith.mulf %45, %32 : vector<1x1536xf32>
    %47 = arith.mulf %34, %40 : vector<1x1536xf32>
    %48 = vector.shape_cast %47 : vector<1x1536xf32> to vector<1x1x1536xf32>
    %cst_14 = arith.constant dense<0.000000e+00> : vector<1xf32>
    %49 = vector.multi_reduction <add>, %48, %cst_14 [1, 2] : vector<1x1x1536xf32> to vector<1xf32>
    %50 = vector.shape_cast %49 : vector<1xf32> to vector<1x1x1xf32>
    %51 = vector.extract %50[0, 0, 0] : f32 from vector<1x1x1xf32>
    %52 = vector.shape_cast %40 : vector<1x1536xf32> to vector<1x1x1536xf32>
    %cst_15 = arith.constant dense<0.000000e+00> : vector<1xf32>
    %53 = vector.multi_reduction <add>, %52, %cst_15 [1, 2] : vector<1x1x1536xf32> to vector<1xf32>
    %54 = vector.shape_cast %53 : vector<1xf32> to vector<1x1x1xf32>
    %55 = vector.extract %54[0, 0, 0] : f32 from vector<1x1x1xf32>
    %56 = arith.mulf %34, %46 : vector<1x1536xf32>
    %57 = vector.shape_cast %56 : vector<1x1536xf32> to vector<1x1x1536xf32>
    %cst_16 = arith.constant dense<0.000000e+00> : vector<1xf32>
    %58 = vector.multi_reduction <add>, %57, %cst_16 [1, 2] : vector<1x1x1536xf32> to vector<1xf32>
    %59 = vector.shape_cast %58 : vector<1xf32> to vector<1x1x1xf32>
    %60 = vector.extract %59[0, 0, 0] : f32 from vector<1x1x1xf32>
    %61 = vector.shape_cast %46 : vector<1x1536xf32> to vector<1x1x1536xf32>
    %cst_17 = arith.constant dense<0.000000e+00> : vector<1xf32>
    %62 = vector.multi_reduction <add>, %61, %cst_17 [1, 2] : vector<1x1x1536xf32> to vector<1xf32>
    %63 = vector.shape_cast %62 : vector<1xf32> to vector<1x1x1xf32>
    %64 = vector.extract %63[0, 0, 0] : f32 from vector<1x1x1xf32>
    %65 = tpu.iota {dimensions = array<i32: 2>} : vector<1x1x128xi32>
    %c0_18 = arith.constant 0 : index
    %c0_19 = arith.constant 0 : index
    %c0_20 = arith.constant 0 : index
    %66 = vector.load %arg5[%c0_18, %c0_19, %c0_20] : memref<1x1x128xf32, #tpu.memory_space<vmem>>, vector<1x1x128xf32>
    %c0_i32_21 = arith.constant 0 : i32
    %67 = vector.broadcast %c0_i32_21 : i32 to vector<1x1x128xi32>
    %68 = arith.cmpi eq, %65, %67 : vector<1x1x128xi32>
    %cst_22 = arith.constant 0.000000e+00 : f32
    %69 = vector.broadcast %51 : f32 to vector<1x1x128xf32>
    %70 = vector.broadcast %cst_22 : f32 to vector<1x1x128xf32>
    %71 = arith.select %68, %69, %70 : vector<1x1x128xi1>, vector<1x1x128xf32>
    %c1_i32 = arith.constant 1 : i32
    %72 = vector.broadcast %c1_i32 : i32 to vector<1x1x128xi32>
    %73 = arith.cmpi eq, %65, %72 : vector<1x1x128xi32>
    %cst_23 = arith.constant 0.000000e+00 : f32
    %74 = vector.broadcast %55 : f32 to vector<1x1x128xf32>
    %75 = vector.broadcast %cst_23 : f32 to vector<1x1x128xf32>
    %76 = arith.select %73, %74, %75 : vector<1x1x128xi1>, vector<1x1x128xf32>
    %77 = arith.addf %71, %76 : vector<1x1x128xf32>
    %c2_i32 = arith.constant 2 : i32
    %78 = vector.broadcast %c2_i32 : i32 to vector<1x1x128xi32>
    %79 = arith.cmpi eq, %65, %78 : vector<1x1x128xi32>
    %cst_24 = arith.constant 0.000000e+00 : f32
    %80 = vector.broadcast %60 : f32 to vector<1x1x128xf32>
    %81 = vector.broadcast %cst_24 : f32 to vector<1x1x128xf32>
    %82 = arith.select %79, %80, %81 : vector<1x1x128xi1>, vector<1x1x128xf32>
    %83 = arith.addf %77, %82 : vector<1x1x128xf32>
    %c3_i32 = arith.constant 3 : i32
    %84 = vector.broadcast %c3_i32 : i32 to vector<1x1x128xi32>
    %85 = arith.cmpi eq, %65, %84 : vector<1x1x128xi32>
    %cst_25 = arith.constant 0.000000e+00 : f32
    %86 = vector.broadcast %64 : f32 to vector<1x1x128xf32>
    %87 = vector.broadcast %cst_25 : f32 to vector<1x1x128xf32>
    %88 = arith.select %85, %86, %87 : vector<1x1x128xi1>, vector<1x1x128xf32>
    %89 = arith.addf %83, %88 : vector<1x1x128xf32>
    %90 = arith.addf %66, %89 : vector<1x1x128xf32>
    %c0_26 = arith.constant 0 : index
    %c0_27 = arith.constant 0 : index
    %c0_28 = arith.constant 0 : index
    %91 = vector.load %arg5[%c0_26, %c0_27, %c0_28] : memref<1x1x128xf32, #tpu.memory_space<vmem>>, vector<1x1x128xf32>
    tpu.vector_store %arg5[%c0_26, %c0_27, %c0_28], %90 {strides = array<i32>} : memref<1x1x128xf32, #tpu.memory_space<vmem>>, vector<1x1x128xf32>,
    return
  }
  func.func @transform_0(%arg0: i32, %arg1: i32) -> (i32, i32, i32) {
    %c0_i32 = arith.constant 0 : i32
    %c0_i32_0 = arith.constant 0 : i32
    return %arg0, %c0_i32, %arg1 : i32, i32, i32
  }
  func.func @transform_1(%arg0: i32, %arg1: i32) -> (i32, i32, i32) {
    %c0_i32 = arith.constant 0 : i32
    %c0_i32_0 = arith.constant 0 : i32
    return %arg0, %c0_i32, %arg1 : i32, i32, i32
  }
  func.func @transform_2(%arg0: i32, %arg1: i32) -> (i32, i32, i32) {
    %c0_i32 = arith.constant 0 : i32
    %c0_i32_0 = arith.constant 0 : i32
    return %arg0, %c0_i32, %arg1 : i32, i32, i32
  }
  func.func @transform_3(%arg0: i32, %arg1: i32) -> (i32, i32, i32) {
    %c0_i32 = arith.constant 0 : i32
    %c0_i32_0 = arith.constant 0 : i32
    %c0_i32_1 = arith.constant 0 : i32
    return %arg0, %c0_i32, %c0_i32_0 : i32, i32, i32
  }
}

module attributes {stable_mosaic.version = 11 : i64} {
  func.func @_rand_pair_kernel(%arg0: i32, %arg1: i32, %arg2: memref<2xi32, #tpu.memory_space<smem>>, %arg3: memref<1x6x128xf32, #tpu.memory_space<vmem>>, %arg4: memref<1x6x128xf32, #tpu.memory_space<vmem>>, %arg5: memref<1x1x128xf32, #tpu.memory_space<vmem>>) attributes {dimension_semantics = [#tpu.dimension_semantics<parallel>, #tpu.dimension_semantics<arbitrary>], iteration_bounds = array<i64: 2, 1>, scalar_prefetch = 0 : i64, scratch_operands = 0 : i64, tpu.core_type = #tpu.core_type<tc>, window_params = [{transform_indices = @transform_0, window_bounds = array<i64: 2>}, {transform_indices = @transform_1, window_bounds = array<i64: 1, 6, 128>}, {transform_indices = @transform_2, window_bounds = array<i64: 1, 6, 128>}, {transform_indices = @transform_3, window_bounds = array<i64: 1, 1, 128>}]} {
    %c0_i32 = arith.constant 0 : i32
    %0 = arith.cmpi eq, %arg1, %c0_i32 : i32
    %1 = arith.extui %0 : i1 to i32
    %c0_i32_0 = arith.constant 0 : i32
    %2 = arith.cmpi ne, %1, %c0_i32_0 : i32
    scf.if %2 {
      %cst_16 = arith.constant 0.000000e+00 : f32
      %58 = vector.broadcast %cst_16 : f32 to vector<1x1x128xf32>
      %c0_17 = arith.constant 0 : index
      %c0_18 = arith.constant 0 : index
      %c0_19 = arith.constant 0 : index
      %59 = vector.load %arg5[%c0_17, %c0_18, %c0_19] : memref<1x1x128xf32, #tpu.memory_space<vmem>>, vector<1x1x128xf32>
      tpu.vector_store %arg5[%c0_17, %c0_18, %c0_19], %58 {strides = array<i32>} : memref<1x1x128xf32, #tpu.memory_space<vmem>>, vector<1x1x128xf32>,
    } else {
    }
    %c0 = arith.constant 0 : index
    %c0_1 = arith.constant 0 : index
    %c0_2 = arith.constant 0 : index
    %3 = vector.load %arg3[%c0, %c0_1, %c0_2] : memref<1x6x128xf32, #tpu.memory_space<vmem>>, vector<1x6x128xf32>
    %4 = vector.shape_cast %3 : vector<1x6x128xf32> to vector<6x128xf32>
    %c0_3 = arith.constant 0 : index
    %c0_4 = arith.constant 0 : index
    %c0_5 = arith.constant 0 : index
    %5 = vector.load %arg4[%c0_3, %c0_4, %c0_5] : memref<1x6x128xf32, #tpu.memory_space<vmem>>, vector<1x6x128xf32>
    %6 = vector.shape_cast %5 : vector<1x6x128xf32> to vector<6x128xf32>
    %7 = vector.extract_strided_slice %4 {offsets = [0, 0], sizes = [1, 128], strides = [1, 1]} : vector<6x128xf32> to vector<1x128xf32>
    %8 = vector.extract_strided_slice %6 {offsets = [0, 0], sizes = [1, 128], strides = [1, 1]} : vector<6x128xf32> to vector<1x128xf32>
    %9 = arith.mulf %7, %8 : vector<1x128xf32>
    %10 = vector.extract_strided_slice %4 {offsets = [1, 0], sizes = [1, 128], strides = [1, 1]} : vector<6x128xf32> to vector<1x128xf32>
    %11 = vector.extract_strided_slice %6 {offsets = [1, 0], sizes = [1, 128], strides = [1, 1]} : vector<6x128xf32> to vector<1x128xf32>
    %12 = arith.mulf %10, %11 : vector<1x128xf32>
    %13 = arith.addf %9, %12 : vector<1x128xf32>
    %14 = vector.extract_strided_slice %4 {offsets = [2, 0], sizes = [1, 128], strides = [1, 1]} : vector<6x128xf32> to vector<1x128xf32>
    %15 = vector.extract_strided_slice %6 {offsets = [2, 0], sizes = [1, 128], strides = [1, 1]} : vector<6x128xf32> to vector<1x128xf32>
    %16 = arith.mulf %14, %15 : vector<1x128xf32>
    %17 = arith.addf %13, %16 : vector<1x128xf32>
    %18 = math.absf %17 : vector<1x128xf32>
    %19 = vector.extract_strided_slice %4 {offsets = [3, 0], sizes = [1, 128], strides = [1, 1]} : vector<6x128xf32> to vector<1x128xf32>
    %20 = vector.extract_strided_slice %6 {offsets = [3, 0], sizes = [1, 128], strides = [1, 1]} : vector<6x128xf32> to vector<1x128xf32>
    %21 = arith.mulf %19, %20 : vector<1x128xf32>
    %22 = vector.extract_strided_slice %4 {offsets = [4, 0], sizes = [1, 128], strides = [1, 1]} : vector<6x128xf32> to vector<1x128xf32>
    %23 = vector.extract_strided_slice %6 {offsets = [4, 0], sizes = [1, 128], strides = [1, 1]} : vector<6x128xf32> to vector<1x128xf32>
    %24 = arith.mulf %22, %23 : vector<1x128xf32>
    %25 = arith.addf %21, %24 : vector<1x128xf32>
    %26 = vector.extract_strided_slice %4 {offsets = [5, 0], sizes = [1, 128], strides = [1, 1]} : vector<6x128xf32> to vector<1x128xf32>
    %27 = vector.extract_strided_slice %6 {offsets = [5, 0], sizes = [1, 128], strides = [1, 1]} : vector<6x128xf32> to vector<1x128xf32>
    %28 = arith.mulf %26, %27 : vector<1x128xf32>
    %29 = arith.addf %25, %28 : vector<1x128xf32>
    %30 = math.absf %29 : vector<1x128xf32>
    %31 = arith.index_cast %arg0 : i32 to index
    %32 = memref.load %arg2[%31] : memref<2xi32, #tpu.memory_space<smem>>
    %c128_i32 = arith.constant 128 : i32
    %33 = arith.muli %arg1, %c128_i32 : i32
    %34 = tpu.iota {dimensions = array<i32: 1>} : vector<1x128xi32>
    %35 = vector.broadcast %33 : i32 to vector<1x128xi32>
    %36 = arith.addi %35, %34 : vector<1x128xi32>
    %37 = vector.broadcast %32 : i32 to vector<1x128xi32>
    %38 = arith.cmpi slt, %36, %37 : vector<1x128xi32>
    %cst = arith.constant 1.000000e+00 : f32
    %cst_6 = arith.constant 0.000000e+00 : f32
    %39 = vector.broadcast %cst : f32 to vector<1x128xf32>
    %40 = vector.broadcast %cst_6 : f32 to vector<1x128xf32>
    %41 = arith.select %38, %39, %40 : vector<1x128xi1>, vector<1x128xf32>
    %42 = arith.subf %30, %18 : vector<1x128xf32>
    %43 = math.absf %42 : vector<1x128xf32>
    %44 = arith.mulf %43, %41 : vector<1x128xf32>
    %45 = vector.shape_cast %44 : vector<1x128xf32> to vector<1x1x128xf32>
    %cst_7 = arith.constant dense<0.000000e+00> : vector<1xf32>
    %46 = vector.multi_reduction <add>, %45, %cst_7 [1, 2] : vector<1x1x128xf32> to vector<1xf32>
    %47 = vector.shape_cast %46 : vector<1xf32> to vector<1x1x1xf32>
    %48 = vector.extract %47[0, 0, 0] : f32 from vector<1x1x1xf32>
    %49 = tpu.iota {dimensions = array<i32: 2>} : vector<1x1x128xi32>
    %c0_8 = arith.constant 0 : index
    %c0_9 = arith.constant 0 : index
    %c0_10 = arith.constant 0 : index
    %50 = vector.load %arg5[%c0_8, %c0_9, %c0_10] : memref<1x1x128xf32, #tpu.memory_space<vmem>>, vector<1x1x128xf32>
    %c0_i32_11 = arith.constant 0 : i32
    %51 = vector.broadcast %c0_i32_11 : i32 to vector<1x1x128xi32>
    %52 = arith.cmpi eq, %49, %51 : vector<1x1x128xi32>
    %cst_12 = arith.constant 0.000000e+00 : f32
    %53 = vector.broadcast %48 : f32 to vector<1x1x128xf32>
    %54 = vector.broadcast %cst_12 : f32 to vector<1x1x128xf32>
    %55 = arith.select %52, %53, %54 : vector<1x1x128xi1>, vector<1x1x128xf32>
    %56 = arith.addf %50, %55 : vector<1x1x128xf32>
    %c0_13 = arith.constant 0 : index
    %c0_14 = arith.constant 0 : index
    %c0_15 = arith.constant 0 : index
    %57 = vector.load %arg5[%c0_13, %c0_14, %c0_15] : memref<1x1x128xf32, #tpu.memory_space<vmem>>, vector<1x1x128xf32>
    tpu.vector_store %arg5[%c0_13, %c0_14, %c0_15], %56 {strides = array<i32>} : memref<1x1x128xf32, #tpu.memory_space<vmem>>, vector<1x1x128xf32>,
    return
  }
  func.func @transform_0(%arg0: i32, %arg1: i32) -> i32 {
    %c0_i32 = arith.constant 0 : i32
    %c0_i32_0 = arith.constant 0 : i32
    return %c0_i32 : i32
  }
  func.func @transform_1(%arg0: i32, %arg1: i32) -> (i32, i32, i32) {
    %c0_i32 = arith.constant 0 : i32
    %c0_i32_0 = arith.constant 0 : i32
    return %arg0, %c0_i32, %arg1 : i32, i32, i32
  }
  func.func @transform_2(%arg0: i32, %arg1: i32) -> (i32, i32, i32) {
    %c0_i32 = arith.constant 0 : i32
    %c0_i32_0 = arith.constant 0 : i32
    return %arg0, %c0_i32, %arg1 : i32, i32, i32
  }
  func.func @transform_3(%arg0: i32, %arg1: i32) -> (i32, i32, i32) {
    %c0_i32 = arith.constant 0 : i32
    %c0_i32_0 = arith.constant 0 : i32
    %c0_i32_1 = arith.constant 0 : i32
    return %arg0, %c0_i32, %c0_i32_0 : i32, i32, i32
  }
}

</mosaic_0001>

<llo_original>
// kernel: _forward_impl.7
$region0: #{_forward_impl.7}
  #allocation0 [shape = 'u32[]', space=smem, size = 0x4, offset = 0x4, fixed_abs, tag = 'smem constant byte address 0x4 - core index']
  #allocation1 [shape = 'u32[72,128]{1,0:T(1,128)}', space=vmem, size = 0x9000, scoped, tag = 'internal scratch']
  #allocation2 [shape = 'f32[1]{0:T(128)S(6)}', space=smem, size = 0x200, scoped, tag = 'scoped memory for _forward_impl.7']
  %s0 = inlined_call_operand.vmem [shape: f32[2,16,16], index: 0, kind: input, shape index: {}]
  %s1 = inlined_call_operand.<no memory space> [shape: f32[1], index: 1, kind: input, shape index: {}]
  %s2 = inlined_call_operand.vmem [shape: f32[2,16,16], index: 2, kind: input, shape index: {}, may-alias: {2,4}]
  %s3 = inlined_call_operand.vmem [shape: f32[2,16,16], index: 3, kind: input, shape index: {}, may-alias: {3,5}]
  %s4 = inlined_call_operand.vmem [shape: f32[2,16,16], index: 4, kind: output, shape index: {0}, may-alias: {2,4}]
  %s5 = inlined_call_operand.vmem [shape: f32[2,16,16], index: 5, kind: output, shape index: {1}, may-alias: {3,5}]
  %s6 = inlined_call_operand.vmem [shape: f32[2,1,128], index: 6, kind: output, shape index: {2}]
  %7 = xla_tuple %s4, %s5, %s6
  %s8 = sld [smem:[#allocation0]]
  $region65: #{_forward_impl.7} parent=0
    _
  %s10 = ssub.s32 1, %s8
  %s11 = scalar_select 0, %s10, %s8
  %12 = sst [smem:[#allocation2]] %s1
  loop: start=0, step=1, limit=4
  $region2: #{_forward_impl.7} parent=0 // loop_pre_header
    _
  $region3: #{_forward_impl.7} parent=0 // loop_header
    %s14 = sphi 0, %s18
    %p15 = scmp.ge.s32.totalorder %s14, 4
    %s24 = sphi 0, %s26
    %s27 = sphi 0, %s24
    %s28 = sphi 0, %s27
    %s44 = sphi 0, %s28
    %s48 = sphi 0, %s48
    %s50 = sphi 0, %s48
    %s51 = sphi 0, %s50
    %s65 = sphi 0, %s51
    %s71 = sphi 0, %s73
    %s74 = sphi 0, %s71
    %s75 = sphi 0, %s74
    %s91 = sphi 0, %s75
    %s97 = sphi 0, %s99
    %s100 = sphi 0, %s97
    %s101 = sphi 0, %s100
    %s117 = sphi 0, %s101
    %s123 = sphi 0, %s125
    %s126 = sphi 0, %s123
    %s127 = sphi 0, %s126
    %s143 = sphi 0, %s127
    %s149 = sphi 0, %s151
    %s152 = sphi 0, %s149
    %s153 = sphi 0, %s152
    %s169 = sphi 0, %s153
    %s175 = sphi 0, %s177
    %s178 = sphi 0, %s175
    %s179 = sphi 0, %s178
    %s195 = sphi 0, %s179
  $region4: #{_forward_impl.7} parent=0 // loop_header_branch
    %17 = sbr.rel (%p15) target = $region8
  $region5: #{_forward_impl.7} parent=0 // loop_body
    %s19 = ssub.s32 %s14, 1
    %s20 = ssub.s32 %s14, 2
    %s21 = sadd.s32 %s14, 1
    %s22 = ssub.s32 %s14, %s21
    %p23 = scmp.eq.s32.totalorder %s22, 0
    %s25 = sadd.s32 %s24, 1
    %s26 = scalar_select %p23, %s24, %s25
    %p29 = pneg %p23
    %p30 = scmp.eq.s32.totalorder %s14, 1
    %p31 = por %p29, %p30
    %p32 = scmp.ne.s32.totalorder %s24, %s27
    %p33 = scmp.eq.s32.totalorder %s14, 0
    %p34 = por %p32, %p33
    %p35 = scmp.ne.s32.totalorder %s24, %s27
    %p36 = scmp.eq.s32.totalorder %s19, 1
    %p37 = por %p35, %p36
    %p38 = scmp.ne.s32.totalorder %s27, %s28
    %p39 = scmp.eq.s32.totalorder %s19, 0
    %p40 = por %p38, %p39
    %p41 = scmp.ne.s32.totalorder %s27, %s28
    %p42 = scmp.eq.s32.totalorder %s20, 1
    %p43 = por %p41, %p42
    %p45 = scmp.ne.s32.totalorder %s28, %s44
    %p46 = scmp.eq.s32.totalorder %s20, 0
    %p47 = por %p45, %p46
    %s49 = sadd.s32 %s48, 1
    %p52 = scmp.eq.s32.totalorder %s14, 1
    %p53 = scmp.ne.s32.totalorder %s48, %s50
    %p54 = scmp.eq.s32.totalorder %s14, 0
    %p55 = por %p53, %p54
    %p56 = scmp.ne.s32.totalorder %s48, %s50
    %p57 = scmp.eq.s32.totalorder %s19, 1
    %p58 = por %p56, %p57
    %p59 = scmp.ne.s32.totalorder %s50, %s51
    %p60 = scmp.eq.s32.totalorder %s19, 0
    %p61 = por %p59, %p60
    %p62 = scmp.ne.s32.totalorder %s50, %s51
    %p63 = scmp.eq.s32.totalorder %s20, 1
    %p64 = por %p62, %p63
    %p66 = scmp.ne.s32.totalorder %s51, %s65
    %p67 = scmp.eq.s32.totalorder %s20, 0
    %p68 = por %p66, %p67
    %s69 = ssub.s32 %s14, %s21
    %p70 = scmp.eq.s32.totalorder %s69, 0
    %s72 = sadd.s32 %s71, 1
    %s73 = scalar_select %p70, %s71, %s72
    %p76 = pneg %p70
    %p77 = scmp.eq.s32.totalorder %s14, 1
    %p78 = por %p76, %p77
    %p79 = scmp.ne.s32.totalorder %s71, %s74
    %p80 = scmp.eq.s32.totalorder %s14, 0
    %p81 = por %p79, %p80
    %p82 = scmp.ne.s32.totalorder %s71, %s74
    %p83 = scmp.eq.s32.totalorder %s19, 1
    %p84 = por %p82, %p83
    %p85 = scmp.ne.s32.totalorder %s74, %s75
    %p86 = scmp.eq.s32.totalorder %s19, 0
    %p87 = por %p85, %p86
    %p88 = scmp.ne.s32.totalorder %s74, %s75
    %p89 = scmp.eq.s32.totalorder %s20, 1
    %p90 = por %p88, %p89
    %p92 = scmp.ne.s32.totalorder %s75, %s91
    %p93 = scmp.eq.s32.totalorder %s20, 0
    %p94 = por %p92, %p93
    %s95 = ssub.s32 %s14, %s21
    %p96 = scmp.eq.s32.totalorder %s95, 0
    %s98 = sadd.s32 %s97, 1
    %s99 = scalar_select %p96, %s97, %s98
    %p102 = pneg %p96
    %p103 = scmp.eq.s32.totalorder %s14, 1
    %p104 = por %p102, %p103
    %p105 = scmp.ne.s32.totalorder %s97, %s100
    %p106 = scmp.eq.s32.totalorder %s14, 0
    %p107 = por %p105, %p106
    %p108 = scmp.ne.s32.totalorder %s97, %s100
    %p109 = scmp.eq.s32.totalorder %s19, 1
    %p110 = por %p108, %p109
    %p111 = scmp.ne.s32.totalorder %s100, %s101
    %p112 = scmp.eq.s32.totalorder %s19, 0
    %p113 = por %p111, %p112
    %p114 = scmp.ne.s32.totalorder %s100, %s101
    %p115 = scmp.eq.s32.totalorder %s20, 1
    %p116 = por %p114, %p115
    %p118 = scmp.ne.s32.totalorder %s101, %s117
    %p119 = scmp.eq.s32.totalorder %s20, 0
    %p120 = por %p118, %p119
    %s121 = ssub.s32 %s14, %s21
    %p122 = scmp.eq.s32.totalorder %s121, 0
    %s124 = sadd.s32 %s123, 1
    %s125 = scalar_select %p122, %s123, %s124
    %p128 = pneg %p122
    %p129 = scmp.eq.s32.totalorder %s14, 1
    %p130 = por %p128, %p129
    %p131 = scmp.ne.s32.totalorder %s123, %s126
    %p132 = scmp.eq.s32.totalorder %s14, 0
    %p133 = por %p131, %p132
    %p134 = scmp.ne.s32.totalorder %s123, %s126
    %p135 = scmp.eq.s32.totalorder %s19, 1
    %p136 = por %p134, %p135
    %p137 = scmp.ne.s32.totalorder %s126, %s127
    %p138 = scmp.eq.s32.totalorder %s19, 0
    %p139 = por %p137, %p138
    %p140 = scmp.ne.s32.totalorder %s126, %s127
    %p141 = scmp.eq.s32.totalorder %s20, 1
    %p142 = por %p140, %p141
    %p144 = scmp.ne.s32.totalorder %s127, %s143
    %p145 = scmp.eq.s32.totalorder %s20, 0
    %p146 = por %p144, %p145
    %s147 = ssub.s32 %s14, %s21
    %p148 = scmp.eq.s32.totalorder %s147, 0
    %s150 = sadd.s32 %s149, 1
    %s151 = scalar_select %p148, %s149, %s150
    %p154 = pneg %p148
    %p155 = scmp.eq.s32.totalorder %s14, 1
    %p156 = por %p154, %p155
    %p157 = scmp.ne.s32.totalorder %s149, %s152
    %p158 = scmp.eq.s32.totalorder %s14, 0
    %p159 = por %p157, %p158
    %p160 = scmp.ne.s32.totalorder %s149, %s152
    %p161 = scmp.eq.s32.totalorder %s19, 1
    %p162 = por %p160, %p161
    %p163 = scmp.ne.s32.totalorder %s152, %s153
    %p164 = scmp.eq.s32.totalorder %s19, 0
    %p165 = por %p163, %p164
    %p166 = scmp.ne.s32.totalorder %s152, %s153
    %p167 = scmp.eq.s32.totalorder %s20, 1
    %p168 = por %p166, %p167
    %p170 = scmp.ne.s32.totalorder %s153, %s169
    %p171 = scmp.eq.s32.totalorder %s20, 0
    %p172 = por %p170, %p171
    %s173 = ssub.s32 %s14, %s21
    %p174 = scmp.eq.s32.totalorder %s173, 0
    %s176 = sadd.s32 %s175, 1
    %s177 = scalar_select %p174, %s175, %s176
    %p180 = pneg %p174
    %p181 = scmp.eq.s32.totalorder %s14, 1
    %p182 = por %p180, %p181
    %p183 = scmp.ne.s32.totalorder %s175, %s178
    %p184 = scmp.eq.s32.totalorder %s14, 0
    %p185 = por %p183, %p184
    %p186 = scmp.ne.s32.totalorder %s175, %s178
    %p187 = scmp.eq.s32.totalorder %s19, 1
    %p188 = por %p186, %p187
    %p189 = scmp.ne.s32.totalorder %s178, %s179
    %p190 = scmp.eq.s32.totalorder %s19, 0
    %p191 = por %p189, %p190
    %p192 = scmp.ne.s32.totalorder %s178, %s179
    %p193 = scmp.eq.s32.totalorder %s20, 1
    %p194 = por %p192, %p193
    %p196 = scmp.ne.s32.totalorder %s179, %s195
    %p197 = scmp.eq.s32.totalorder %s20, 0
    %p198 = por %p196, %p197
    %p199 = scmp.le.s32.totalorder 1, %s14
    %p200 = scmp.lt.s32.totalorder %s14, 3
    %p201 = pnand %p199, %p200
    %p202 = pneg %p201
    // Predicated region
    $region9: #{_forward_impl.7} parent=5 // pred_check
      _
    $region10: #{_forward_impl.7} parent=5 // pred_check_branch
      %204 = sbr.rel (%p201) target = $region12
    $region11: #{_forward_impl.7} parent=5 // pred_region
      %s205 = ssub.s32 %s14, 1
      // Predicated region
      $region13: #{_forward_impl.7} parent=11 // pred_check
        %p206 = pneg %p61
      $region14: #{_forward_impl.7} parent=11 // pred_check_branch
        %208 = sbr.rel (%p206) target = $region16
      $region15: #{_forward_impl.7} parent=11 // pred_region
        _
      $region16: #{_forward_impl.7} parent=11 // pred_fallthru
        _
    $region12: #{_forward_impl.7} parent=5 // pred_fallthru
      _
    %p209 = scmp.lt.s32.totalorder %s14, 2
    // Predicated region
    $region17: #{_forward_impl.7} parent=5 // pred_check
      %p210 = pneg %p209
    $region18: #{_forward_impl.7} parent=5 // pred_check_branch
      %212 = sbr.rel (%p210) target = $region20
    $region19: #{_forward_impl.7} parent=5 // pred_region
      // Predicated region
      $region21: #{_forward_impl.7} parent=19 // pred_check
        %p213 = pneg %p34
      $region22: #{_forward_impl.7} parent=19 // pred_check_branch
        %215 = sbr.rel (%p213) target = $region24
      $region23: #{_forward_impl.7} parent=19 // pred_region
        %p216 = scmp.lt.s32.totalorder %s14, 1
        %s217 = scalar_select %p216, %s14, 1
        %s218 = smul.addr %s217, 2
        %s219 = smul.addr %s218, 8
        %s220 = scalar_lea.vmem %s0, %s219
      $region24: #{_forward_impl.7} parent=19 // pred_fallthru
        _
      // Predicated region
      $region25: #{_forward_impl.7} parent=19 // pred_check
        %p221 = pneg %p81
      $region26: #{_forward_impl.7} parent=19 // pred_check_branch
        %223 = sbr.rel (%p221) target = $region28
      $region27: #{_forward_impl.7} parent=19 // pred_region
        %p224 = scmp.lt.s32.totalorder %s14, 1
        %s225 = scalar_select %p224, %s14, 1
        %s226 = smul.addr %s225, 2
        %s227 = smul.addr %s226, 8
        %s228 = scalar_lea.vmem %s2, %s227
      $region28: #{_forward_impl.7} parent=19 // pred_fallthru
        _
      // Predicated region
      $region29: #{_forward_impl.7} parent=19 // pred_check
        %p229 = pneg %p107
      $region30: #{_forward_impl.7} parent=19 // pred_check_branch
        %231 = sbr.rel (%p229) target = $region32
      $region31: #{_forward_impl.7} parent=19 // pred_region
        %p232 = scmp.lt.s32.totalorder %s14, 1
        %s233 = scalar_select %p232, %s14, 1
        %s234 = smul.addr %s233, 2
        %s235 = smul.addr %s234, 8
        %s236 = scalar_lea.vmem %s3, %s235
      $region32: #{_forward_impl.7} parent=19 // pred_fallthru
        _
    $region20: #{_forward_impl.7} parent=5 // pred_fallthru
      _
    %p237 = scmp.le.s32.totalorder 1, %s14
    %p238 = scmp.lt.s32.totalorder %s14, 3
    %p239 = pnand %p237, %p238
    %p240 = pneg %p239
    // Predicated region
    $region33: #{_forward_impl.7} parent=5 // pred_check
      _
    $region34: #{_forward_impl.7} parent=5 // pred_check_branch
      %242 = sbr.rel (%p239) target = $region36
    $region35: #{_forward_impl.7} parent=5 // pred_region
      %s243 = ssub.s32 %s14, 1
      %p244 = scmp.lt.s32.totalorder %s19, 1
      %s245 = scalar_select %p244, %s19, 1
      %s246 = smul.addr %s245, 2
      %s247 = smul.addr %s246, 8
      %s248 = scalar_lea.vmem %s0, %s247
      %p249 = pneg %p40
      %p250 = pneg %p37
      %p251 = pneg %p61
      %p252 = pneg %p58
      %p253 = scmp.lt.s32.totalorder %s19, 1
      %s254 = scalar_select %p253, %s19, 1
      %s255 = smul.addr %s254, 2
      %s256 = smul.addr %s255, 8
      %s257 = scalar_lea.vmem %s2, %s256
      %p258 = pneg %p87
      %p259 = pneg %p84
      %p260 = scmp.lt.s32.totalorder %s19, 1
      %s261 = scalar_select %p260, %s19, 1
      %s262 = smul.addr %s261, 2
      %s263 = smul.addr %s262, 8
      %s264 = scalar_lea.vmem %s3, %s263
      %p265 = pneg %p113
      %p266 = pneg %p110
      %p267 = pneg %p139
      %p268 = pneg %p136
      %p269 = scmp.lt.s32.totalorder %s19, 1
      %s270 = scalar_select %p269, %s19, 1
      %s271 = smul.addr %s270, 2
      %s272 = smul.addr %s271, 8
      %s273 = scalar_lea.vmem %s4, %s272
      %p274 = pneg %p165
      %p275 = pneg %p162
      %p276 = scmp.lt.s32.totalorder %s19, 1
      %s277 = scalar_select %p276, %s19, 1
      %s278 = smul.addr %s277, 2
      %s279 = smul.addr %s278, 8
      %s280 = scalar_lea.vmem %s5, %s279
      %p281 = pneg %p191
      %p282 = pneg %p188
      %p283 = scmp.lt.s32.totalorder %s19, 1
      %s284 = scalar_select %p283, %s19, 1
      %s285 = scalar_lea.vmem %s6, %s284
      %p286 = scmp.lt.s32.totalorder %s19, 1
      %s287 = scalar_select %p286, %s19, 1
      %s288 = smul.addr %s287, 2
      %s289 = smul.addr %s288, 8
      %s290 = scalar_lea.vmem %s0, %s289
      %p291 = scmp.lt.s32.totalorder %s19, 1
      %s292 = scalar_select %p291, %s19, 1
      %s293 = smul.addr %s292, 2
      %s294 = smul.addr %s293, 8
      %s295 = scalar_lea.vmem %s2, %s294
      %p296 = scmp.lt.s32.totalorder %s19, 1
      %s297 = scalar_select %p296, %s19, 1
      %s298 = smul.addr %s297, 2
      %s299 = smul.addr %s298, 8
      %s300 = scalar_lea.vmem %s3, %s299
      %p301 = scmp.lt.s32.totalorder %s19, 1
      %s302 = scalar_select %p301, %s19, 1
      %s303 = smul.addr %s302, 2
      %s304 = smul.addr %s303, 8
      %s305 = scalar_lea.vmem %s4, %s304
      %p306 = scmp.lt.s32.totalorder %s19, 1
      %s307 = scalar_select %p306, %s19, 1
      %s308 = smul.addr %s307, 2
      %s309 = smul.addr %s308, 8
      %s310 = scalar_lea.vmem %s5, %s309
      %p311 = scmp.lt.s32.totalorder %s19, 1
      %s312 = scalar_select %p311, %s19, 1
      %s313 = scalar_lea.vmem %s6, %s312
      %s314 = sld [smem:[#allocation2]]
      %v315 = vld [vmem:[%s290] sm:$0xff]
      %v316 = vld [vmem:[%s290 + $0x8] sm:$0xff]
      %v317 = vstv %s314
      %vm318 = vcmp.ge.f32.partialorder %v315, %v317
      %vm319 = vcmp.ge.f32.partialorder %v316, %v317
      %v320 = vsel %vm318, 1.0, 0.0
      %v321 = vsel %vm319, 1.0, 0.0
      %v323 = vrot.slane %v321, 7
      %vm326 = vcmask 1040384
      %v327 = vrot.slane %v320, 7
      %v328 = vsel %vm326, %v327, %v323
      %v331 = vsel %vm326, %v323, %v327
      %vm332 = vcmask 1046528
      %v333 = vrot.slane %v320, 1
      %v334 = vrot.slane %v321, 1
      %v335 = vsel %vm332, %v333, %v334
      %v339 = vsel %vm332, %v334, %v333
      %v340 = vmax.f32 %v331, %v335
      %v341 = vmax.f32 %v328, %v339
      %v342 = vmax.f32 %v320, %v340
      %v343 = vmax.f32 %v321, %v341
      %346 = vrot.lane.b32.xlu0 %v342, 113
      %v347 = vpop.permute.xlu0 %346
      %348 = vrot.lane.b32.xlu0 %v343, 113
      %v349 = vpop.permute.xlu0 %348
      %352 = vrot.lane.b32.xlu0 %v342, 1
      %v353 = vpop.permute.xlu0 %352
      %354 = vrot.lane.b32.xlu0 %v343, 1
      %v355 = vpop.permute.xlu0 %354
      %vm358 = vcmask 7168
      %v359 = vsel %vm358, %v347, %v353
      %v360 = vsel %vm358, %v349, %v355
      %361 = vrot.lane.b32.xlu0 %v342, 127
      %v362 = vpop.permute.xlu0 %361
      %363 = vrot.lane.b32.xlu0 %v343, 127
      %v364 = vpop.permute.xlu0 %363
      %367 = vrot.lane.b32.xlu0 %v342, 15
      %v368 = vpop.permute.xlu0 %367
      %369 = vrot.lane.b32.xlu0 %v343, 15
      %v370 = vpop.permute.xlu0 %369
      %vm373 = vcmask 121856
      %v374 = vsel %vm373, %v362, %v368
      %v375 = vsel %vm373, %v364, %v370
      %v376 = vmax.f32 %v359, %v374
      %v377 = vmax.f32 %v360, %v375
      %v378 = vmax.f32 %v342, %v376
      %v379 = vmax.f32 %v343, %v377
      %vm380 = vcmp.gt.f32.partialorder %v378, 0.0
      %vm381 = vcmp.gt.f32.partialorder %v379, 0.0
      %v382 = vld [vmem:[%s295] sm:$0xff]
      %v383 = vld [vmem:[%s295 + $0x8] sm:$0xff]
      %v384 = vsel %vm380, 0.0, %v382
      %v385 = vsel %vm381, 0.0, %v383
      %v386 = vld [vmem:[%s300] sm:$0xff]
      %v387 = vld [vmem:[%s300 + $0x8] sm:$0xff]
      %v388 = vsel %vm380, 0.0, %v386
      %v389 = vsel %vm381, 0.0, %v387
      %vm390 = vcmask 130048
      %391 = vst.msk [vmem:[%s305] sm:$0xff] %vm390, %v384
      %392 = vst.msk [vmem:[%s305 + $0x8] sm:$0xff] %vm390, %v385
      %393 = vst.msk [vmem:[%s310] sm:$0xff] %vm390, %v388
      %394 = vst.msk [vmem:[%s310 + $0x8] sm:$0xff] %vm390, %v389
      %v395 = vlaneseq
      %v396 = vand.u32 %v395, 127
      %vm397 = vcmp.eq.s32.totalorder %v396, 0
      %v398 = vsel %vm390, %v384, -inf
      %v399 = vsel %vm390, %v385, -inf
      %v400 = vmax.f32 %v398, %v399
      %401 = vmax.xlane.f32.xlu0 %v400
      %v402 = vpop.xlane.xlu0 %401
      %v403 = vrot.slane %v402, 4
      %v404 = vmax.f32 %v402, %v403
      %v405 = vrot.slane %v404, 2
      %v406 = vmax.f32 %v404, %v405
      %v407 = vrot.slane %v406, 1
      %v408 = vmax.f32 %v406, %v407
      %s409 = vtos %v408
      %v410 = vstv %s409
      %v411 = vsel %vm397, %v410, 0.0
      %vm412 = vcmp.eq.s32.totalorder %v396, 1
      %v413 = vsel %vm390, %v388, -inf
      %v414 = vsel %vm390, %v389, -inf
      %v415 = vmax.f32 %v413, %v414
      %416 = vmax.xlane.f32.xlu0 %v415
      %v417 = vpop.xlane.xlu0 %416
      %v418 = vrot.slane %v417, 4
      %v419 = vmax.f32 %v417, %v418
      %v420 = vrot.slane %v419, 2
      %v421 = vmax.f32 %v419, %v420
      %v422 = vrot.slane %v421, 1
      %v423 = vmax.f32 %v421, %v422
      %s424 = vtos %v423
      %v425 = vstv %s424
      %v426 = vsel %vm412, %v425, 0.0
      %v427 = vadd.f32 %v411, %v426
      %428 = vst [vmem:[%s313] sm:$0x1] %v427
      %p429 = scmp.lt.s32.totalorder %s19, 1
      %s430 = scalar_select %p429, %s19, 1
      %s431 = smul.addr %s430, 2
      %s432 = smul.addr %s431, 8
      %s433 = scalar_lea.vmem %s4, %s432
      %p434 = scmp.lt.s32.totalorder %s19, 1
      %s435 = scalar_select %p434, %s19, 1
      %s436 = smul.addr %s435, 2
      %s437 = smul.addr %s436, 8
      %s438 = scalar_lea.vmem %s5, %s437
      %p439 = scmp.lt.s32.totalorder %s19, 1
      %s440 = scalar_select %p439, %s19, 1
      %s441 = scalar_lea.vmem %s6, %s440
      // Predicated region
      $region37: #{_forward_impl.7} parent=35 // pred_check
        %p442 = pneg %p136
      $region38: #{_forward_impl.7} parent=35 // pred_check_branch
        %444 = sbr.rel (%p442) target = $region40
      $region39: #{_forward_impl.7} parent=35 // pred_region
        _
      $region40: #{_forward_impl.7} parent=35 // pred_fallthru
        _
      // Predicated region
      $region41: #{_forward_impl.7} parent=35 // pred_check
        %p445 = pneg %p162
      $region42: #{_forward_impl.7} parent=35 // pred_check_branch
        %447 = sbr.rel (%p445) target = $region44
      $region43: #{_forward_impl.7} parent=35 // pred_region
        _
      $region44: #{_forward_impl.7} parent=35 // pred_fallthru
        _
      // Predicated region
      $region45: #{_forward_impl.7} parent=35 // pred_check
        %p448 = pneg %p188
      $region46: #{_forward_impl.7} parent=35 // pred_check_branch
        %450 = sbr.rel (%p448) target = $region48
      $region47: #{_forward_impl.7} parent=35 // pred_region
        _
      $region48: #{_forward_impl.7} parent=35 // pred_fallthru
        _
    $region36: #{_forward_impl.7} parent=5 // pred_fallthru
      _
    %p451 = scmp.le.s32.totalorder 2, %s14
    // Predicated region
    $region49: #{_forward_impl.7} parent=5 // pred_check
      %p452 = pneg %p451
    $region50: #{_forward_impl.7} parent=5 // pred_check_branch
      %454 = sbr.rel (%p452) target = $region52
    $region51: #{_forward_impl.7} parent=5 // pred_region
      %s455 = ssub.s32 %s14, 2
      // Predicated region
      $region53: #{_forward_impl.7} parent=51 // pred_check
        %p456 = pneg %p142
      $region54: #{_forward_impl.7} parent=51 // pred_check_branch
        %458 = sbr.rel (%p456) target = $region56
      $region55: #{_forward_impl.7} parent=51 // pred_region
        %p459 = scmp.lt.s32.totalorder %s20, 1
        %s460 = scalar_select %p459, %s20, 1
        %s461 = smul.addr %s460, 2
        %s462 = smul.addr %s461, 8
        %s463 = scalar_lea.vmem %s4, %s462
      $region56: #{_forward_impl.7} parent=51 // pred_fallthru
        _
      // Predicated region
      $region57: #{_forward_impl.7} parent=51 // pred_check
        %p464 = pneg %p168
      $region58: #{_forward_impl.7} parent=51 // pred_check_branch
        %466 = sbr.rel (%p464) target = $region60
      $region59: #{_forward_impl.7} parent=51 // pred_region
        %p467 = scmp.lt.s32.totalorder %s20, 1
        %s468 = scalar_select %p467, %s20, 1
        %s469 = smul.addr %s468, 2
        %s470 = smul.addr %s469, 8
        %s471 = scalar_lea.vmem %s5, %s470
      $region60: #{_forward_impl.7} parent=51 // pred_fallthru
        _
      // Predicated region
      $region61: #{_forward_impl.7} parent=51 // pred_check
        %p472 = pneg %p194
      $region62: #{_forward_impl.7} parent=51 // pred_check_branch
        %474 = sbr.rel (%p472) target = $region64
      $region63: #{_forward_impl.7} parent=51 // pred_region
        %p475 = scmp.lt.s32.totalorder %s20, 1
        %s476 = scalar_select %p475, %s20, 1
        %s477 = scalar_lea.vmem %s6, %s476
      $region64: #{_forward_impl.7} parent=51 // pred_fallthru
        _
    $region52: #{_forward_impl.7} parent=5 // pred_fallthru
      _
  $region6: #{_forward_impl.7} parent=0 // loop_footer
    %s18 = sadd.s32 1, %s14
  $region7: #{_forward_impl.7} parent=0 // loop_footer_branch
    %13 = sbr.rel target = $region3
  $region8: #{_forward_impl.7} parent=0 // loop_exit
    _

// kernel: _forward_impl.6
$region0: #{_forward_impl.6}
  #allocation0 [shape = 'u32[]', space=smem, size = 0x4, offset = 0x4, fixed_abs, tag = 'smem constant byte address 0x4 - core index']
  #allocation1 [shape = 'u32[72,128]{1,0:T(1,128)}', space=vmem, size = 0x9000, scoped, tag = 'internal scratch']
  %s0 = inlined_call_operand.hbm [shape: f32[2,3,16,16], index: 0, kind: input, shape index: {}]
  %s1 = inlined_call_operand.hbm [shape: f32[2,1,16,16], index: 1, kind: input, shape index: {}]
  %s2 = inlined_call_operand.vmem [shape: f32[2,16,16], index: 2, kind: output, shape index: {0}]
  %s3 = inlined_call_operand.vmem [shape: f32[2,16,16], index: 3, kind: output, shape index: {1}]
  %s4 = inlined_call_operand.vmem [shape: f32[2,16,16], index: 4, kind: output, shape index: {2}]
  %s5 = inlined_call_operand.vmem [shape: f32[2,16,16], index: 5, kind: output, shape index: {3}]
  %s6 = inlined_call_operand.vmem [shape: f32[2,1,128], index: 6, kind: output, shape index: {4}]
  %7 = xla_tuple %s2, %s3, %s4, %s5, %s6
  %s8 = sld [smem:[#allocation0]]
  $region81: #{_forward_impl.6} parent=0
    _
  %s10 = ssub.s32 1, %s8
  %s11 = scalar_select 0, %s10, %s8
  $region1: #{_forward_impl.6} parent=0
    #allocation2 [shape = 'u8[16384]{0}', space=vmem, size = 0x4000, scoped, tag = 'input window, operand 0']
    #allocation3 [shape = 's32[2]{0}', space=sflag, size = 0x8, scoped, tag = 'scoped memory for _forward_impl.6']
    #allocation4 [shape = 'u8[16384]{0}', space=vmem, size = 0x4000, scoped, tag = 'input window, operand 1']
    #allocation5 [shape = 's32[2]{0}', space=sflag, size = 0x8, scoped, tag = 'scoped memory for _forward_impl.6']
    %12 = vsyncpa [#allocation3], 0
    %s13 = scalar_lea.sflag [#allocation3], 1
    %14 = vsyncpa %s13, 0
    %15 = vsyncpa [#allocation5], 0
    %s16 = scalar_lea.sflag [#allocation5], 1
    %17 = vsyncpa %s16, 0
    loop: start=0, step=1, limit=4
    $region2: #{_forward_impl.6} parent=1 // loop_pre_header
      _
    $region3: #{_forward_impl.6} parent=1 // loop_header
      %s19 = sphi 0, %s23
      %p20 = scmp.ge.s32.totalorder %s19, 4
      %s29 = sphi 0, %s31
      %s32 = sphi 0, %s29
      %s33 = sphi 0, %s32
      %s49 = sphi 0, %s33
      %s55 = sphi 0, %s57
      %s58 = sphi 0, %s55
      %s59 = sphi 0, %s58
      %s75 = sphi 0, %s59
      %s81 = sphi 0, %s83
      %s84 = sphi 0, %s81
      %s85 = sphi 0, %s84
      %s101 = sphi 0, %s85
      %s107 = sphi 0, %s109
      %s110 = sphi 0, %s107
      %s111 = sphi 0, %s110
      %s127 = sphi 0, %s111
      %s133 = sphi 0, %s135
      %s136 = sphi 0, %s133
      %s137 = sphi 0, %s136
      %s153 = sphi 0, %s137
      %s159 = sphi 0, %s161
      %s162 = sphi 0, %s159
      %s163 = sphi 0, %s162
      %s179 = sphi 0, %s163
      %s185 = sphi 0, %s187
      %s188 = sphi 0, %s185
      %s189 = sphi 0, %s188
      %s205 = sphi 0, %s189
    $region4: #{_forward_impl.6} parent=1 // loop_header_branch
      %22 = sbr.rel (%p20) target = $region8
    $region5: #{_forward_impl.6} parent=1 // loop_body
      %s24 = ssub.s32 %s19, 1
      %s25 = ssub.s32 %s19, 2
      %s26 = sadd.s32 %s19, 1
      %s27 = ssub.s32 %s19, %s26
      %p28 = scmp.eq.s32.totalorder %s27, 0
      %s30 = sadd.s32 %s29, 1
      %s31 = scalar_select %p28, %s29, %s30
      %p34 = pneg %p28
      %p35 = scmp.eq.s32.totalorder %s19, 1
      %p36 = por %p34, %p35
      %p37 = scmp.ne.s32.totalorder %s29, %s32
      %p38 = scmp.eq.s32.totalorder %s19, 0
      %p39 = por %p37, %p38
      %p40 = scmp.ne.s32.totalorder %s29, %s32
      %p41 = scmp.eq.s32.totalorder %s24, 1
      %p42 = por %p40, %p41
      %p43 = scmp.ne.s32.totalorder %s32, %s33
      %p44 = scmp.eq.s32.totalorder %s24, 0
      %p45 = por %p43, %p44
      %p46 = scmp.ne.s32.totalorder %s32, %s33
      %p47 = scmp.eq.s32.totalorder %s25, 1
      %p48 = por %p46, %p47
      %p50 = scmp.ne.s32.totalorder %s33, %s49
      %p51 = scmp.eq.s32.totalorder %s25, 0
      %p52 = por %p50, %p51
      %s53 = ssub.s32 %s19, %s26
      %p54 = scmp.eq.s32.totalorder %s53, 0
      %s56 = sadd.s32 %s55, 1
      %s57 = scalar_select %p54, %s55, %s56
      %p60 = pneg %p54
      %p61 = scmp.eq.s32.totalorder %s19, 1
      %p62 = por %p60, %p61
      %p63 = scmp.ne.s32.totalorder %s55, %s58
      %p64 = scmp.eq.s32.totalorder %s19, 0
      %p65 = por %p63, %p64
      %p66 = scmp.ne.s32.totalorder %s55, %s58
      %p67 = scmp.eq.s32.totalorder %s24, 1
      %p68 = por %p66, %p67
      %p69 = scmp.ne.s32.totalorder %s58, %s59
      %p70 = scmp.eq.s32.totalorder %s24, 0
      %p71 = por %p69, %p70
      %p72 = scmp.ne.s32.totalorder %s58, %s59
      %p73 = scmp.eq.s32.totalorder %s25, 1
      %p74 = por %p72, %p73
      %p76 = scmp.ne.s32.totalorder %s59, %s75
      %p77 = scmp.eq.s32.totalorder %s25, 0
      %p78 = por %p76, %p77
      %s79 = ssub.s32 %s19, %s26
      %p80 = scmp.eq.s32.totalorder %s79, 0
      %s82 = sadd.s32 %s81, 1
      %s83 = scalar_select %p80, %s81, %s82
      %p86 = pneg %p80
      %p87 = scmp.eq.s32.totalorder %s19, 1
      %p88 = por %p86, %p87
      %p89 = scmp.ne.s32.totalorder %s81, %s84
      %p90 = scmp.eq.s32.totalorder %s19, 0
      %p91 = por %p89, %p90
      %p92 = scmp.ne.s32.totalorder %s81, %s84
      %p93 = scmp.eq.s32.totalorder %s24, 1
      %p94 = por %p92, %p93
      %p95 = scmp.ne.s32.totalorder %s84, %s85
      %p96 = scmp.eq.s32.totalorder %s24, 0
      %p97 = por %p95, %p96
      %p98 = scmp.ne.s32.totalorder %s84, %s85
      %p99 = scmp.eq.s32.totalorder %s25, 1
      %p100 = por %p98, %p99
      %p102 = scmp.ne.s32.totalorder %s85, %s101
      %p103 = scmp.eq.s32.totalorder %s25, 0
      %p104 = por %p102, %p103
      %s105 = ssub.s32 %s19, %s26
      %p106 = scmp.eq.s32.totalorder %s105, 0
      %s108 = sadd.s32 %s107, 1
      %s109 = scalar_select %p106, %s107, %s108
      %p112 = pneg %p106
      %p113 = scmp.eq.s32.totalorder %s19, 1
      %p114 = por %p112, %p113
      %p115 = scmp.ne.s32.totalorder %s107, %s110
      %p116 = scmp.eq.s32.totalorder %s19, 0
      %p117 = por %p115, %p116
      %p118 = scmp.ne.s32.totalorder %s107, %s110
      %p119 = scmp.eq.s32.totalorder %s24, 1
      %p120 = por %p118, %p119
      %p121 = scmp.ne.s32.totalorder %s110, %s111
      %p122 = scmp.eq.s32.totalorder %s24, 0
      %p123 = por %p121, %p122
      %p124 = scmp.ne.s32.totalorder %s110, %s111
      %p125 = scmp.eq.s32.totalorder %s25, 1
      %p126 = por %p124, %p125
      %p128 = scmp.ne.s32.totalorder %s111, %s127
      %p129 = scmp.eq.s32.totalorder %s25, 0
      %p130 = por %p128, %p129
      %s131 = ssub.s32 %s19, %s26
      %p132 = scmp.eq.s32.totalorder %s131, 0
      %s134 = sadd.s32 %s133, 1
      %s135 = scalar_select %p132, %s133, %s134
      %p138 = pneg %p132
      %p139 = scmp.eq.s32.totalorder %s19, 1
      %p140 = por %p138, %p139
      %p141 = scmp.ne.s32.totalorder %s133, %s136
      %p142 = scmp.eq.s32.totalorder %s19, 0
      %p143 = por %p141, %p142
      %p144 = scmp.ne.s32.totalorder %s133, %s136
      %p145 = scmp.eq.s32.totalorder %s24, 1
      %p146 = por %p144, %p145
      %p147 = scmp.ne.s32.totalorder %s136, %s137
      %p148 = scmp.eq.s32.totalorder %s24, 0
      %p149 = por %p147, %p148
      %p150 = scmp.ne.s32.totalorder %s136, %s137
      %p151 = scmp.eq.s32.totalorder %s25, 1
      %p152 = por %p150, %p151
      %p154 = scmp.ne.s32.totalorder %s137, %s153
      %p155 = scmp.eq.s32.totalorder %s25, 0
      %p156 = por %p154, %p155
      %s157 = ssub.s32 %s19, %s26
      %p158 = scmp.eq.s32.totalorder %s157, 0
      %s160 = sadd.s32 %s159, 1
      %s161 = scalar_select %p158, %s159, %s160
      %p164 = pneg %p158
      %p165 = scmp.eq.s32.totalorder %s19, 1
      %p166 = por %p164, %p165
      %p167 = scmp.ne.s32.totalorder %s159, %s162
      %p168 = scmp.eq.s32.totalorder %s19, 0
      %p169 = por %p167, %p168
      %p170 = scmp.ne.s32.totalorder %s159, %s162
      %p171 = scmp.eq.s32.totalorder %s24, 1
      %p172 = por %p170, %p171
      %p173 = scmp.ne.s32.totalorder %s162, %s163
      %p174 = scmp.eq.s32.totalorder %s24, 0
      %p175 = por %p173, %p174
      %p176 = scmp.ne.s32.totalorder %s162, %s163
      %p177 = scmp.eq.s32.totalorder %s25, 1
      %p178 = por %p176, %p177
      %p180 = scmp.ne.s32.totalorder %s163, %s179
      %p181 = scmp.eq.s32.totalorder %s25, 0
      %p182 = por %p180, %p181
      %s183 = ssub.s32 %s19, %s26
      %p184 = scmp.eq.s32.totalorder %s183, 0
      %s186 = sadd.s32 %s185, 1
      %s187 = scalar_select %p184, %s185, %s186
      %p190 = pneg %p184
      %p191 = scmp.eq.s32.totalorder %s19, 1
      %p192 = por %p190, %p191
      %p193 = scmp.ne.s32.totalorder %s185, %s188
      %p194 = scmp.eq.s32.totalorder %s19, 0
      %p195 = por %p193, %p194
      %p196 = scmp.ne.s32.totalorder %s185, %s188
      %p197 = scmp.eq.s32.totalorder %s24, 1
      %p198 = por %p196, %p197
      %p199 = scmp.ne.s32.totalorder %s188, %s189
      %p200 = scmp.eq.s32.totalorder %s24, 0
      %p201 = por %p199, %p200
      %p202 = scmp.ne.s32.totalorder %s188, %s189
      %p203 = scmp.eq.s32.totalorder %s25, 1
      %p204 = por %p202, %p203
      %p206 = scmp.ne.s32.totalorder %s189, %s205
      %p207 = scmp.eq.s32.totalorder %s25, 0
      %p208 = por %p206, %p207
      %p209 = scmp.le.s32.totalorder 1, %s19
      %p210 = scmp.lt.s32.totalorder %s19, 3
      %p211 = pnand %p209, %p210
      %p212 = pneg %p211
      // Predicated region
      $region9: #{_forward_impl.6} parent=5 // pred_check
        _
      $region10: #{_forward_impl.6} parent=5 // pred_check_branch
        %214 = sbr.rel (%p211) target = $region12
      $region11: #{_forward_impl.6} parent=5 // pred_region
        %s215 = ssub.s32 %s19, 1
      $region12: #{_forward_impl.6} parent=5 // pred_fallthru
        _
      %p216 = scmp.lt.s32.totalorder %s19, 2
      // Predicated region
      $region13: #{_forward_impl.6} parent=5 // pred_check
        %p217 = pneg %p216
      $region14: #{_forward_impl.6} parent=5 // pred_check_branch
        %219 = sbr.rel (%p217) target = $region16
      $region15: #{_forward_impl.6} parent=5 // pred_region
        // Predicated region
        $region17: #{_forward_impl.6} parent=15 // pred_check
          %p220 = pneg %p39
        $region18: #{_forward_impl.6} parent=15 // pred_check_branch
          %222 = sbr.rel (%p220) target = $region20
        $region19: #{_forward_impl.6} parent=15 // pred_region
          %s223 = sand.u32 %s29, 1
          %s224 = scalar_lea.sflag [#allocation3], %s223
          %s225 = sand.u32 %s29, 1
          %s226 = smul.addr %s225, 16
          %s227 = scalar_lea.vmem [#allocation2], %s226
          %229 = vsyncadd %s224, 0
          %s230 = smul.addr %s19, 6
          %s231 = smul.addr %s230, 8
          %s232 = scalar_lea.hbm %s0, %s231
          %s233 = sshll.u32 %s232, 4
          %s234 = int_to_ptr.hbm [resolvable:$true] %s233
          %s235 = sshll.u32 %s227, 4
          %s236 = int_to_ptr.vmem [resolvable:$true] %s235
          %241 = dma.hbm_to_vmem [thread:$0]  %s234, 256, %s236, %s224, 128, 128, 8
        $region20: #{_forward_impl.6} parent=15 // pred_fallthru
          _
        // Predicated region
        $region21: #{_forward_impl.6} parent=15 // pred_check
          %p242 = pneg %p65
        $region22: #{_forward_impl.6} parent=15 // pred_check_branch
          %244 = sbr.rel (%p242) target = $region24
        $region23: #{_forward_impl.6} parent=15 // pred_region
          %s245 = sand.u32 %s55, 1
          %s246 = scalar_lea.sflag [#allocation5], %s245
          %s247 = sand.u32 %s55, 1
          %s248 = smul.addr %s247, 16
          %s249 = scalar_lea.vmem [#allocation4], %s248
          %251 = vsyncadd %s246, 0
          %s252 = smul.addr %s19, 2
          %s253 = smul.addr %s252, 8
          %s254 = scalar_lea.hbm %s1, %s253
          %s255 = sshll.u32 %s254, 4
          %s256 = int_to_ptr.hbm [resolvable:$true] %s255
          %s257 = sshll.u32 %s249, 4
          %s258 = int_to_ptr.vmem [resolvable:$true] %s257
          %263 = dma.hbm_to_vmem [thread:$0]  %s256, 256, %s258, %s246, 128, 128, 8
        $region24: #{_forward_impl.6} parent=15 // pred_fallthru
          _
      $region16: #{_forward_impl.6} parent=5 // pred_fallthru
        _
      %p264 = scmp.le.s32.totalorder 1, %s19
      %p265 = scmp.lt.s32.totalorder %s19, 3
      %p266 = pnand %p264, %p265
      %p267 = pneg %p266
      // Predicated region
      $region25: #{_forward_impl.6} parent=5 // pred_check
        _
      $region26: #{_forward_impl.6} parent=5 // pred_check_branch
        %269 = sbr.rel (%p266) target = $region28
      $region27: #{_forward_impl.6} parent=5 // pred_region
        %s270 = ssub.s32 %s19, 1
        %s271 = sand.u32 %s32, 1
        %s272 = scalar_lea.sflag [#allocation3], %s271
        %s273 = sand.u32 %s32, 1
        %s274 = smul.addr %s273, 16
        %s275 = scalar_lea.vmem [#allocation2], %s274
        // Predicated region
        $region29: #{_forward_impl.6} parent=27 // pred_check
          %p276 = pneg %p45
        $region30: #{_forward_impl.6} parent=27 // pred_check_branch
          %278 = sbr.rel (%p276) target = $region32
        $region31: #{_forward_impl.6} parent=27 // pred_region
          %280 = dma.done %s272, 256
        $region32: #{_forward_impl.6} parent=27 // pred_fallthru
          _
        %s281 = sand.u32 %s58, 1
        %s282 = scalar_lea.sflag [#allocation5], %s281
        %s283 = sand.u32 %s58, 1
        %s284 = smul.addr %s283, 16
        %s285 = scalar_lea.vmem [#allocation4], %s284
        // Predicated region
        $region33: #{_forward_impl.6} parent=27 // pred_check
          %p286 = pneg %p71
        $region34: #{_forward_impl.6} parent=27 // pred_check_branch
          %288 = sbr.rel (%p286) target = $region36
        $region35: #{_forward_impl.6} parent=27 // pred_region
          %290 = dma.done %s282, 256
        $region36: #{_forward_impl.6} parent=27 // pred_fallthru
          _
        %s291 = sand.u32 %s32, 1
        %s292 = scalar_lea.sflag [#allocation3], %s291
        %s293 = sand.u32 %s32, 1
        %s294 = smul.addr %s293, 16
        %s295 = scalar_lea.vmem [#allocation2], %s294
        %p296 = pneg %p45
        %p297 = pneg %p42
        %s298 = sand.u32 %s58, 1
        %s299 = scalar_lea.sflag [#allocation5], %s298
        %s300 = sand.u32 %s58, 1
        %s301 = smul.addr %s300, 16
        %s302 = scalar_lea.vmem [#allocation4], %s301
        %p303 = pneg %p71
        %p304 = pneg %p68
        %p305 = pneg %p97
        %p306 = pneg %p94
        %p307 = scmp.lt.s32.totalorder %s24, 1
        %s308 = scalar_select %p307, %s24, 1
        %s309 = smul.addr %s308, 2
        %s310 = smul.addr %s309, 8
        %s311 = scalar_lea.vmem %s2, %s310
        %p312 = pneg %p123
        %p313 = pneg %p120
        %p314 = scmp.lt.s32.totalorder %s24, 1
        %s315 = scalar_select %p314, %s24, 1
        %s316 = smul.addr %s315, 2
        %s317 = smul.addr %s316, 8
        %s318 = scalar_lea.vmem %s3, %s317
        %p319 = pneg %p149
        %p320 = pneg %p146
        %p321 = scmp.lt.s32.totalorder %s24, 1
        %s322 = scalar_select %p321, %s24, 1
        %s323 = smul.addr %s322, 2
        %s324 = smul.addr %s323, 8
        %s325 = scalar_lea.vmem %s4, %s324
        %p326 = pneg %p175
        %p327 = pneg %p172
        %p328 = scmp.lt.s32.totalorder %s24, 1
        %s329 = scalar_select %p328, %s24, 1
        %s330 = smul.addr %s329, 2
        %s331 = smul.addr %s330, 8
        %s332 = scalar_lea.vmem %s5, %s331
        %p333 = pneg %p201
        %p334 = pneg %p198
        %p335 = scmp.lt.s32.totalorder %s24, 1
        %s336 = scalar_select %p335, %s24, 1
        %s337 = scalar_lea.vmem %s6, %s336
        %p338 = scmp.lt.s32.totalorder %s24, 1
        %s339 = scalar_select %p338, %s24, 1
        %s340 = smul.addr %s339, 2
        %s341 = smul.addr %s340, 8
        %s342 = scalar_lea.vmem %s2, %s341
        %p343 = scmp.lt.s32.totalorder %s24, 1
        %s344 = scalar_select %p343, %s24, 1
        %s345 = smul.addr %s344, 2
        %s346 = smul.addr %s345, 8
        %s347 = scalar_lea.vmem %s3, %s346
        %p348 = scmp.lt.s32.totalorder %s24, 1
        %s349 = scalar_select %p348, %s24, 1
        %s350 = smul.addr %s349, 2
        %s351 = smul.addr %s350, 8
        %s352 = scalar_lea.vmem %s4, %s351
        %p353 = scmp.lt.s32.totalorder %s24, 1
        %s354 = scalar_select %p353, %s24, 1
        %s355 = smul.addr %s354, 2
        %s356 = smul.addr %s355, 8
        %s357 = scalar_lea.vmem %s5, %s356
        %p358 = scmp.lt.s32.totalorder %s24, 1
        %s359 = scalar_select %p358, %s24, 1
        %s360 = scalar_lea.vmem %s6, %s359
        %v361 = vlaneseq
        %v362 = vshrl.u32 %v361, 7
        %v363 = vadd.s32 %v362, 8
        %v364 = vlaneseq
        %v365 = vand.u32 %v364, 127
        %vm366 = vcmp.ge.s32.totalorder %v362, 1
        %vm367 = vcmp.ge.s32.totalorder %v363, 1
        %vm368 = vcmp.lt.s32.totalorder %v362, 15
        %vm369 = vcmp.lt.s32.totalorder %v363, 15
        %vm370 = vmand %vm366, %vm368
        %vm371 = vmand %vm367, %vm369
        %vm372 = vcmp.ge.s32.totalorder %v365, 1
        %vm373 = vmand %vm370, %vm372
        %vm374 = vmand %vm371, %vm372
        %vm375 = vcmp.lt.s32.totalorder %v365, 15
        %vm376 = vmand %vm373, %vm375
        %vm377 = vmand %vm374, %vm375
        %v378 = vsel %vm376, 1, 0
        %v379 = vsel %vm377, 1, 0
        %v380 = vcvt.s32.f32 %v378
        %v381 = vcvt.s32.f32 %v379
        %v382 = vld [vmem:[%s275] sm:$0xff]
        %v383 = vld [vmem:[%s275 + $0x8] sm:$0xff]
        %v385 = vrot.slane %v383, 7
        %vm388 = vcmask 1040384
        %v389 = vrot.slane %v382, 7
        %v390 = vsel %vm388, %v389, %v385
        %v393 = vsel %vm388, %v385, %v389
        %vm394 = vcmask 1046528
        %v395 = vrot.slane %v382, 1
        %v396 = vrot.slane %v383, 1
        %v397 = vsel %vm394, %v395, %v396
        %v401 = vsel %vm394, %v396, %v395
        %v402 = vmul.f32 %v382, 2.0
        %v403 = vmul.f32 %v383, 2.0
        %v404 = vadd.f32 %v393, %v402
        %v405 = vadd.f32 %v390, %v403
        %v406 = vadd.f32 %v404, %v397
        %v407 = vadd.f32 %v405, %v401
        %v408 = vsub.f32 %v393, %v397
        %v409 = vsub.f32 %v390, %v401
        %412 = vrot.lane.b32.xlu0 %v406, 127
        %v413 = vpop.permute.xlu0 %412
        %414 = vrot.lane.b32.xlu0 %v407, 127
        %v415 = vpop.permute.xlu0 %414
        %418 = vrot.lane.b32.xlu0 %v406, 15
        %v419 = vpop.permute.xlu0 %418
        %420 = vrot.lane.b32.xlu0 %v407, 15
        %v421 = vpop.permute.xlu0 %420
        %vm424 = vcmask 121856
        %v425 = vsel %vm424, %v413, %v419
        %v426 = vsel %vm424, %v415, %v421
        %427 = vrot.lane.b32.xlu0 %v406, 113
        %v428 = vpop.permute.xlu0 %427
        %429 = vrot.lane.b32.xlu0 %v407, 113
        %v430 = vpop.permute.xlu0 %429
        %433 = vrot.lane.b32.xlu0 %v406, 1
        %v434 = vpop.permute.xlu0 %433
        %435 = vrot.lane.b32.xlu0 %v407, 1
        %v436 = vpop.permute.xlu0 %435
        %vm439 = vcmask 7168
        %v440 = vsel %vm439, %v428, %v434
        %v441 = vsel %vm439, %v430, %v436
        %v442 = vsub.f32 %v425, %v440
        %v443 = vsub.f32 %v426, %v441
        %446 = vrot.lane.b32.xlu0 %v408, 113
        %v447 = vpop.permute.xlu0 %446
        %448 = vrot.lane.b32.xlu0 %v409, 113
        %v449 = vpop.permute.xlu0 %448
        %452 = vrot.lane.b32.xlu0 %v408, 1
        %v453 = vpop.permute.xlu0 %452
        %454 = vrot.lane.b32.xlu0 %v409, 1
        %v455 = vpop.permute.xlu0 %454
        %v458 = vsel %vm439, %v447, %v453
        %v459 = vsel %vm439, %v449, %v455
        %v460 = vmul.f32 %v408, 2.0
        %v461 = vmul.f32 %v409, 2.0
        %v462 = vadd.f32 %v458, %v460
        %v463 = vadd.f32 %v459, %v461
        %464 = vrot.lane.b32.xlu0 %v408, 127
        %v465 = vpop.permute.xlu0 %464
        %466 = vrot.lane.b32.xlu0 %v409, 127
        %v467 = vpop.permute.xlu0 %466
        %470 = vrot.lane.b32.xlu0 %v408, 15
        %v471 = vpop.permute.xlu0 %470
        %472 = vrot.lane.b32.xlu0 %v409, 15
        %v473 = vpop.permute.xlu0 %472
        %v476 = vsel %vm424, %v465, %v471
        %v477 = vsel %vm424, %v467, %v473
        %v478 = vadd.f32 %v462, %v476
        %v479 = vadd.f32 %v463, %v477
        %v480 = vmul.f32 %v442, %v442
        %v481 = vmul.f32 %v443, %v443
        %v482 = vmul.f32 %v478, %v478
        %v483 = vmul.f32 %v479, %v479
        %v484 = vadd.f32 %v480, %v482
        %v485 = vadd.f32 %v481, %v483
        %v486 = vrsqrt.pop %v484
        %v487 = vmul.f32 %v486, %v484
        %v488 = vmul.f32 %v487, %v486
        %v489 = vmul.f32 0.5, %v488
        %v490 = vsub.f32 1.5, %v489
        %v491 = vmul.f32 %v486, %v490
        %v492 = vmul.f32 %v484, %v491
        %vm493 = vcmp.eq.f32.partialorder %v484, inf
        %v494 = vsel %vm493, %v484, %v492
        %vm495 = vcmp.eq.f32.partialorder %v484, 0.0
        %v496 = vand.u32 %v484, 2147483648
        %v497 = vsel %vm495, %v496, %v494
        %v498 = vrsqrt.pop %v485
        %v499 = vmul.f32 %v498, %v485
        %v500 = vmul.f32 %v499, %v498
        %v501 = vmul.f32 0.5, %v500
        %v502 = vsub.f32 1.5, %v501
        %v503 = vmul.f32 %v498, %v502
        %v504 = vmul.f32 %v485, %v503
        %vm505 = vcmp.eq.f32.partialorder %v485, inf
        %v506 = vsel %vm505, %v485, %v504
        %vm507 = vcmp.eq.f32.partialorder %v485, 0.0
        %v508 = vand.u32 %v485, 2147483648
        %v509 = vsel %vm507, %v508, %v506
        %v510 = vmul.f32 %v497, %v380
        %v511 = vmul.f32 %v509, %v381
        %v512 = vmax.f32 %v510, 1e-30
        %v513 = vmax.f32 %v511, 1e-30
        %vm514 = vcmask 130048
        %515 = vst.msk [vmem:[%s342] sm:$0xff] %vm514, %v510
        %516 = vst.msk [vmem:[%s342 + $0x8] sm:$0xff] %vm514, %v511
        %vm517 = vcmp.gt.f32.partialorder %v510, 0.0
        %vm518 = vcmp.gt.f32.partialorder %v511, 0.0
        %v519 = vand.u32 2147483647, %v442
        %v520 = vand.u32 2147483647, %v443
        %v521 = vrcp.pop %v512
        %v522 = vmul.f32 %v512, %v521
        %v523 = vsub.f32 1.0, %v522
        %v524 = vmul.f32 %v521, %v523
        %v525 = vadd.f32 %v521, %v524
        %vm526 = vweird.f32 %v512
        %vm527 = vweird.f32 %v521
        %vm528 = vmor %vm526, %vm527
        %v529 = vsel %vm528, %v521, %v525
        %v530 = vand.u32 2147483647, %v512
        %vm531 = vcmp.eq.f32.partialorder %v530, 8.507059e+37
        %v532 = vand.u32 %v512, 2147483648
        %v533 = vor.u32 1.1754944e-38, %v532
        %v534 = vsel %vm531, %v533, %v529
        %v535 = vmul.f32 %v519, %v534
        %v536 = vrcp.pop %v513
        %v537 = vmul.f32 %v513, %v536
        %v538 = vsub.f32 1.0, %v537
        %v539 = vmul.f32 %v536, %v538
        %v540 = vadd.f32 %v536, %v539
        %vm541 = vweird.f32 %v513
        %vm542 = vweird.f32 %v536
        %vm543 = vmor %vm541, %vm542
        %v544 = vsel %vm543, %v536, %v540
        %v545 = vand.u32 2147483647, %v513
        %vm546 = vcmp.eq.f32.partialorder %v545, 8.507059e+37
        %v547 = vand.u32 %v513, 2147483648
        %v548 = vor.u32 1.1754944e-38, %v547
        %v549 = vsel %vm546, %v548, %v544
        %v550 = vmul.f32 %v520, %v549
        %v551 = vsel %vm517, %v535, 1.0
        %v552 = vsel %vm518, %v550, 1.0
        %553 = vst.msk [vmem:[%s347] sm:$0xff] %vm514, %v551
        %554 = vst.msk [vmem:[%s347 + $0x8] sm:$0xff] %vm514, %v552
        %v555 = vand.u32 2147483647, %v478
        %v556 = vand.u32 2147483647, %v479
        %v557 = vmul.f32 %v555, %v534
        %v558 = vmul.f32 %v556, %v549
        %v559 = vsel %vm517, %v557, 0.0
        %v560 = vsel %vm518, %v558, 0.0
        %561 = vst.msk [vmem:[%s352] sm:$0xff] %vm514, %v559
        %562 = vst.msk [vmem:[%s352 + $0x8] sm:$0xff] %vm514, %v560
        %v563 = vld [vmem:[%s285] sm:$0xff]
        %v564 = vld [vmem:[%s285 + $0x8] sm:$0xff]
        %v566 = vrot.slane %v564, 7
        %v569 = vrot.slane %v563, 7
        %v570 = vsel %vm388, %v569, %v566
        %v573 = vsel %vm388, %v566, %v569
        %v574 = vrot.slane %v563, 1
        %v575 = vrot.slane %v564, 1
        %v576 = vsel %vm394, %v574, %v575
        %v580 = vsel %vm394, %v575, %v574
        %v581 = vmul.f32 %v563, 2.0
        %v582 = vmul.f32 %v564, 2.0
        %v583 = vadd.f32 %v573, %v581
        %v584 = vadd.f32 %v570, %v582
        %v585 = vadd.f32 %v583, %v576
        %v586 = vadd.f32 %v584, %v580
        %v587 = vsub.f32 %v573, %v576
        %v588 = vsub.f32 %v570, %v580
        %591 = vrot.lane.b32.xlu0 %v585, 127
        %v592 = vpop.permute.xlu0 %591
        %593 = vrot.lane.b32.xlu0 %v586, 127
        %v594 = vpop.permute.xlu0 %593
        %597 = vrot.lane.b32.xlu0 %v585, 15
        %v598 = vpop.permute.xlu0 %597
        %599 = vrot.lane.b32.xlu0 %v586, 15
        %v600 = vpop.permute.xlu0 %599
        %v603 = vsel %vm424, %v592, %v598
        %v604 = vsel %vm424, %v594, %v600
        %605 = vrot.lane.b32.xlu0 %v585, 113
        %v606 = vpop.permute.xlu0 %605
        %607 = vrot.lane.b32.xlu0 %v586, 113
        %v608 = vpop.permute.xlu0 %607
        %611 = vrot.lane.b32.xlu0 %v585, 1
        %v612 = vpop.permute.xlu0 %611
        %613 = vrot.lane.b32.xlu0 %v586, 1
        %v614 = vpop.permute.xlu0 %613
        %v617 = vsel %vm439, %v606, %v612
        %v618 = vsel %vm439, %v608, %v614
        %v619 = vsub.f32 %v603, %v617
        %v620 = vsub.f32 %v604, %v618
        %623 = vrot.lane.b32.xlu0 %v587, 113
        %v624 = vpop.permute.xlu0 %623
        %625 = vrot.lane.b32.xlu0 %v588, 113
        %v626 = vpop.permute.xlu0 %625
        %629 = vrot.lane.b32.xlu0 %v587, 1
        %v630 = vpop.permute.xlu0 %629
        %631 = vrot.lane.b32.xlu0 %v588, 1
        %v632 = vpop.permute.xlu0 %631
        %v635 = vsel %vm439, %v624, %v630
        %v636 = vsel %vm439, %v626, %v632
        %v637 = vmul.f32 %v587, 2.0
        %v638 = vmul.f32 %v588, 2.0
        %v639 = vadd.f32 %v635, %v637
        %v640 = vadd.f32 %v636, %v638
        %641 = vrot.lane.b32.xlu0 %v587, 127
        %v642 = vpop.permute.xlu0 %641
        %643 = vrot.lane.b32.xlu0 %v588, 127
        %v644 = vpop.permute.xlu0 %643
        %647 = vrot.lane.b32.xlu0 %v587, 15
        %v648 = vpop.permute.xlu0 %647
        %649 = vrot.lane.b32.xlu0 %v588, 15
        %v650 = vpop.permute.xlu0 %649
        %v653 = vsel %vm424, %v642, %v648
        %v654 = vsel %vm424, %v644, %v650
        %v655 = vadd.f32 %v639, %v653
        %v656 = vadd.f32 %v640, %v654
        %v657 = vmul.f32 %v619, %v619
        %v658 = vmul.f32 %v620, %v620
        %v659 = vmul.f32 %v655, %v655
        %v660 = vmul.f32 %v656, %v656
        %v661 = vadd.f32 %v657, %v659
        %v662 = vadd.f32 %v658, %v660
        %v663 = vrsqrt.pop %v661
        %v664 = vmul.f32 %v663, %v661
        %v665 = vmul.f32 %v664, %v663
        %v666 = vmul.f32 0.5, %v665
        %v667 = vsub.f32 1.5, %v666
        %v668 = vmul.f32 %v663, %v667
        %v669 = vmul.f32 %v661, %v668
        %vm670 = vcmp.eq.f32.partialorder %v661, inf
        %v671 = vsel %vm670, %v661, %v669
        %vm672 = vcmp.eq.f32.partialorder %v661, 0.0
        %v673 = vand.u32 %v661, 2147483648
        %v674 = vsel %vm672, %v673, %v671
        %v675 = vrsqrt.pop %v662
        %v676 = vmul.f32 %v675, %v662
        %v677 = vmul.f32 %v676, %v675
        %v678 = vmul.f32 0.5, %v677
        %v679 = vsub.f32 1.5, %v678
        %v680 = vmul.f32 %v675, %v679
        %v681 = vmul.f32 %v662, %v680
        %vm682 = vcmp.eq.f32.partialorder %v662, inf
        %v683 = vsel %vm682, %v662, %v681
        %vm684 = vcmp.eq.f32.partialorder %v662, 0.0
        %v685 = vand.u32 %v662, 2147483648
        %v686 = vsel %vm684, %v685, %v683
        %v687 = vmul.f32 %v674, %v380
        %v688 = vmul.f32 %v686, %v381
        %689 = vst.msk [vmem:[%s357] sm:$0xff] %vm514, %v687
        %690 = vst.msk [vmem:[%s357 + $0x8] sm:$0xff] %vm514, %v688
        %vm691 = vcmp.eq.s32.totalorder %v365, 0
        %v692 = vsel %vm514, %v687, -inf
        %v693 = vsel %vm514, %v688, -inf
        %v694 = vmax.f32 %v692, %v693
        %695 = vmax.xlane.f32.xlu0 %v694
        %v696 = vpop.xlane.xlu0 %695
        %v697 = vrot.slane %v696, 4
        %v698 = vmax.f32 %v696, %v697
        %v699 = vrot.slane %v698, 2
        %v700 = vmax.f32 %v698, %v699
        %v701 = vrot.slane %v700, 1
        %v702 = vmax.f32 %v700, %v701
        %s703 = vtos %v702
        %v704 = vstv %s703
        %v705 = vsel %vm691, %v704, 0.0
        %706 = vst [vmem:[%s360] sm:$0x1] %v705
        %p707 = scmp.lt.s32.totalorder %s24, 1
        %s708 = scalar_select %p707, %s24, 1
        %s709 = smul.addr %s708, 2
        %s710 = smul.addr %s709, 8
        %s711 = scalar_lea.vmem %s2, %s710
        %p712 = scmp.lt.s32.totalorder %s24, 1
        %s713 = scalar_select %p712, %s24, 1
        %s714 = smul.addr %s713, 2
        %s715 = smul.addr %s714, 8
        %s716 = scalar_lea.vmem %s3, %s715
        %p717 = scmp.lt.s32.totalorder %s24, 1
        %s718 = scalar_select %p717, %s24, 1
        %s719 = smul.addr %s718, 2
        %s720 = smul.addr %s719, 8
        %s721 = scalar_lea.vmem %s4, %s720
        %p722 = scmp.lt.s32.totalorder %s24, 1
        %s723 = scalar_select %p722, %s24, 1
        %s724 = smul.addr %s723, 2
        %s725 = smul.addr %s724, 8
        %s726 = scalar_lea.vmem %s5, %s725
        %p727 = scmp.lt.s32.totalorder %s24, 1
        %s728 = scalar_select %p727, %s24, 1
        %s729 = scalar_lea.vmem %s6, %s728
        // Predicated region
        $region37: #{_forward_impl.6} parent=27 // pred_check
          %p730 = pneg %p94
        $region38: #{_forward_impl.6} parent=27 // pred_check_branch
          %732 = sbr.rel (%p730) target = $region40
        $region39: #{_forward_impl.6} parent=27 // pred_region
          _
        $region40: #{_forward_impl.6} parent=27 // pred_fallthru
          _
        // Predicated region
        $region41: #{_forward_impl.6} parent=27 // pred_check
          %p733 = pneg %p120
        $region42: #{_forward_impl.6} parent=27 // pred_check_branch
          %735 = sbr.rel (%p733) target = $region44
        $region43: #{_forward_impl.6} parent=27 // pred_region
          _
        $region44: #{_forward_impl.6} parent=27 // pred_fallthru
          _
        // Predicated region
        $region45: #{_forward_impl.6} parent=27 // pred_check
          %p736 = pneg %p146
        $region46: #{_forward_impl.6} parent=27 // pred_check_branch
          %738 = sbr.rel (%p736) target = $region48
        $region47: #{_forward_impl.6} parent=27 // pred_region
          _
        $region48: #{_forward_impl.6} parent=27 // pred_fallthru
          _
        // Predicated region
        $region49: #{_forward_impl.6} parent=27 // pred_check
          %p739 = pneg %p172
        $region50: #{_forward_impl.6} parent=27 // pred_check_branch
          %741 = sbr.rel (%p739) target = $region52
        $region51: #{_forward_impl.6} parent=27 // pred_region
          _
        $region52: #{_forward_impl.6} parent=27 // pred_fallthru
          _
        // Predicated region
        $region53: #{_forward_impl.6} parent=27 // pred_check
          %p742 = pneg %p198
        $region54: #{_forward_impl.6} parent=27 // pred_check_branch
          %744 = sbr.rel (%p742) target = $region56
        $region55: #{_forward_impl.6} parent=27 // pred_region
          _
        $region56: #{_forward_impl.6} parent=27 // pred_fallthru
          _
      $region28: #{_forward_impl.6} parent=5 // pred_fallthru
        _
      %p745 = scmp.le.s32.totalorder 2, %s19
      // Predicated region
      $region57: #{_forward_impl.6} parent=5 // pred_check
        %p746 = pneg %p745
      $region58: #{_forward_impl.6} parent=5 // pred_check_branch
        %748 = sbr.rel (%p746) target = $region60
      $region59: #{_forward_impl.6} parent=5 // pred_region
        %s749 = ssub.s32 %s19, 2
        // Predicated region
        $region61: #{_forward_impl.6} parent=59 // pred_check
          %p750 = pneg %p100
        $region62: #{_forward_impl.6} parent=59 // pred_check_branch
          %752 = sbr.rel (%p750) target = $region64
        $region63: #{_forward_impl.6} parent=59 // pred_region
          %p753 = scmp.lt.s32.totalorder %s25, 1
          %s754 = scalar_select %p753, %s25, 1
          %s755 = smul.addr %s754, 2
          %s756 = smul.addr %s755, 8
          %s757 = scalar_lea.vmem %s2, %s756
        $region64: #{_forward_impl.6} parent=59 // pred_fallthru
          _
        // Predicated region
        $region65: #{_forward_impl.6} parent=59 // pred_check
          %p758 = pneg %p126
        $region66: #{_forward_impl.6} parent=59 // pred_check_branch
          %760 = sbr.rel (%p758) target = $region68
        $region67: #{_forward_impl.6} parent=59 // pred_region
          %p761 = scmp.lt.s32.totalorder %s25, 1
          %s762 = scalar_select %p761, %s25, 1
          %s763 = smul.addr %s762, 2
          %s764 = smul.addr %s763, 8
          %s765 = scalar_lea.vmem %s3, %s764
        $region68: #{_forward_impl.6} parent=59 // pred_fallthru
          _
        // Predicated region
        $region69: #{_forward_impl.6} parent=59 // pred_check
          %p766 = pneg %p152
        $region70: #{_forward_impl.6} parent=59 // pred_check_branch
          %768 = sbr.rel (%p766) target = $region72
        $region71: #{_forward_impl.6} parent=59 // pred_region
          %p769 = scmp.lt.s32.totalorder %s25, 1
          %s770 = scalar_select %p769, %s25, 1
          %s771 = smul.addr %s770, 2
          %s772 = smul.addr %s771, 8
          %s773 = scalar_lea.vmem %s4, %s772
        $region72: #{_forward_impl.6} parent=59 // pred_fallthru
          _
        // Predicated region
        $region73: #{_forward_impl.6} parent=59 // pred_check
          %p774 = pneg %p178
        $region74: #{_forward_impl.6} parent=59 // pred_check_branch
          %776 = sbr.rel (%p774) target = $region76
        $region75: #{_forward_impl.6} parent=59 // pred_region
          %p777 = scmp.lt.s32.totalorder %s25, 1
          %s778 = scalar_select %p777, %s25, 1
          %s779 = smul.addr %s778, 2
          %s780 = smul.addr %s779, 8
          %s781 = scalar_lea.vmem %s5, %s780
        $region76: #{_forward_impl.6} parent=59 // pred_fallthru
          _
        // Predicated region
        $region77: #{_forward_impl.6} parent=59 // pred_check
          %p782 = pneg %p204
        $region78: #{_forward_impl.6} parent=59 // pred_check_branch
          %784 = sbr.rel (%p782) target = $region80
        $region79: #{_forward_impl.6} parent=59 // pred_region
          %p785 = scmp.lt.s32.totalorder %s25, 1
          %s786 = scalar_select %p785, %s25, 1
          %s787 = scalar_lea.vmem %s6, %s786
        $region80: #{_forward_impl.6} parent=59 // pred_fallthru
          _
      $region60: #{_forward_impl.6} parent=5 // pred_fallthru
        _
    $region6: #{_forward_impl.6} parent=1 // loop_footer
      %s23 = sadd.s32 1, %s19
    $region7: #{_forward_impl.6} parent=1 // loop_footer_branch
      %18 = sbr.rel target = $region3
    $region8: #{_forward_impl.6} parent=1 // loop_exit
      _
    %788 = vsyncpa [#allocation3], 1
    %s789 = scalar_lea.sflag [#allocation3], 1
    %790 = vsyncpa %s789, 1
    %791 = vsyncpa [#allocation5], 1
    %s792 = scalar_lea.sflag [#allocation5], 1
    %793 = vsyncpa %s792, 1

// kernel: _forward_impl.5
$region0: #{_forward_impl.5}
  #allocation0 [shape = 'u32[]', space=smem, size = 0x4, offset = 0x4, fixed_abs, tag = 'smem constant byte address 0x4 - core index']
  #allocation1 [shape = 'u32[72,128]{1,0:T(1,128)}', space=vmem, size = 0x9000, scoped, tag = 'internal scratch']
  %s0 = inlined_call_operand.hbm [shape: f32[2,1,16,16], index: 0, kind: input, shape index: {}]
  %s1 = inlined_call_operand.hbm [shape: f32[2,1,16,16], index: 1, kind: input, shape index: {}]
  %s2 = inlined_call_operand.hbm [shape: f32[2], index: 2, kind: input, shape index: {}]
  %s3 = inlined_call_operand.vmem [shape: f32[2,3,16,16], index: 3, kind: output, shape index: {0}]
  %s4 = inlined_call_operand.vmem [shape: f32[2,3,16,16], index: 4, kind: output, shape index: {1}]
  %s5 = inlined_call_operand.vmem [shape: f32[2,16,16], index: 5, kind: output, shape index: {2}]
  %s6 = inlined_call_operand.vmem [shape: f32[2,16,16], index: 6, kind: output, shape index: {3}]
  %s7 = inlined_call_operand.vmem [shape: f32[2,16,16], index: 7, kind: output, shape index: {4}]
  %8 = xla_tuple %s3, %s4, %s5, %s6, %s7
  %s9 = sld [smem:[#allocation0]]
  $region89: #{_forward_impl.5} parent=0
    _
  %s11 = ssub.s32 1, %s9
  %s12 = scalar_select 0, %s11, %s9
  $region1: #{_forward_impl.5} parent=0
    #allocation2 [shape = 'u8[16384]{0}', space=vmem, size = 0x4000, scoped, tag = 'input window, operand 0']
    #allocation3 [shape = 's32[2]{0}', space=sflag, size = 0x8, scoped, tag = 'scoped memory for _forward_impl.5']
    #allocation4 [shape = 's32[2]{0}', space=sflag, size = 0x8, scoped, tag = 'scoped memory for _forward_impl.5']
    #allocation5 [shape = 'u8[16384]{0}', space=vmem, size = 0x4000, scoped, tag = 'input window, operand 1']
    #allocation6 [shape = 's32[2]{0}', space=sflag, size = 0x8, scoped, tag = 'scoped memory for _forward_impl.5']
    #allocation7 [shape = 'u8[512]{0}', space=smem, size = 0x200, scoped, tag = 'input window, operand 2, single buffered']
    %13 = vsyncpa [#allocation3], 0
    %s14 = scalar_lea.sflag [#allocation3], 1
    %15 = vsyncpa %s14, 0
    %16 = vsyncpa [#allocation6], 0
    %s17 = scalar_lea.sflag [#allocation6], 1
    %18 = vsyncpa %s17, 0
    %19 = vsyncpa [#allocation4], 0
    loop: start=0, step=1, limit=4
    $region2: #{_forward_impl.5} parent=1 // loop_pre_header
      _
    $region3: #{_forward_impl.5} parent=1 // loop_header
      %s21 = sphi 0, %s25
      %p22 = scmp.ge.s32.totalorder %s21, 4
      %s31 = sphi 0, %s33
      %s34 = sphi 0, %s31
      %s35 = sphi 0, %s34
      %s51 = sphi 0, %s35
      %s57 = sphi 0, %s59
      %s60 = sphi 0, %s57
      %s61 = sphi 0, %s60
      %s77 = sphi 0, %s61
      %s81 = sphi 0, %s81
      %s83 = sphi 0, %s81
      %s84 = sphi 0, %s83
      %s98 = sphi 0, %s84
      %s104 = sphi 0, %s106
      %s107 = sphi 0, %s104
      %s108 = sphi 0, %s107
      %s124 = sphi 0, %s108
      %s130 = sphi 0, %s132
      %s133 = sphi 0, %s130
      %s134 = sphi 0, %s133
      %s150 = sphi 0, %s134
      %s156 = sphi 0, %s158
      %s159 = sphi 0, %s156
      %s160 = sphi 0, %s159
      %s176 = sphi 0, %s160
      %s182 = sphi 0, %s184
      %s185 = sphi 0, %s182
      %s186 = sphi 0, %s185
      %s202 = sphi 0, %s186
      %s208 = sphi 0, %s210
      %s211 = sphi 0, %s208
      %s212 = sphi 0, %s211
      %s228 = sphi 0, %s212
    $region4: #{_forward_impl.5} parent=1 // loop_header_branch
      %24 = sbr.rel (%p22) target = $region8
    $region5: #{_forward_impl.5} parent=1 // loop_body
      %s26 = ssub.s32 %s21, 1
      %s27 = ssub.s32 %s21, 2
      %s28 = sadd.s32 %s21, 1
      %s29 = ssub.s32 %s21, %s28
      %p30 = scmp.eq.s32.totalorder %s29, 0
      %s32 = sadd.s32 %s31, 1
      %s33 = scalar_select %p30, %s31, %s32
      %p36 = pneg %p30
      %p37 = scmp.eq.s32.totalorder %s21, 1
      %p38 = por %p36, %p37
      %p39 = scmp.ne.s32.totalorder %s31, %s34
      %p40 = scmp.eq.s32.totalorder %s21, 0
      %p41 = por %p39, %p40
      %p42 = scmp.ne.s32.totalorder %s31, %s34
      %p43 = scmp.eq.s32.totalorder %s26, 1
      %p44 = por %p42, %p43
      %p45 = scmp.ne.s32.totalorder %s34, %s35
      %p46 = scmp.eq.s32.totalorder %s26, 0
      %p47 = por %p45, %p46
      %p48 = scmp.ne.s32.totalorder %s34, %s35
      %p49 = scmp.eq.s32.totalorder %s27, 1
      %p50 = por %p48, %p49
      %p52 = scmp.ne.s32.totalorder %s35, %s51
      %p53 = scmp.eq.s32.totalorder %s27, 0
      %p54 = por %p52, %p53
      %s55 = ssub.s32 %s21, %s28
      %p56 = scmp.eq.s32.totalorder %s55, 0
      %s58 = sadd.s32 %s57, 1
      %s59 = scalar_select %p56, %s57, %s58
      %p62 = pneg %p56
      %p63 = scmp.eq.s32.totalorder %s21, 1
      %p64 = por %p62, %p63
      %p65 = scmp.ne.s32.totalorder %s57, %s60
      %p66 = scmp.eq.s32.totalorder %s21, 0
      %p67 = por %p65, %p66
      %p68 = scmp.ne.s32.totalorder %s57, %s60
      %p69 = scmp.eq.s32.totalorder %s26, 1
      %p70 = por %p68, %p69
      %p71 = scmp.ne.s32.totalorder %s60, %s61
      %p72 = scmp.eq.s32.totalorder %s26, 0
      %p73 = por %p71, %p72
      %p74 = scmp.ne.s32.totalorder %s60, %s61
      %p75 = scmp.eq.s32.totalorder %s27, 1
      %p76 = por %p74, %p75
      %p78 = scmp.ne.s32.totalorder %s61, %s77
      %p79 = scmp.eq.s32.totalorder %s27, 0
      %p80 = por %p78, %p79
      %s82 = sadd.s32 %s81, 1
      %p85 = scmp.eq.s32.totalorder %s21, 1
      %p86 = scmp.ne.s32.totalorder %s81, %s83
      %p87 = scmp.eq.s32.totalorder %s21, 0
      %p88 = por %p86, %p87
      %p89 = scmp.ne.s32.totalorder %s81, %s83
      %p90 = scmp.eq.s32.totalorder %s26, 1
      %p91 = por %p89, %p90
      %p92 = scmp.ne.s32.totalorder %s83, %s84
      %p93 = scmp.eq.s32.totalorder %s26, 0
      %p94 = por %p92, %p93
      %p95 = scmp.ne.s32.totalorder %s83, %s84
      %p96 = scmp.eq.s32.totalorder %s27, 1
      %p97 = por %p95, %p96
      %p99 = scmp.ne.s32.totalorder %s84, %s98
      %p100 = scmp.eq.s32.totalorder %s27, 0
      %p101 = por %p99, %p100
      %s102 = ssub.s32 %s21, %s28
      %p103 = scmp.eq.s32.totalorder %s102, 0
      %s105 = sadd.s32 %s104, 1
      %s106 = scalar_select %p103, %s104, %s105
      %p109 = pneg %p103
      %p110 = scmp.eq.s32.totalorder %s21, 1
      %p111 = por %p109, %p110
      %p112 = scmp.ne.s32.totalorder %s104, %s107
      %p113 = scmp.eq.s32.totalorder %s21, 0
      %p114 = por %p112, %p113
      %p115 = scmp.ne.s32.totalorder %s104, %s107
      %p116 = scmp.eq.s32.totalorder %s26, 1
      %p117 = por %p115, %p116
      %p118 = scmp.ne.s32.totalorder %s107, %s108
      %p119 = scmp.eq.s32.totalorder %s26, 0
      %p120 = por %p118, %p119
      %p121 = scmp.ne.s32.totalorder %s107, %s108
      %p122 = scmp.eq.s32.totalorder %s27, 1
      %p123 = por %p121, %p122
      %p125 = scmp.ne.s32.totalorder %s108, %s124
      %p126 = scmp.eq.s32.totalorder %s27, 0
      %p127 = por %p125, %p126
      %s128 = ssub.s32 %s21, %s28
      %p129 = scmp.eq.s32.totalorder %s128, 0
      %s131 = sadd.s32 %s130, 1
      %s132 = scalar_select %p129, %s130, %s131
      %p135 = pneg %p129
      %p136 = scmp.eq.s32.totalorder %s21, 1
      %p137 = por %p135, %p136
      %p138 = scmp.ne.s32.totalorder %s130, %s133
      %p139 = scmp.eq.s32.totalorder %s21, 0
      %p140 = por %p138, %p139
      %p141 = scmp.ne.s32.totalorder %s130, %s133
      %p142 = scmp.eq.s32.totalorder %s26, 1
      %p143 = por %p141, %p142
      %p144 = scmp.ne.s32.totalorder %s133, %s134
      %p145 = scmp.eq.s32.totalorder %s26, 0
      %p146 = por %p144, %p145
      %p147 = scmp.ne.s32.totalorder %s133, %s134
      %p148 = scmp.eq.s32.totalorder %s27, 1
      %p149 = por %p147, %p148
      %p151 = scmp.ne.s32.totalorder %s134, %s150
      %p152 = scmp.eq.s32.totalorder %s27, 0
      %p153 = por %p151, %p152
      %s154 = ssub.s32 %s21, %s28
      %p155 = scmp.eq.s32.totalorder %s154, 0
      %s157 = sadd.s32 %s156, 1
      %s158 = scalar_select %p155, %s156, %s157
      %p161 = pneg %p155
      %p162 = scmp.eq.s32.totalorder %s21, 1
      %p163 = por %p161, %p162
      %p164 = scmp.ne.s32.totalorder %s156, %s159
      %p165 = scmp.eq.s32.totalorder %s21, 0
      %p166 = por %p164, %p165
      %p167 = scmp.ne.s32.totalorder %s156, %s159
      %p168 = scmp.eq.s32.totalorder %s26, 1
      %p169 = por %p167, %p168
      %p170 = scmp.ne.s32.totalorder %s159, %s160
      %p171 = scmp.eq.s32.totalorder %s26, 0
      %p172 = por %p170, %p171
      %p173 = scmp.ne.s32.totalorder %s159, %s160
      %p174 = scmp.eq.s32.totalorder %s27, 1
      %p175 = por %p173, %p174
      %p177 = scmp.ne.s32.totalorder %s160, %s176
      %p178 = scmp.eq.s32.totalorder %s27, 0
      %p179 = por %p177, %p178
      %s180 = ssub.s32 %s21, %s28
      %p181 = scmp.eq.s32.totalorder %s180, 0
      %s183 = sadd.s32 %s182, 1
      %s184 = scalar_select %p181, %s182, %s183
      %p187 = pneg %p181
      %p188 = scmp.eq.s32.totalorder %s21, 1
      %p189 = por %p187, %p188
      %p190 = scmp.ne.s32.totalorder %s182, %s185
      %p191 = scmp.eq.s32.totalorder %s21, 0
      %p192 = por %p190, %p191
      %p193 = scmp.ne.s32.totalorder %s182, %s185
      %p194 = scmp.eq.s32.totalorder %s26, 1
      %p195 = por %p193, %p194
      %p196 = scmp.ne.s32.totalorder %s185, %s186
      %p197 = scmp.eq.s32.totalorder %s26, 0
      %p198 = por %p196, %p197
      %p199 = scmp.ne.s32.totalorder %s185, %s186
      %p200 = scmp.eq.s32.totalorder %s27, 1
      %p201 = por %p199, %p200
      %p203 = scmp.ne.s32.totalorder %s186, %s202
      %p204 = scmp.eq.s32.totalorder %s27, 0
      %p205 = por %p203, %p204
      %s206 = ssub.s32 %s21, %s28
      %p207 = scmp.eq.s32.totalorder %s206, 0
      %s209 = sadd.s32 %s208, 1
      %s210 = scalar_select %p207, %s208, %s209
      %p213 = pneg %p207
      %p214 = scmp.eq.s32.totalorder %s21, 1
      %p215 = por %p213, %p214
      %p216 = scmp.ne.s32.totalorder %s208, %s211
      %p217 = scmp.eq.s32.totalorder %s21, 0
      %p218 = por %p216, %p217
      %p219 = scmp.ne.s32.totalorder %s208, %s211
      %p220 = scmp.eq.s32.totalorder %s26, 1
      %p221 = por %p219, %p220
      %p222 = scmp.ne.s32.totalorder %s211, %s212
      %p223 = scmp.eq.s32.totalorder %s26, 0
      %p224 = por %p222, %p223
      %p225 = scmp.ne.s32.totalorder %s211, %s212
      %p226 = scmp.eq.s32.totalorder %s27, 1
      %p227 = por %p225, %p226
      %p229 = scmp.ne.s32.totalorder %s212, %s228
      %p230 = scmp.eq.s32.totalorder %s27, 0
      %p231 = por %p229, %p230
      %p232 = scmp.le.s32.totalorder 1, %s21
      %p233 = scmp.lt.s32.totalorder %s21, 3
      %p234 = pnand %p232, %p233
      %p235 = pneg %p234
      // Predicated region
      $region9: #{_forward_impl.5} parent=5 // pred_check
        _
      $region10: #{_forward_impl.5} parent=5 // pred_check_branch
        %237 = sbr.rel (%p234) target = $region12
      $region11: #{_forward_impl.5} parent=5 // pred_region
        %s238 = ssub.s32 %s21, 1
        // Predicated region
        $region13: #{_forward_impl.5} parent=11 // pred_check
          %p239 = pneg %p94
        $region14: #{_forward_impl.5} parent=11 // pred_check_branch
          %241 = sbr.rel (%p239) target = $region16
        $region15: #{_forward_impl.5} parent=11 // pred_region
          %243 = vsyncadd [#allocation4], 0
          %s245 = sshll.u32 %s2, 4
          %s246 = int_to_ptr.hbm [resolvable:$true] %s245
          %248 = dma.hbm_to_smem %s246, 16, [#allocation7], [#allocation4]
        $region16: #{_forward_impl.5} parent=11 // pred_fallthru
          _
      $region12: #{_forward_impl.5} parent=5 // pred_fallthru
        _
      %p249 = scmp.lt.s32.totalorder %s21, 2
      // Predicated region
      $region17: #{_forward_impl.5} parent=5 // pred_check
        %p250 = pneg %p249
      $region18: #{_forward_impl.5} parent=5 // pred_check_branch
        %252 = sbr.rel (%p250) target = $region20
      $region19: #{_forward_impl.5} parent=5 // pred_region
        // Predicated region
        $region21: #{_forward_impl.5} parent=19 // pred_check
          %p253 = pneg %p41
        $region22: #{_forward_impl.5} parent=19 // pred_check_branch
          %255 = sbr.rel (%p253) target = $region24
        $region23: #{_forward_impl.5} parent=19 // pred_region
          %s256 = sand.u32 %s31, 1
          %s257 = scalar_lea.sflag [#allocation3], %s256
          %s258 = sand.u32 %s31, 1
          %s259 = smul.addr %s258, 16
          %s260 = scalar_lea.vmem [#allocation2], %s259
          %262 = vsyncadd %s257, 0
          %s263 = smul.addr %s21, 2
          %s264 = smul.addr %s263, 8
          %s265 = scalar_lea.hbm %s0, %s264
          %s266 = sshll.u32 %s265, 4
          %s267 = int_to_ptr.hbm [resolvable:$true] %s266
          %s268 = sshll.u32 %s260, 4
          %s269 = int_to_ptr.vmem [resolvable:$true] %s268
          %274 = dma.hbm_to_vmem [thread:$0]  %s267, 256, %s269, %s257, 128, 128, 8
        $region24: #{_forward_impl.5} parent=19 // pred_fallthru
          _
        // Predicated region
        $region25: #{_forward_impl.5} parent=19 // pred_check
          %p275 = pneg %p67
        $region26: #{_forward_impl.5} parent=19 // pred_check_branch
          %277 = sbr.rel (%p275) target = $region28
        $region27: #{_forward_impl.5} parent=19 // pred_region
          %s278 = sand.u32 %s57, 1
          %s279 = scalar_lea.sflag [#allocation6], %s278
          %s280 = sand.u32 %s57, 1
          %s281 = smul.addr %s280, 16
          %s282 = scalar_lea.vmem [#allocation5], %s281
          %284 = vsyncadd %s279, 0
          %s285 = smul.addr %s21, 2
          %s286 = smul.addr %s285, 8
          %s287 = scalar_lea.hbm %s1, %s286
          %s288 = sshll.u32 %s287, 4
          %s289 = int_to_ptr.hbm [resolvable:$true] %s288
          %s290 = sshll.u32 %s282, 4
          %s291 = int_to_ptr.vmem [resolvable:$true] %s290
          %296 = dma.hbm_to_vmem [thread:$0]  %s289, 256, %s291, %s279, 128, 128, 8
        $region28: #{_forward_impl.5} parent=19 // pred_fallthru
          _
      $region20: #{_forward_impl.5} parent=5 // pred_fallthru
        _
      %p297 = scmp.le.s32.totalorder 1, %s21
      %p298 = scmp.lt.s32.totalorder %s21, 3
      %p299 = pnand %p297, %p298
      %p300 = pneg %p299
      // Predicated region
      $region29: #{_forward_impl.5} parent=5 // pred_check
        _
      $region30: #{_forward_impl.5} parent=5 // pred_check_branch
        %302 = sbr.rel (%p299) target = $region32
      $region31: #{_forward_impl.5} parent=5 // pred_region
        %s303 = ssub.s32 %s21, 1
        %s304 = sand.u32 %s34, 1
        %s305 = scalar_lea.sflag [#allocation3], %s304
        %s306 = sand.u32 %s34, 1
        %s307 = smul.addr %s306, 16
        %s308 = scalar_lea.vmem [#allocation2], %s307
        // Predicated region
        $region33: #{_forward_impl.5} parent=31 // pred_check
          %p309 = pneg %p47
        $region34: #{_forward_impl.5} parent=31 // pred_check_branch
          %311 = sbr.rel (%p309) target = $region36
        $region35: #{_forward_impl.5} parent=31 // pred_region
          %313 = dma.done %s305, 256
        $region36: #{_forward_impl.5} parent=31 // pred_fallthru
          _
        %s314 = sand.u32 %s60, 1
        %s315 = scalar_lea.sflag [#allocation6], %s314
        %s316 = sand.u32 %s60, 1
        %s317 = smul.addr %s316, 16
        %s318 = scalar_lea.vmem [#allocation5], %s317
        // Predicated region
        $region37: #{_forward_impl.5} parent=31 // pred_check
          %p319 = pneg %p73
        $region38: #{_forward_impl.5} parent=31 // pred_check_branch
          %321 = sbr.rel (%p319) target = $region40
        $region39: #{_forward_impl.5} parent=31 // pred_region
          %323 = dma.done %s315, 256
        $region40: #{_forward_impl.5} parent=31 // pred_fallthru
          _
        // Predicated region
        $region41: #{_forward_impl.5} parent=31 // pred_check
          %p324 = pneg %p94
        $region42: #{_forward_impl.5} parent=31 // pred_check_branch
          %326 = sbr.rel (%p324) target = $region44
        $region43: #{_forward_impl.5} parent=31 // pred_region
          %328 = dma.done [#allocation4], 16
        $region44: #{_forward_impl.5} parent=31 // pred_fallthru
          _
        %329 = sfence
        %s330 = sand.u32 %s34, 1
        %s331 = scalar_lea.sflag [#allocation3], %s330
        %s332 = sand.u32 %s34, 1
        %s333 = smul.addr %s332, 16
        %s334 = scalar_lea.vmem [#allocation2], %s333
        %p335 = pneg %p47
        %p336 = pneg %p44
        %s337 = sand.u32 %s60, 1
        %s338 = scalar_lea.sflag [#allocation6], %s337
        %s339 = sand.u32 %s60, 1
        %s340 = smul.addr %s339, 16
        %s341 = scalar_lea.vmem [#allocation5], %s340
        %p342 = pneg %p73
        %p343 = pneg %p70
        %p344 = pneg %p94
        %p345 = pneg %p91
        %p346 = pneg %p120
        %p347 = pneg %p117
        %p348 = scmp.lt.s32.totalorder %s26, 1
        %s349 = scalar_select %p348, %s26, 1
        %s350 = smul.addr %s349, 6
        %s351 = smul.addr %s350, 8
        %s352 = scalar_lea.vmem %s3, %s351
        %p353 = pneg %p146
        %p354 = pneg %p143
        %p355 = scmp.lt.s32.totalorder %s26, 1
        %s356 = scalar_select %p355, %s26, 1
        %s357 = smul.addr %s356, 6
        %s358 = smul.addr %s357, 8
        %s359 = scalar_lea.vmem %s4, %s358
        %p360 = pneg %p172
        %p361 = pneg %p169
        %p362 = scmp.lt.s32.totalorder %s26, 1
        %s363 = scalar_select %p362, %s26, 1
        %s364 = smul.addr %s363, 2
        %s365 = smul.addr %s364, 8
        %s366 = scalar_lea.vmem %s5, %s365
        %p367 = pneg %p198
        %p368 = pneg %p195
        %p369 = scmp.lt.s32.totalorder %s26, 1
        %s370 = scalar_select %p369, %s26, 1
        %s371 = smul.addr %s370, 2
        %s372 = smul.addr %s371, 8
        %s373 = scalar_lea.vmem %s6, %s372
        %p374 = pneg %p224
        %p375 = pneg %p221
        %p376 = scmp.lt.s32.totalorder %s26, 1
        %s377 = scalar_select %p376, %s26, 1
        %s378 = smul.addr %s377, 2
        %s379 = smul.addr %s378, 8
        %s380 = scalar_lea.vmem %s7, %s379
        %p381 = scmp.lt.s32.totalorder %s26, 1
        %s382 = scalar_select %p381, %s26, 1
        %s383 = smul.addr %s382, 6
        %s384 = smul.addr %s383, 8
        %s385 = scalar_lea.vmem %s3, %s384
        %p386 = scmp.lt.s32.totalorder %s26, 1
        %s387 = scalar_select %p386, %s26, 1
        %s388 = smul.addr %s387, 6
        %s389 = smul.addr %s388, 8
        %s390 = scalar_lea.vmem %s4, %s389
        %p391 = scmp.lt.s32.totalorder %s26, 1
        %s392 = scalar_select %p391, %s26, 1
        %s393 = smul.addr %s392, 2
        %s394 = smul.addr %s393, 8
        %s395 = scalar_lea.vmem %s5, %s394
        %p396 = scmp.lt.s32.totalorder %s26, 1
        %s397 = scalar_select %p396, %s26, 1
        %s398 = smul.addr %s397, 2
        %s399 = smul.addr %s398, 8
        %s400 = scalar_lea.vmem %s6, %s399
        %p401 = scmp.lt.s32.totalorder %s26, 1
        %s402 = scalar_select %p401, %s26, 1
        %s403 = smul.addr %s402, 2
        %s404 = smul.addr %s403, 8
        %s405 = scalar_lea.vmem %s7, %s404
        %s406 = sld [smem:[#allocation7 + %s26]]
        %v407 = vstv %s406
        %v408 = vrcp.pop %v407
        %v409 = vmul.f32 %v407, %v408
        %v410 = vsub.f32 1.0, %v409
        %v411 = vmul.f32 %v408, %v410
        %v412 = vadd.f32 %v408, %v411
        %vm413 = vweird.f32 %v407
        %vm414 = vweird.f32 %v408
        %vm415 = vmor %vm413, %vm414
        %v416 = vsel %vm415, %v408, %v412
        %v417 = vand.u32 2147483647, %v407
        %vm418 = vcmp.eq.f32.partialorder %v417, 8.507059e+37
        %v419 = vand.u32 %v407, 2147483648
        %v420 = vor.u32 1.1754944e-38, %v419
        %v421 = vsel %vm418, %v420, %v416
        %s422 = vtos %v421
        %v423 = vld [vmem:[%s308] sm:$0xff]
        %v424 = vld [vmem:[%s308 + $0x8] sm:$0xff]
        %v425 = vld [vmem:[%s318] sm:$0xff]
        %v426 = vld [vmem:[%s318 + $0x8] sm:$0xff]
        %v427 = vlaneseq
        %v428 = vand.u32 %v427, 127
        %v429 = vcvt.s32.f32 %v428
        %v430 = vsub.f32 %v429, 7.5
        %v431 = vlaneseq
        %v432 = vshrl.u32 %v431, 7
        %v433 = vadd.s32 %v432, 8
        %v434 = vcvt.s32.f32 %v432
        %v435 = vcvt.s32.f32 %v433
        %v436 = vsub.f32 %v434, 7.5
        %v437 = vsub.f32 %v435, 7.5
        %vm438 = vcmp.gt.f32.partialorder %v425, -1e-08
        %vm439 = vcmp.gt.f32.partialorder %v426, -1e-08
        %v440 = vsel %vm438, 1.0, 0.0
        %v441 = vsel %vm439, 1.0, 0.0
        %vm442 = vcmp.lt.s32.totalorder %v432, 15
        %vm443 = vcmp.lt.s32.totalorder %v433, 15
        %vm444 = vcmp.lt.s32.totalorder %v428, 15
        %vm445 = vmand %vm442, %vm444
        %vm446 = vmand %vm443, %vm444
        %v447 = vsel %vm445, 1, 0
        %v448 = vsel %vm446, 1, 0
        %v449 = vcvt.s32.f32 %v447
        %v450 = vcvt.s32.f32 %v448
        %v451 = vmul.f32 %v440, %v449
        %v452 = vmul.f32 %v441, %v450
        %455 = vrot.lane.b32.xlu0 %v423, 127
        %v456 = vpop.permute.xlu0 %455
        %457 = vrot.lane.b32.xlu0 %v424, 127
        %v458 = vpop.permute.xlu0 %457
        %461 = vrot.lane.b32.xlu0 %v423, 15
        %v462 = vpop.permute.xlu0 %461
        %463 = vrot.lane.b32.xlu0 %v424, 15
        %v464 = vpop.permute.xlu0 %463
        %vm467 = vcmask 121856
        %v468 = vsel %vm467, %v456, %v462
        %v469 = vsel %vm467, %v458, %v464
        %vm470 = vcmask 1046528
        %v471 = vrot.slane %v423, 1
        %v472 = vrot.slane %v424, 1
        %v473 = vsel %vm470, %v471, %v472
        %v477 = vsel %vm470, %v472, %v471
        %v478 = vsub.f32 %v468, %v423
        %v479 = vsub.f32 %v469, %v424
        %v480 = vsub.f32 %v473, %v423
        %v481 = vsub.f32 %v477, %v424
        %v482 = vmul.f32 %v478, %v430
        %v483 = vmul.f32 %v479, %v430
        %v484 = vadd.f32 %v482, %v468
        %v485 = vadd.f32 %v483, %v469
        %v486 = vstv %s422
        %v487 = vmul.f32 %v484, %v486
        %v488 = vmul.f32 %v485, %v486
        %v489 = vmul.f32 %v478, %v436
        %v490 = vmul.f32 %v479, %v437
        %v491 = vmul.f32 %v489, %v486
        %v492 = vmul.f32 %v490, %v486
        %v493 = vmul.f32 %v480, %v430
        %v494 = vmul.f32 %v481, %v430
        %v495 = vmul.f32 %v493, %v486
        %v496 = vmul.f32 %v494, %v486
        %v497 = vmul.f32 %v480, %v436
        %v498 = vmul.f32 %v481, %v437
        %v499 = vadd.f32 %v497, %v473
        %v500 = vadd.f32 %v498, %v477
        %v501 = vmul.f32 %v499, %v486
        %v502 = vmul.f32 %v500, %v486
        %v503 = vmul.f32 %v491, %v480
        %v504 = vmul.f32 %v492, %v481
        %v505 = vmul.f32 %v478, %v501
        %v506 = vmul.f32 %v479, %v502
        %v507 = vsub.f32 %v503, %v505
        %v508 = vsub.f32 %v504, %v506
        %v509 = vmul.f32 %v478, %v495
        %v510 = vmul.f32 %v479, %v496
        %v511 = vmul.f32 %v487, %v480
        %v512 = vmul.f32 %v488, %v481
        %v513 = vsub.f32 %v509, %v511
        %v514 = vsub.f32 %v510, %v512
        %v515 = vmul.f32 %v487, %v501
        %v516 = vmul.f32 %v488, %v502
        %v517 = vmul.f32 %v491, %v495
        %v518 = vmul.f32 %v492, %v496
        %v519 = vsub.f32 %v515, %v517
        %v520 = vsub.f32 %v516, %v518
        %v521 = vmul.f32 %v507, %v507
        %v522 = vmul.f32 %v508, %v508
        %v523 = vmul.f32 %v513, %v513
        %v524 = vmul.f32 %v514, %v514
        %v525 = vadd.f32 %v521, %v523
        %v526 = vadd.f32 %v522, %v524
        %v527 = vmul.f32 %v519, %v519
        %v528 = vmul.f32 %v520, %v520
        %v529 = vadd.f32 %v525, %v527
        %v530 = vadd.f32 %v526, %v528
        %v531 = vadd.f32 %v529, 1e-12
        %v532 = vadd.f32 %v530, 1e-12
        %v533 = vrsqrt.pop %v531
        %v534 = vmul.f32 %v533, %v531
        %v535 = vmul.f32 %v534, %v533
        %v536 = vmul.f32 0.5, %v535
        %v537 = vsub.f32 1.5, %v536
        %v538 = vmul.f32 %v533, %v537
        %vm539 = vweird.f32 %v531
        %vm540 = vweird.f32 %v533
        %vm541 = vmor %vm539, %vm540
        %v542 = vsel %vm541, %v533, %v538
        %v543 = vrsqrt.pop %v532
        %v544 = vmul.f32 %v543, %v532
        %v545 = vmul.f32 %v544, %v543
        %v546 = vmul.f32 0.5, %v545
        %v547 = vsub.f32 1.5, %v546
        %v548 = vmul.f32 %v543, %v547
        %vm549 = vweird.f32 %v532
        %vm550 = vweird.f32 %v543
        %vm551 = vmor %vm549, %vm550
        %v552 = vsel %vm551, %v543, %v548
        %v553 = vmul.f32 %v507, %v542
        %v554 = vmul.f32 %v508, %v552
        %v555 = vmul.f32 %v553, %v451
        %v556 = vmul.f32 %v554, %v452
        %v557 = vmul.f32 %v513, %v542
        %v558 = vmul.f32 %v514, %v552
        %v559 = vmul.f32 %v557, %v451
        %v560 = vmul.f32 %v558, %v452
        %v561 = vmul.f32 %v519, %v542
        %v562 = vmul.f32 %v520, %v552
        %v563 = vmul.f32 %v561, %v451
        %v564 = vmul.f32 %v562, %v452
        %567 = vrot.lane.b32.xlu0 %v425, 127
        %v568 = vpop.permute.xlu0 %567
        %569 = vrot.lane.b32.xlu0 %v426, 127
        %v570 = vpop.permute.xlu0 %569
        %573 = vrot.lane.b32.xlu0 %v425, 15
        %v574 = vpop.permute.xlu0 %573
        %575 = vrot.lane.b32.xlu0 %v426, 15
        %v576 = vpop.permute.xlu0 %575
        %v579 = vsel %vm467, %v568, %v574
        %v580 = vsel %vm467, %v570, %v576
        %v581 = vrot.slane %v425, 1
        %v582 = vrot.slane %v426, 1
        %v583 = vsel %vm470, %v581, %v582
        %v587 = vsel %vm470, %v582, %v581
        %v588 = vsub.f32 %v579, %v425
        %v589 = vsub.f32 %v580, %v426
        %v590 = vsub.f32 %v583, %v425
        %v591 = vsub.f32 %v587, %v426
        %v592 = vmul.f32 %v588, %v430
        %v593 = vmul.f32 %v589, %v430
        %v594 = vadd.f32 %v592, %v579
        %v595 = vadd.f32 %v593, %v580
        %v596 = vmul.f32 %v594, %v486
        %v597 = vmul.f32 %v595, %v486
        %v598 = vmul.f32 %v588, %v436
        %v599 = vmul.f32 %v589, %v437
        %v600 = vmul.f32 %v598, %v486
        %v601 = vmul.f32 %v599, %v486
        %v602 = vmul.f32 %v590, %v430
        %v603 = vmul.f32 %v591, %v430
        %v604 = vmul.f32 %v602, %v486
        %v605 = vmul.f32 %v603, %v486
        %v606 = vmul.f32 %v590, %v436
        %v607 = vmul.f32 %v591, %v437
        %v608 = vadd.f32 %v606, %v583
        %v609 = vadd.f32 %v607, %v587
        %v610 = vmul.f32 %v608, %v486
        %v611 = vmul.f32 %v609, %v486
        %v612 = vmul.f32 %v600, %v590
        %v613 = vmul.f32 %v601, %v591
        %v614 = vmul.f32 %v588, %v610
        %v615 = vmul.f32 %v589, %v611
        %v616 = vsub.f32 %v612, %v614
        %v617 = vsub.f32 %v613, %v615
        %v618 = vmul.f32 %v588, %v604
        %v619 = vmul.f32 %v589, %v605
        %v620 = vmul.f32 %v596, %v590
        %v621 = vmul.f32 %v597, %v591
        %v622 = vsub.f32 %v618, %v620
        %v623 = vsub.f32 %v619, %v621
        %v624 = vmul.f32 %v596, %v610
        %v625 = vmul.f32 %v597, %v611
        %v626 = vmul.f32 %v600, %v604
        %v627 = vmul.f32 %v601, %v605
        %v628 = vsub.f32 %v624, %v626
        %v629 = vsub.f32 %v625, %v627
        %v630 = vmul.f32 %v616, %v616
        %v631 = vmul.f32 %v617, %v617
        %v632 = vmul.f32 %v622, %v622
        %v633 = vmul.f32 %v623, %v623
        %v634 = vadd.f32 %v630, %v632
        %v635 = vadd.f32 %v631, %v633
        %v636 = vmul.f32 %v628, %v628
        %v637 = vmul.f32 %v629, %v629
        %v638 = vadd.f32 %v634, %v636
        %v639 = vadd.f32 %v635, %v637
        %v640 = vadd.f32 %v638, 1e-12
        %v641 = vadd.f32 %v639, 1e-12
        %v642 = vrsqrt.pop %v640
        %v643 = vmul.f32 %v642, %v640
        %v644 = vmul.f32 %v643, %v642
        %v645 = vmul.f32 0.5, %v644
        %v646 = vsub.f32 1.5, %v645
        %v647 = vmul.f32 %v642, %v646
        %vm648 = vweird.f32 %v640
        %vm649 = vweird.f32 %v642
        %vm650 = vmor %vm648, %vm649
        %v651 = vsel %vm650, %v642, %v647
        %v652 = vrsqrt.pop %v641
        %v653 = vmul.f32 %v652, %v641
        %v654 = vmul.f32 %v653, %v652
        %v655 = vmul.f32 0.5, %v654
        %v656 = vsub.f32 1.5, %v655
        %v657 = vmul.f32 %v652, %v656
        %vm658 = vweird.f32 %v641
        %vm659 = vweird.f32 %v652
        %vm660 = vmor %vm658, %vm659
        %v661 = vsel %vm660, %v652, %v657
        %v662 = vmul.f32 %v616, %v651
        %v663 = vmul.f32 %v617, %v661
        %v664 = vmul.f32 %v662, %v451
        %v665 = vmul.f32 %v663, %v452
        %v666 = vmul.f32 %v622, %v651
        %v667 = vmul.f32 %v623, %v661
        %v668 = vmul.f32 %v666, %v451
        %v669 = vmul.f32 %v667, %v452
        %v670 = vmul.f32 %v628, %v651
        %v671 = vmul.f32 %v629, %v661
        %v672 = vmul.f32 %v670, %v451
        %v673 = vmul.f32 %v671, %v452
        %vm674 = vcmask 130048
        %675 = vst.msk [vmem:[%s385] sm:$0xff] %vm674, %v555
        %676 = vst.msk [vmem:[%s385 + $0x8] sm:$0xff] %vm674, %v556
        %677 = vst.msk [vmem:[%s390] sm:$0xff] %vm674, %v664
        %678 = vst.msk [vmem:[%s390 + $0x8] sm:$0xff] %vm674, %v665
        %s679 = scalar_lea.vmem %s385, 16
        %680 = vst.msk [vmem:[%s679] sm:$0xff] %vm674, %v559
        %681 = vst.msk [vmem:[%s679 + $0x8] sm:$0xff] %vm674, %v560
        %s682 = scalar_lea.vmem %s390, 16
        %683 = vst.msk [vmem:[%s682] sm:$0xff] %vm674, %v668
        %684 = vst.msk [vmem:[%s682 + $0x8] sm:$0xff] %vm674, %v669
        %s685 = scalar_lea.vmem %s385, 32
        %686 = vst.msk [vmem:[%s685] sm:$0xff] %vm674, %v563
        %687 = vst.msk [vmem:[%s685 + $0x8] sm:$0xff] %vm674, %v564
        %s688 = scalar_lea.vmem %s390, 32
        %689 = vst.msk [vmem:[%s688] sm:$0xff] %vm674, %v672
        %690 = vst.msk [vmem:[%s688 + $0x8] sm:$0xff] %vm674, %v673
        %v692 = vrot.slane %v665, 7
        %vm695 = vcmask 1040384
        %v696 = vrot.slane %v664, 7
        %v697 = vsel %vm695, %v696, %v692
        %v700 = vsel %vm695, %v692, %v696
        %v701 = vrot.slane %v664, 1
        %v702 = vrot.slane %v665, 1
        %v703 = vsel %vm470, %v701, %v702
        %v707 = vsel %vm470, %v702, %v701
        %v708 = vmul.f32 %v664, 2.0
        %v709 = vmul.f32 %v665, 2.0
        %v710 = vadd.f32 %v700, %v708
        %v711 = vadd.f32 %v697, %v709
        %v712 = vadd.f32 %v710, %v703
        %v713 = vadd.f32 %v711, %v707
        %v714 = vsub.f32 %v700, %v703
        %v715 = vsub.f32 %v697, %v707
        %718 = vrot.lane.b32.xlu0 %v712, 127
        %v719 = vpop.permute.xlu0 %718
        %720 = vrot.lane.b32.xlu0 %v713, 127
        %v721 = vpop.permute.xlu0 %720
        %724 = vrot.lane.b32.xlu0 %v712, 15
        %v725 = vpop.permute.xlu0 %724
        %726 = vrot.lane.b32.xlu0 %v713, 15
        %v727 = vpop.permute.xlu0 %726
        %v730 = vsel %vm467, %v719, %v725
        %v731 = vsel %vm467, %v721, %v727
        %732 = vrot.lane.b32.xlu0 %v712, 113
        %v733 = vpop.permute.xlu0 %732
        %734 = vrot.lane.b32.xlu0 %v713, 113
        %v735 = vpop.permute.xlu0 %734
        %738 = vrot.lane.b32.xlu0 %v712, 1
        %v739 = vpop.permute.xlu0 %738
        %740 = vrot.lane.b32.xlu0 %v713, 1
        %v741 = vpop.permute.xlu0 %740
        %vm744 = vcmask 7168
        %v745 = vsel %vm744, %v733, %v739
        %v746 = vsel %vm744, %v735, %v741
        %v747 = vsub.f32 %v730, %v745
        %v748 = vsub.f32 %v731, %v746
        %751 = vrot.lane.b32.xlu0 %v714, 113
        %v752 = vpop.permute.xlu0 %751
        %753 = vrot.lane.b32.xlu0 %v715, 113
        %v754 = vpop.permute.xlu0 %753
        %757 = vrot.lane.b32.xlu0 %v714, 1
        %v758 = vpop.permute.xlu0 %757
        %759 = vrot.lane.b32.xlu0 %v715, 1
        %v760 = vpop.permute.xlu0 %759
        %v763 = vsel %vm744, %v752, %v758
        %v764 = vsel %vm744, %v754, %v760
        %v765 = vmul.f32 %v714, 2.0
        %v766 = vmul.f32 %v715, 2.0
        %v767 = vadd.f32 %v763, %v765
        %v768 = vadd.f32 %v764, %v766
        %769 = vrot.lane.b32.xlu0 %v714, 127
        %v770 = vpop.permute.xlu0 %769
        %771 = vrot.lane.b32.xlu0 %v715, 127
        %v772 = vpop.permute.xlu0 %771
        %775 = vrot.lane.b32.xlu0 %v714, 15
        %v776 = vpop.permute.xlu0 %775
        %777 = vrot.lane.b32.xlu0 %v715, 15
        %v778 = vpop.permute.xlu0 %777
        %v781 = vsel %vm467, %v770, %v776
        %v782 = vsel %vm467, %v772, %v778
        %v783 = vadd.f32 %v767, %v781
        %v784 = vadd.f32 %v768, %v782
        %v785 = vand.u32 2147483647, %v747
        %v786 = vand.u32 2147483647, %v748
        %v787 = vadd.f32 %v785, 0.0
        %v788 = vadd.f32 %v786, 0.0
        %v789 = vand.u32 2147483647, %v783
        %v790 = vand.u32 2147483647, %v784
        %v791 = vadd.f32 %v789, 0.0
        %v792 = vadd.f32 %v790, 0.0
        %v794 = vrot.slane %v669, 7
        %v797 = vrot.slane %v668, 7
        %v798 = vsel %vm695, %v797, %v794
        %v801 = vsel %vm695, %v794, %v797
        %v802 = vrot.slane %v668, 1
        %v803 = vrot.slane %v669, 1
        %v804 = vsel %vm470, %v802, %v803
        %v808 = vsel %vm470, %v803, %v802
        %v809 = vmul.f32 %v668, 2.0
        %v810 = vmul.f32 %v669, 2.0
        %v811 = vadd.f32 %v801, %v809
        %v812 = vadd.f32 %v798, %v810
        %v813 = vadd.f32 %v811, %v804
        %v814 = vadd.f32 %v812, %v808
        %v815 = vsub.f32 %v801, %v804
        %v816 = vsub.f32 %v798, %v808
        %819 = vrot.lane.b32.xlu0 %v813, 127
        %v820 = vpop.permute.xlu0 %819
        %821 = vrot.lane.b32.xlu0 %v814, 127
        %v822 = vpop.permute.xlu0 %821
        %825 = vrot.lane.b32.xlu0 %v813, 15
        %v826 = vpop.permute.xlu0 %825
        %827 = vrot.lane.b32.xlu0 %v814, 15
        %v828 = vpop.permute.xlu0 %827
        %v831 = vsel %vm467, %v820, %v826
        %v832 = vsel %vm467, %v822, %v828
        %833 = vrot.lane.b32.xlu0 %v813, 113
        %v834 = vpop.permute.xlu0 %833
        %835 = vrot.lane.b32.xlu0 %v814, 113
        %v836 = vpop.permute.xlu0 %835
        %839 = vrot.lane.b32.xlu0 %v813, 1
        %v840 = vpop.permute.xlu0 %839
        %841 = vrot.lane.b32.xlu0 %v814, 1
        %v842 = vpop.permute.xlu0 %841
        %v845 = vsel %vm744, %v834, %v840
        %v846 = vsel %vm744, %v836, %v842
        %v847 = vsub.f32 %v831, %v845
        %v848 = vsub.f32 %v832, %v846
        %851 = vrot.lane.b32.xlu0 %v815, 113
        %v852 = vpop.permute.xlu0 %851
        %853 = vrot.lane.b32.xlu0 %v816, 113
        %v854 = vpop.permute.xlu0 %853
        %857 = vrot.lane.b32.xlu0 %v815, 1
        %v858 = vpop.permute.xlu0 %857
        %859 = vrot.lane.b32.xlu0 %v816, 1
        %v860 = vpop.permute.xlu0 %859
        %v863 = vsel %vm744, %v852, %v858
        %v864 = vsel %vm744, %v854, %v860
        %v865 = vmul.f32 %v815, 2.0
        %v866 = vmul.f32 %v816, 2.0
        %v867 = vadd.f32 %v863, %v865
        %v868 = vadd.f32 %v864, %v866
        %869 = vrot.lane.b32.xlu0 %v815, 127
        %v870 = vpop.permute.xlu0 %869
        %871 = vrot.lane.b32.xlu0 %v816, 127
        %v872 = vpop.permute.xlu0 %871
        %875 = vrot.lane.b32.xlu0 %v815, 15
        %v876 = vpop.permute.xlu0 %875
        %877 = vrot.lane.b32.xlu0 %v816, 15
        %v878 = vpop.permute.xlu0 %877
        %v881 = vsel %vm467, %v870, %v876
        %v882 = vsel %vm467, %v872, %v878
        %v883 = vadd.f32 %v867, %v881
        %v884 = vadd.f32 %v868, %v882
        %v885 = vand.u32 2147483647, %v847
        %v886 = vand.u32 2147483647, %v848
        %v887 = vadd.f32 %v787, %v885
        %v888 = vadd.f32 %v788, %v886
        %v889 = vand.u32 2147483647, %v883
        %v890 = vand.u32 2147483647, %v884
        %v891 = vadd.f32 %v791, %v889
        %v892 = vadd.f32 %v792, %v890
        %v894 = vrot.slane %v673, 7
        %v897 = vrot.slane %v672, 7
        %v898 = vsel %vm695, %v897, %v894
        %v901 = vsel %vm695, %v894, %v897
        %v902 = vrot.slane %v672, 1
        %v903 = vrot.slane %v673, 1
        %v904 = vsel %vm470, %v902, %v903
        %v908 = vsel %vm470, %v903, %v902
        %v909 = vmul.f32 %v672, 2.0
        %v910 = vmul.f32 %v673, 2.0
        %v911 = vadd.f32 %v901, %v909
        %v912 = vadd.f32 %v898, %v910
        %v913 = vadd.f32 %v911, %v904
        %v914 = vadd.f32 %v912, %v908
        %v915 = vsub.f32 %v901, %v904
        %v916 = vsub.f32 %v898, %v908
        %919 = vrot.lane.b32.xlu0 %v913, 127
        %v920 = vpop.permute.xlu0 %919
        %921 = vrot.lane.b32.xlu0 %v914, 127
        %v922 = vpop.permute.xlu0 %921
        %925 = vrot.lane.b32.xlu0 %v913, 15
        %v926 = vpop.permute.xlu0 %925
        %927 = vrot.lane.b32.xlu0 %v914, 15
        %v928 = vpop.permute.xlu0 %927
        %v931 = vsel %vm467, %v920, %v926
        %v932 = vsel %vm467, %v922, %v928
        %933 = vrot.lane.b32.xlu0 %v913, 113
        %v934 = vpop.permute.xlu0 %933
        %935 = vrot.lane.b32.xlu0 %v914, 113
        %v936 = vpop.permute.xlu0 %935
        %939 = vrot.lane.b32.xlu0 %v913, 1
        %v940 = vpop.permute.xlu0 %939
        %941 = vrot.lane.b32.xlu0 %v914, 1
        %v942 = vpop.permute.xlu0 %941
        %v945 = vsel %vm744, %v934, %v940
        %v946 = vsel %vm744, %v936, %v942
        %v947 = vsub.f32 %v931, %v945
        %v948 = vsub.f32 %v932, %v946
        %951 = vrot.lane.b32.xlu0 %v915, 113
        %v952 = vpop.permute.xlu0 %951
        %953 = vrot.lane.b32.xlu0 %v916, 113
        %v954 = vpop.permute.xlu0 %953
        %957 = vrot.lane.b32.xlu0 %v915, 1
        %v958 = vpop.permute.xlu0 %957
        %959 = vrot.lane.b32.xlu0 %v916, 1
        %v960 = vpop.permute.xlu0 %959
        %v963 = vsel %vm744, %v952, %v958
        %v964 = vsel %vm744, %v954, %v960
        %v965 = vmul.f32 %v915, 2.0
        %v966 = vmul.f32 %v916, 2.0
        %v967 = vadd.f32 %v963, %v965
        %v968 = vadd.f32 %v964, %v966
        %969 = vrot.lane.b32.xlu0 %v915, 127
        %v970 = vpop.permute.xlu0 %969
        %971 = vrot.lane.b32.xlu0 %v916, 127
        %v972 = vpop.permute.xlu0 %971
        %975 = vrot.lane.b32.xlu0 %v915, 15
        %v976 = vpop.permute.xlu0 %975
        %977 = vrot.lane.b32.xlu0 %v916, 15
        %v978 = vpop.permute.xlu0 %977
        %v981 = vsel %vm467, %v970, %v976
        %v982 = vsel %vm467, %v972, %v978
        %v983 = vadd.f32 %v967, %v981
        %v984 = vadd.f32 %v968, %v982
        %v985 = vand.u32 2147483647, %v947
        %v986 = vand.u32 2147483647, %v948
        %v987 = vadd.f32 %v887, %v985
        %v988 = vadd.f32 %v888, %v986
        %v989 = vand.u32 2147483647, %v983
        %v990 = vand.u32 2147483647, %v984
        %v991 = vadd.f32 %v891, %v989
        %v992 = vadd.f32 %v892, %v990
        %v993 = vmul.f32 %v987, 0.33333334
        %v994 = vmul.f32 %v988, 0.33333334
        %v995 = vmul.f32 %v991, 0.33333334
        %v996 = vmul.f32 %v992, 0.33333334
        %vm997 = vcmp.ge.s32.totalorder %v432, 1
        %vm998 = vcmp.ge.s32.totalorder %v433, 1
        %vm999 = vmand %vm997, %vm442
        %vm1000 = vmand %vm998, %vm443
        %vm1001 = vcmp.ge.s32.totalorder %v428, 1
        %vm1002 = vmand %vm999, %vm1001
        %vm1003 = vmand %vm1000, %vm1001
        %vm1004 = vmand %vm1002, %vm444
        %vm1005 = vmand %vm1003, %vm444
        %v1006 = vsel %vm1004, 1, 0
        %v1007 = vsel %vm1005, 1, 0
        %v1008 = vcvt.s32.f32 %v1006
        %v1009 = vcvt.s32.f32 %v1007
        %v1010 = vmul.f32 %v993, %v993
        %v1011 = vmul.f32 %v994, %v994
        %v1012 = vmul.f32 %v995, %v995
        %v1013 = vmul.f32 %v996, %v996
        %v1014 = vadd.f32 %v1010, %v1012
        %v1015 = vadd.f32 %v1011, %v1013
        %v1016 = vrsqrt.pop %v1014
        %v1017 = vmul.f32 %v1016, %v1014
        %v1018 = vmul.f32 %v1017, %v1016
        %v1019 = vmul.f32 0.5, %v1018
        %v1020 = vsub.f32 1.5, %v1019
        %v1021 = vmul.f32 %v1016, %v1020
        %v1022 = vmul.f32 %v1014, %v1021
        %vm1023 = vcmp.eq.f32.partialorder %v1014, inf
        %v1024 = vsel %vm1023, %v1014, %v1022
        %vm1025 = vcmp.eq.f32.partialorder %v1014, 0.0
        %v1026 = vand.u32 %v1014, 2147483648
        %v1027 = vsel %vm1025, %v1026, %v1024
        %v1028 = vrsqrt.pop %v1015
        %v1029 = vmul.f32 %v1028, %v1015
        %v1030 = vmul.f32 %v1029, %v1028
        %v1031 = vmul.f32 0.5, %v1030
        %v1032 = vsub.f32 1.5, %v1031
        %v1033 = vmul.f32 %v1028, %v1032
        %v1034 = vmul.f32 %v1015, %v1033
        %vm1035 = vcmp.eq.f32.partialorder %v1015, inf
        %v1036 = vsel %vm1035, %v1015, %v1034
        %vm1037 = vcmp.eq.f32.partialorder %v1015, 0.0
        %v1038 = vand.u32 %v1015, 2147483648
        %v1039 = vsel %vm1037, %v1038, %v1036
        %v1040 = vmul.f32 %v1027, %v1008
        %v1041 = vmul.f32 %v1039, %v1009
        %v1042 = vmax.f32 %v1040, 1e-30
        %v1043 = vmax.f32 %v1041, 1e-30
        %vm1044 = vcmp.gt.f32.partialorder %v1040, 0.0
        %vm1045 = vcmp.gt.f32.partialorder %v1041, 0.0
        %v1046 = vrcp.pop %v1042
        %v1047 = vmul.f32 %v1042, %v1046
        %v1048 = vsub.f32 1.0, %v1047
        %v1049 = vmul.f32 %v1046, %v1048
        %v1050 = vadd.f32 %v1046, %v1049
        %vm1051 = vweird.f32 %v1042
        %vm1052 = vweird.f32 %v1046
        %vm1053 = vmor %vm1051, %vm1052
        %v1054 = vsel %vm1053, %v1046, %v1050
        %v1055 = vand.u32 2147483647, %v1042
        %vm1056 = vcmp.eq.f32.partialorder %v1055, 8.507059e+37
        %v1057 = vand.u32 %v1042, 2147483648
        %v1058 = vor.u32 1.1754944e-38, %v1057
        %v1059 = vsel %vm1056, %v1058, %v1054
        %v1060 = vmul.f32 %v993, %v1059
        %v1061 = vrcp.pop %v1043
        %v1062 = vmul.f32 %v1043, %v1061
        %v1063 = vsub.f32 1.0, %v1062
        %v1064 = vmul.f32 %v1061, %v1063
        %v1065 = vadd.f32 %v1061, %v1064
        %vm1066 = vweird.f32 %v1043
        %vm1067 = vweird.f32 %v1061
        %vm1068 = vmor %vm1066, %vm1067
        %v1069 = vsel %vm1068, %v1061, %v1065
        %v1070 = vand.u32 2147483647, %v1043
        %vm1071 = vcmp.eq.f32.partialorder %v1070, 8.507059e+37
        %v1072 = vand.u32 %v1043, 2147483648
        %v1073 = vor.u32 1.1754944e-38, %v1072
        %v1074 = vsel %vm1071, %v1073, %v1069
        %v1075 = vmul.f32 %v994, %v1074
        %v1076 = vsel %vm1044, %v1060, 1.0
        %v1077 = vsel %vm1045, %v1075, 1.0
        %1078 = vst.msk [vmem:[%s400] sm:$0xff] %vm674, %v1076
        %1079 = vst.msk [vmem:[%s400 + $0x8] sm:$0xff] %vm674, %v1077
        %v1080 = vmul.f32 %v995, %v1059
        %v1081 = vmul.f32 %v996, %v1074
        %v1082 = vsel %vm1044, %v1080, 0.0
        %v1083 = vsel %vm1045, %v1081, 0.0
        %1084 = vst.msk [vmem:[%s405] sm:$0xff] %vm674, %v1082
        %1085 = vst.msk [vmem:[%s405 + $0x8] sm:$0xff] %vm674, %v1083
        %vm1086 = vcmp.ge.s32.totalorder %v432, 5
        %vm1087 = vcmp.ge.s32.totalorder %v433, 5
        %vm1088 = vcmp.lt.s32.totalorder %v432, 11
        %vm1089 = vcmp.lt.s32.totalorder %v433, 11
        %vm1090 = vmand %vm1086, %vm1088
        %vm1091 = vmand %vm1087, %vm1089
        %vm1092 = vcmp.ge.s32.totalorder %v428, 5
        %vm1093 = vmand %vm1090, %vm1092
        %vm1094 = vmand %vm1091, %vm1092
        %vm1095 = vcmp.lt.s32.totalorder %v428, 11
        %vm1096 = vmand %vm1093, %vm1095
        %vm1097 = vmand %vm1094, %vm1095
        %v1098 = vsel %vm1096, 1, 0
        %v1099 = vsel %vm1097, 1, 0
        %v1100 = vcvt.s32.f32 %v1098
        %v1101 = vcvt.s32.f32 %v1099
        %v1102 = vmul.f32 %v1040, %v1100
        %v1103 = vmul.f32 %v1041, %v1101
        %1104 = vst.msk [vmem:[%s395] sm:$0xff] %vm674, %v1102
        %1105 = vst.msk [vmem:[%s395 + $0x8] sm:$0xff] %vm674, %v1103
        %p1106 = scmp.lt.s32.totalorder %s26, 1
        %s1107 = scalar_select %p1106, %s26, 1
        %s1108 = smul.addr %s1107, 6
        %s1109 = smul.addr %s1108, 8
        %s1110 = scalar_lea.vmem %s3, %s1109
        %p1111 = scmp.lt.s32.totalorder %s26, 1
        %s1112 = scalar_select %p1111, %s26, 1
        %s1113 = smul.addr %s1112, 6
        %s1114 = smul.addr %s1113, 8
        %s1115 = scalar_lea.vmem %s4, %s1114
        %p1116 = scmp.lt.s32.totalorder %s26, 1
        %s1117 = scalar_select %p1116, %s26, 1
        %s1118 = smul.addr %s1117, 2
        %s1119 = smul.addr %s1118, 8
        %s1120 = scalar_lea.vmem %s5, %s1119
        %p1121 = scmp.lt.s32.totalorder %s26, 1
        %s1122 = scalar_select %p1121, %s26, 1
        %s1123 = smul.addr %s1122, 2
        %s1124 = smul.addr %s1123, 8
        %s1125 = scalar_lea.vmem %s6, %s1124
        %p1126 = scmp.lt.s32.totalorder %s26, 1
        %s1127 = scalar_select %p1126, %s26, 1
        %s1128 = smul.addr %s1127, 2
        %s1129 = smul.addr %s1128, 8
        %s1130 = scalar_lea.vmem %s7, %s1129
        // Predicated region
        $region45: #{_forward_impl.5} parent=31 // pred_check
          %p1131 = pneg %p117
        $region46: #{_forward_impl.5} parent=31 // pred_check_branch
          %1133 = sbr.rel (%p1131) target = $region48
        $region47: #{_forward_impl.5} parent=31 // pred_region
          _
        $region48: #{_forward_impl.5} parent=31 // pred_fallthru
          _
        // Predicated region
        $region49: #{_forward_impl.5} parent=31 // pred_check
          %p1134 = pneg %p143
        $region50: #{_forward_impl.5} parent=31 // pred_check_branch
          %1136 = sbr.rel (%p1134) target = $region52
        $region51: #{_forward_impl.5} parent=31 // pred_region
          _
        $region52: #{_forward_impl.5} parent=31 // pred_fallthru
          _
        // Predicated region
        $region53: #{_forward_impl.5} parent=31 // pred_check
          %p1137 = pneg %p169
        $region54: #{_forward_impl.5} parent=31 // pred_check_branch
          %1139 = sbr.rel (%p1137) target = $region56
        $region55: #{_forward_impl.5} parent=31 // pred_region
          _
        $region56: #{_forward_impl.5} parent=31 // pred_fallthru
          _
        // Predicated region
        $region57: #{_forward_impl.5} parent=31 // pred_check
          %p1140 = pneg %p195
        $region58: #{_forward_impl.5} parent=31 // pred_check_branch
          %1142 = sbr.rel (%p1140) target = $region60
        $region59: #{_forward_impl.5} parent=31 // pred_region
          _
        $region60: #{_forward_impl.5} parent=31 // pred_fallthru
          _
        // Predicated region
        $region61: #{_forward_impl.5} parent=31 // pred_check
          %p1143 = pneg %p221
        $region62: #{_forward_impl.5} parent=31 // pred_check_branch
          %1145 = sbr.rel (%p1143) target = $region64
        $region63: #{_forward_impl.5} parent=31 // pred_region
          _
        $region64: #{_forward_impl.5} parent=31 // pred_fallthru
          _
      $region32: #{_forward_impl.5} parent=5 // pred_fallthru
        _
      %p1146 = scmp.le.s32.totalorder 2, %s21
      // Predicated region
      $region65: #{_forward_impl.5} parent=5 // pred_check
        %p1147 = pneg %p1146
      $region66: #{_forward_impl.5} parent=5 // pred_check_branch
        %1149 = sbr.rel (%p1147) target = $region68
      $region67: #{_forward_impl.5} parent=5 // pred_region
        %s1150 = ssub.s32 %s21, 2
        // Predicated region
        $region69: #{_forward_impl.5} parent=67 // pred_check
          %p1151 = pneg %p123
        $region70: #{_forward_impl.5} parent=67 // pred_check_branch
          %1153 = sbr.rel (%p1151) target = $region72
        $region71: #{_forward_impl.5} parent=67 // pred_region
          %p1154 = scmp.lt.s32.totalorder %s27, 1
          %s1155 = scalar_select %p1154, %s27, 1
          %s1156 = smul.addr %s1155, 6
          %s1157 = smul.addr %s1156, 8
          %s1158 = scalar_lea.vmem %s3, %s1157
        $region72: #{_forward_impl.5} parent=67 // pred_fallthru
          _
        // Predicated region
        $region73: #{_forward_impl.5} parent=67 // pred_check
          %p1159 = pneg %p149
        $region74: #{_forward_impl.5} parent=67 // pred_check_branch
          %1161 = sbr.rel (%p1159) target = $region76
        $region75: #{_forward_impl.5} parent=67 // pred_region
          %p1162 = scmp.lt.s32.totalorder %s27, 1
          %s1163 = scalar_select %p1162, %s27, 1
          %s1164 = smul.addr %s1163, 6
          %s1165 = smul.addr %s1164, 8
          %s1166 = scalar_lea.vmem %s4, %s1165
        $region76: #{_forward_impl.5} parent=67 // pred_fallthru
          _
        // Predicated region
        $region77: #{_forward_impl.5} parent=67 // pred_check
          %p1167 = pneg %p175
        $region78: #{_forward_impl.5} parent=67 // pred_check_branch
          %1169 = sbr.rel (%p1167) target = $region80
        $region79: #{_forward_impl.5} parent=67 // pred_region
          %p1170 = scmp.lt.s32.totalorder %s27, 1
          %s1171 = scalar_select %p1170, %s27, 1
          %s1172 = smul.addr %s1171, 2
          %s1173 = smul.addr %s1172, 8
          %s1174 = scalar_lea.vmem %s5, %s1173
        $region80: #{_forward_impl.5} parent=67 // pred_fallthru
          _
        // Predicated region
        $region81: #{_forward_impl.5} parent=67 // pred_check
          %p1175 = pneg %p201
        $region82: #{_forward_impl.5} parent=67 // pred_check_branch
          %1177 = sbr.rel (%p1175) target = $region84
        $region83: #{_forward_impl.5} parent=67 // pred_region
          %p1178 = scmp.lt.s32.totalorder %s27, 1
          %s1179 = scalar_select %p1178, %s27, 1
          %s1180 = smul.addr %s1179, 2
          %s1181 = smul.addr %s1180, 8
          %s1182 = scalar_lea.vmem %s6, %s1181
        $region84: #{_forward_impl.5} parent=67 // pred_fallthru
          _
        // Predicated region
        $region85: #{_forward_impl.5} parent=67 // pred_check
          %p1183 = pneg %p227
        $region86: #{_forward_impl.5} parent=67 // pred_check_branch
          %1185 = sbr.rel (%p1183) target = $region88
        $region87: #{_forward_impl.5} parent=67 // pred_region
          %p1186 = scmp.lt.s32.totalorder %s27, 1
          %s1187 = scalar_select %p1186, %s27, 1
          %s1188 = smul.addr %s1187, 2
          %s1189 = smul.addr %s1188, 8
          %s1190 = scalar_lea.vmem %s7, %s1189
        $region88: #{_forward_impl.5} parent=67 // pred_fallthru
          _
      $region68: #{_forward_impl.5} parent=5 // pred_fallthru
        _
    $region6: #{_forward_impl.5} parent=1 // loop_footer
      %s25 = sadd.s32 1, %s21
    $region7: #{_forward_impl.5} parent=1 // loop_footer_branch
      %20 = sbr.rel target = $region3
    $region8: #{_forward_impl.5} parent=1 // loop_exit
      _
    %1191 = vsyncpa [#allocation3], 1
    %s1192 = scalar_lea.sflag [#allocation3], 1
    %1193 = vsyncpa %s1192, 1
    %1194 = vsyncpa [#allocation6], 1
    %s1195 = scalar_lea.sflag [#allocation6], 1
    %1196 = vsyncpa %s1195, 1
    %1197 = vsyncpa [#allocation4], 1
    %s1198 = scalar_lea.sflag [#allocation4], 1
    %1199 = vsyncpa %s1198, 1

// kernel: _forward_impl.9
$region0: #{_forward_impl.9}
  #allocation0 [shape = 'u32[]', space=smem, size = 0x4, offset = 0x4, fixed_abs, tag = 'smem constant byte address 0x4 - core index']
  #allocation1 [shape = 'u32[72,128]{1,0:T(1,128)}', space=vmem, size = 0x9000, scoped, tag = 'internal scratch']
  %s0 = inlined_call_operand.vmem [shape: s32[2], index: 0, kind: input, shape index: {}]
  %s1 = inlined_call_operand.vmem [shape: f32[2,6,128], index: 1, kind: input, shape index: {}]
  %s2 = inlined_call_operand.vmem [shape: f32[2,6,128], index: 2, kind: input, shape index: {}]
  %s3 = inlined_call_operand.vmem [shape: f32[2,1,128], index: 3, kind: output, shape index: {}]
  %s4 = sld [smem:[#allocation0]]
  $region53: #{_forward_impl.9} parent=0
    _
  %s6 = ssub.s32 1, %s4
  %s7 = scalar_select 0, %s6, %s4
  $region1: #{_forward_impl.9} parent=0
    #allocation2 [shape = 'u8[512]{0}', space=smem, size = 0x200, scoped, tag = 'input window, operand 0, single buffered']
    #allocation3 [shape = 's32[2]{0}', space=sflag, size = 0x8, scoped, tag = 'scoped memory for _forward_impl.9']
    %8 = vsyncpa [#allocation3], 0
    loop: start=0, step=1, limit=4
    $region2: #{_forward_impl.9} parent=1 // loop_pre_header
      _
    $region3: #{_forward_impl.9} parent=1 // loop_header
      %s10 = sphi 0, %s14
      %p11 = scmp.ge.s32.totalorder %s10, 4
      %s17 = sphi 0, %s29
      %s18 = sphi 0, %s25
      %s19 = sphi 0, %s17
      %s20 = sphi 0, %s18
      %s21 = sphi 0, %s19
      %s22 = sphi 0, %s20
      %s30 = sphi 0, %s30
      %s32 = sphi 0, %s30
      %s33 = sphi 0, %s32
      %s47 = sphi 0, %s33
      %s55 = sphi 0, %s57
      %s58 = sphi 0, %s55
      %s59 = sphi 0, %s58
      %s75 = sphi 0, %s59
      %s83 = sphi 0, %s85
      %s86 = sphi 0, %s83
      %s87 = sphi 0, %s86
      %s103 = sphi 0, %s87
      %s109 = sphi 0, %s111
      %s112 = sphi 0, %s109
      %s113 = sphi 0, %s112
      %s129 = sphi 0, %s113
    $region4: #{_forward_impl.9} parent=1 // loop_header_branch
      %13 = sbr.rel (%p11) target = $region8
    $region5: #{_forward_impl.9} parent=1 // loop_body
      %s15 = ssub.s32 %s10, 1
      %s16 = ssub.s32 %s10, 2
      %s23 = sadd.s32 1, %s18
      %p24 = scmp.ge.s32.totalorder %s23, 1
      %s25 = scalar_select %p24, 0, %s23
      %s26 = sadd.s32 1, %s17
      %s27 = scalar_select %p24, %s26, %s17
      %p28 = scmp.ge.s32.totalorder %s27, 2
      %s29 = scalar_select %p28, 0, %s27
      %s31 = sadd.s32 %s30, 1
      %p34 = scmp.eq.s32.totalorder %s10, 1
      %p35 = scmp.ne.s32.totalorder %s30, %s32
      %p36 = scmp.eq.s32.totalorder %s10, 0
      %p37 = por %p35, %p36
      %p38 = scmp.ne.s32.totalorder %s30, %s32
      %p39 = scmp.eq.s32.totalorder %s15, 1
      %p40 = por %p38, %p39
      %p41 = scmp.ne.s32.totalorder %s32, %s33
      %p42 = scmp.eq.s32.totalorder %s15, 0
      %p43 = por %p41, %p42
      %p44 = scmp.ne.s32.totalorder %s32, %s33
      %p45 = scmp.eq.s32.totalorder %s16, 1
      %p46 = por %p44, %p45
      %p48 = scmp.ne.s32.totalorder %s33, %s47
      %p49 = scmp.eq.s32.totalorder %s16, 0
      %p50 = por %p48, %p49
      %s51 = ssub.s32 %s17, %s29
      %s52 = ssub.s32 %s18, %s25
      %s53 = sor.u32 %s51, %s52
      %p54 = scmp.eq.s32.totalorder %s53, 0
      %s56 = sadd.s32 %s55, 1
      %s57 = scalar_select %p54, %s55, %s56
      %p60 = pneg %p54
      %p61 = scmp.eq.s32.totalorder %s10, 1
      %p62 = por %p60, %p61
      %p63 = scmp.ne.s32.totalorder %s55, %s58
      %p64 = scmp.eq.s32.totalorder %s10, 0
      %p65 = por %p63, %p64
      %p66 = scmp.ne.s32.totalorder %s55, %s58
      %p67 = scmp.eq.s32.totalorder %s15, 1
      %p68 = por %p66, %p67
      %p69 = scmp.ne.s32.totalorder %s58, %s59
      %p70 = scmp.eq.s32.totalorder %s15, 0
      %p71 = por %p69, %p70
      %p72 = scmp.ne.s32.totalorder %s58, %s59
      %p73 = scmp.eq.s32.totalorder %s16, 1
      %p74 = por %p72, %p73
      %p76 = scmp.ne.s32.totalorder %s59, %s75
      %p77 = scmp.eq.s32.totalorder %s16, 0
      %p78 = por %p76, %p77
      %s79 = ssub.s32 %s17, %s29
      %s80 = ssub.s32 %s18, %s25
      %s81 = sor.u32 %s79, %s80
      %p82 = scmp.eq.s32.totalorder %s81, 0
      %s84 = sadd.s32 %s83, 1
      %s85 = scalar_select %p82, %s83, %s84
      %p88 = pneg %p82
      %p89 = scmp.eq.s32.totalorder %s10, 1
      %p90 = por %p88, %p89
      %p91 = scmp.ne.s32.totalorder %s83, %s86
      %p92 = scmp.eq.s32.totalorder %s10, 0
      %p93 = por %p91, %p92
      %p94 = scmp.ne.s32.totalorder %s83, %s86
      %p95 = scmp.eq.s32.totalorder %s15, 1
      %p96 = por %p94, %p95
      %p97 = scmp.ne.s32.totalorder %s86, %s87
      %p98 = scmp.eq.s32.totalorder %s15, 0
      %p99 = por %p97, %p98
      %p100 = scmp.ne.s32.totalorder %s86, %s87
      %p101 = scmp.eq.s32.totalorder %s16, 1
      %p102 = por %p100, %p101
      %p104 = scmp.ne.s32.totalorder %s87, %s103
      %p105 = scmp.eq.s32.totalorder %s16, 0
      %p106 = por %p104, %p105
      %s107 = ssub.s32 %s17, %s29
      %p108 = scmp.eq.s32.totalorder %s107, 0
      %s110 = sadd.s32 %s109, 1
      %s111 = scalar_select %p108, %s109, %s110
      %p114 = pneg %p108
      %p115 = scmp.eq.s32.totalorder %s10, 1
      %p116 = por %p114, %p115
      %p117 = scmp.ne.s32.totalorder %s109, %s112
      %p118 = scmp.eq.s32.totalorder %s10, 0
      %p119 = por %p117, %p118
      %p120 = scmp.ne.s32.totalorder %s109, %s112
      %p121 = scmp.eq.s32.totalorder %s15, 1
      %p122 = por %p120, %p121
      %p123 = scmp.ne.s32.totalorder %s112, %s113
      %p124 = scmp.eq.s32.totalorder %s15, 0
      %p125 = por %p123, %p124
      %p126 = scmp.ne.s32.totalorder %s112, %s113
      %p127 = scmp.eq.s32.totalorder %s16, 1
      %p128 = por %p126, %p127
      %p130 = scmp.ne.s32.totalorder %s113, %s129
      %p131 = scmp.eq.s32.totalorder %s16, 0
      %p132 = por %p130, %p131
      %p133 = scmp.le.s32.totalorder 1, %s10
      %p134 = scmp.lt.s32.totalorder %s10, 3
      %p135 = pnand %p133, %p134
      %p136 = pneg %p135
      // Predicated region
      $region9: #{_forward_impl.9} parent=5 // pred_check
        _
      $region10: #{_forward_impl.9} parent=5 // pred_check_branch
        %138 = sbr.rel (%p135) target = $region12
      $region11: #{_forward_impl.9} parent=5 // pred_region
        %s139 = ssub.s32 %s10, 1
        // Predicated region
        $region13: #{_forward_impl.9} parent=11 // pred_check
          %p140 = pneg %p43
        $region14: #{_forward_impl.9} parent=11 // pred_check_branch
          %142 = sbr.rel (%p140) target = $region16
        $region15: #{_forward_impl.9} parent=11 // pred_region
          %144 = vsyncadd [#allocation3], 0
          %s146 = sshll.u32 %s0, 4
          %s147 = int_to_ptr.vmem [resolvable:$true] %s146
          %149 = dma.vmem_to_smem %s147, 16, [#allocation2], [#allocation3]
        $region16: #{_forward_impl.9} parent=11 // pred_fallthru
          _
      $region12: #{_forward_impl.9} parent=5 // pred_fallthru
        _
      %p150 = scmp.lt.s32.totalorder %s10, 2
      // Predicated region
      $region17: #{_forward_impl.9} parent=5 // pred_check
        %p151 = pneg %p150
      $region18: #{_forward_impl.9} parent=5 // pred_check_branch
        %153 = sbr.rel (%p151) target = $region20
      $region19: #{_forward_impl.9} parent=5 // pred_region
        // Predicated region
        $region21: #{_forward_impl.9} parent=19 // pred_check
          %p154 = pneg %p65
        $region22: #{_forward_impl.9} parent=19 // pred_check_branch
          %156 = sbr.rel (%p154) target = $region24
        $region23: #{_forward_impl.9} parent=19 // pred_region
          %p157 = scmp.lt.s32.totalorder %s17, 1
          %s158 = scalar_select %p157, %s17, 1
          %p159 = scmp.lt.s32.totalorder %s18, 0
          %s160 = scalar_select %p159, %s18, 0
          %s161 = sadd.s32 %s160, %s158
          %s162 = smul.addr %s161, 8
          %s163 = scalar_lea.vmem %s1, %s162
        $region24: #{_forward_impl.9} parent=19 // pred_fallthru
          _
        // Predicated region
        $region25: #{_forward_impl.9} parent=19 // pred_check
          %p164 = pneg %p93
        $region26: #{_forward_impl.9} parent=19 // pred_check_branch
          %166 = sbr.rel (%p164) target = $region28
        $region27: #{_forward_impl.9} parent=19 // pred_region
          %p167 = scmp.lt.s32.totalorder %s17, 1
          %s168 = scalar_select %p167, %s17, 1
          %p169 = scmp.lt.s32.totalorder %s18, 0
          %s170 = scalar_select %p169, %s18, 0
          %s171 = sadd.s32 %s170, %s168
          %s172 = smul.addr %s171, 8
          %s173 = scalar_lea.vmem %s2, %s172
        $region28: #{_forward_impl.9} parent=19 // pred_fallthru
          _
      $region20: #{_forward_impl.9} parent=5 // pred_fallthru
        _
      %p174 = scmp.le.s32.totalorder 1, %s10
      %p175 = scmp.lt.s32.totalorder %s10, 3
      %p176 = pnand %p174, %p175
      %p177 = pneg %p176
      // Predicated region
      $region29: #{_forward_impl.9} parent=5 // pred_check
        _
      $region30: #{_forward_impl.9} parent=5 // pred_check_branch
        %179 = sbr.rel (%p176) target = $region32
      $region31: #{_forward_impl.9} parent=5 // pred_region
        %s180 = ssub.s32 %s10, 1
        // Predicated region
        $region33: #{_forward_impl.9} parent=31 // pred_check
          %p181 = pneg %p43
        $region34: #{_forward_impl.9} parent=31 // pred_check_branch
          %183 = sbr.rel (%p181) target = $region36
        $region35: #{_forward_impl.9} parent=31 // pred_region
          %185 = dma.done [#allocation3], 16
        $region36: #{_forward_impl.9} parent=31 // pred_fallthru
          _
        %186 = sfence
        %p187 = pneg %p43
        %p188 = pneg %p40
        %p189 = scmp.lt.s32.totalorder %s19, 1
        %s190 = scalar_select %p189, %s19, 1
        %p191 = scmp.lt.s32.totalorder %s20, 0
        %s192 = scalar_select %p191, %s20, 0
        %s193 = sadd.s32 %s192, %s190
        %s194 = smul.addr %s193, 8
        %s195 = scalar_lea.vmem %s1, %s194
        %p196 = pneg %p71
        %p197 = pneg %p68
        %p198 = scmp.lt.s32.totalorder %s19, 1
        %s199 = scalar_select %p198, %s19, 1
        %p200 = scmp.lt.s32.totalorder %s20, 0
        %s201 = scalar_select %p200, %s20, 0
        %s202 = sadd.s32 %s201, %s199
        %s203 = smul.addr %s202, 8
        %s204 = scalar_lea.vmem %s2, %s203
        %p205 = pneg %p99
        %p206 = pneg %p96
        %p207 = pneg %p125
        %p208 = pneg %p122
        %p209 = scmp.lt.s32.totalorder %s19, 1
        %s210 = scalar_select %p209, %s19, 1
        %s211 = scalar_lea.vmem %s3, %s210
        %p212 = scmp.lt.s32.totalorder %s19, 1
        %s213 = scalar_select %p212, %s19, 1
        %p214 = scmp.lt.s32.totalorder %s20, 0
        %s215 = scalar_select %p214, %s20, 0
        %s216 = sadd.s32 %s215, %s213
        %s217 = smul.addr %s216, 8
        %s218 = scalar_lea.vmem %s1, %s217
        %p219 = scmp.lt.s32.totalorder %s19, 1
        %s220 = scalar_select %p219, %s19, 1
        %p221 = scmp.lt.s32.totalorder %s20, 0
        %s222 = scalar_select %p221, %s20, 0
        %s223 = sadd.s32 %s222, %s220
        %s224 = smul.addr %s223, 8
        %s225 = scalar_lea.vmem %s2, %s224
        %p226 = scmp.lt.s32.totalorder %s19, 1
        %s227 = scalar_select %p226, %s19, 1
        %s228 = scalar_lea.vmem %s3, %s227
        %p229 = scmp.eq.s32.totalorder %s20, 0
        // Predicated region
        $region37: #{_forward_impl.9} parent=31 // pred_check
          %p230 = pneg %p229
        $region38: #{_forward_impl.9} parent=31 // pred_check_branch
          %232 = sbr.rel (%p230) target = $region40
        $region39: #{_forward_impl.9} parent=31 // pred_region
          %233 = vst [vmem:[%s228] sm:$0x1] 0.0
        $region40: #{_forward_impl.9} parent=31 // pred_fallthru
          _
        %v234 = vld [vmem:[%s218] sm:$0x3f]
        %v235 = vld [vmem:[%s225] sm:$0x3f]
        %v236 = vmul.f32 %v234, %v235
        %v238 = vrot.slane %v236, 1
        %v240 = vadd.f32 %v236, %v238
        %v241 = vrot.slane %v236, 2
        %v243 = vadd.f32 %v240, %v241
        %v244 = vand.u32 2147483647, %v243
        %s245 = sld [smem:[#allocation2 + %s19]]
        %s246 = smul.u32 %s20, 128
        %v247 = vlaneseq
        %v248 = vand.u32 %v247, 127
        %v249 = vstv %s246
        %v250 = vadd.s32 %v249, %v248
        %v251 = vstv %s245
        %vm252 = vcmp.lt.s32.totalorder %v250, %v251
        %v253 = vsel %vm252, 1.0, 0.0
        %v255 = vrot.slane %v244, 5
        %v257 = vsub.f32 %v244, %v255
        %v258 = vand.u32 2147483647, %v257
        %v259 = vmul.f32 %v258, %v253
        %v261 = vrot.slane %v259, 3
        %vm263 = vcmask 1040384
        %v264 = vsel %vm263, %v261, 0.0
        %265 = vadd.xlane.f32.xlu0 %v264
        %v266 = vpop.xlane.xlu0 %265
        %v267 = vrot.slane %v266, 4
        %v268 = vadd.f32 %v266, %v267
        %v269 = vrot.slane %v268, 2
        %v270 = vadd.f32 %v268, %v269
        %v271 = vrot.slane %v270, 1
        %v272 = vadd.f32 %v270, %v271
        %s273 = vtos %v272
        %v274 = vld [vmem:[%s228] sm:$0x1]
        %vm275 = vcmp.eq.s32.totalorder %v248, 0
        %v276 = vstv %s273
        %v277 = vsel %vm275, %v276, 0.0
        %v278 = vadd.f32 %v274, %v277
        %279 = vst [vmem:[%s228] sm:$0x1] %v278
        %p280 = scmp.lt.s32.totalorder %s19, 1
        %s281 = scalar_select %p280, %s19, 1
        %s282 = scalar_lea.vmem %s3, %s281
        // Predicated region
        $region41: #{_forward_impl.9} parent=31 // pred_check
          %p283 = pneg %p122
        $region42: #{_forward_impl.9} parent=31 // pred_check_branch
          %285 = sbr.rel (%p283) target = $region44
        $region43: #{_forward_impl.9} parent=31 // pred_region
          _
        $region44: #{_forward_impl.9} parent=31 // pred_fallthru
          _
      $region32: #{_forward_impl.9} parent=5 // pred_fallthru
        _
      %p286 = scmp.le.s32.totalorder 2, %s10
      // Predicated region
      $region45: #{_forward_impl.9} parent=5 // pred_check
        %p287 = pneg %p286
      $region46: #{_forward_impl.9} parent=5 // pred_check_branch
        %289 = sbr.rel (%p287) target = $region48
      $region47: #{_forward_impl.9} parent=5 // pred_region
        %s290 = ssub.s32 %s10, 2
        // Predicated region
        $region49: #{_forward_impl.9} parent=47 // pred_check
          %p291 = pneg %p128
        $region50: #{_forward_impl.9} parent=47 // pred_check_branch
          %293 = sbr.rel (%p291) target = $region52
        $region51: #{_forward_impl.9} parent=47 // pred_region
          %p294 = scmp.lt.s32.totalorder %s21, 1
          %s295 = scalar_select %p294, %s21, 1
          %s296 = scalar_lea.vmem %s3, %s295
        $region52: #{_forward_impl.9} parent=47 // pred_fallthru
          _
      $region48: #{_forward_impl.9} parent=5 // pred_fallthru
        _
    $region6: #{_forward_impl.9} parent=1 // loop_footer
      %s14 = sadd.s32 1, %s10
    $region7: #{_forward_impl.9} parent=1 // loop_footer_branch
      %9 = sbr.rel target = $region3
    $region8: #{_forward_impl.9} parent=1 // loop_exit
      _
    %297 = vsyncpa [#allocation3], 1
    %s298 = scalar_lea.sflag [#allocation3], 1
    %299 = vsyncpa %s298, 1

// kernel: _forward_impl.8
$region0: #{_forward_impl.8}
  #allocation0 [shape = 'u32[]', space=smem, size = 0x4, offset = 0x4, fixed_abs, tag = 'smem constant byte address 0x4 - core index']
  #allocation1 [shape = 'u32[72,128]{1,0:T(1,128)}', space=vmem, size = 0x9000, scoped, tag = 'internal scratch']
  %s0 = inlined_call_operand.vmem [shape: f32[2,6,1536], index: 0, kind: input, shape index: {}]
  %s1 = inlined_call_operand.vmem [shape: f32[2,6,1536], index: 1, kind: input, shape index: {}]
  %s2 = inlined_call_operand.vmem [shape: f32[2,1,1536], index: 2, kind: input, shape index: {}]
  %s3 = inlined_call_operand.vmem [shape: f32[2,1,128], index: 3, kind: output, shape index: {}]
  %s4 = sld [smem:[#allocation0]]
  $region49: #{_forward_impl.8} parent=0
    _
  %s6 = ssub.s32 1, %s4
  %s7 = scalar_select 0, %s6, %s4
  loop: start=0, step=1, limit=4
  $region2: #{_forward_impl.8} parent=0 // loop_pre_header
    _
  $region3: #{_forward_impl.8} parent=0 // loop_header
    %s9 = sphi 0, %s13
    %p10 = scmp.ge.s32.totalorder %s9, 4
    %s16 = sphi 0, %s28
    %s17 = sphi 0, %s24
    %s18 = sphi 0, %s16
    %s19 = sphi 0, %s17
    %s20 = sphi 0, %s18
    %s21 = sphi 0, %s19
    %s33 = sphi 0, %s35
    %s36 = sphi 0, %s33
    %s37 = sphi 0, %s36
    %s53 = sphi 0, %s37
    %s61 = sphi 0, %s63
    %s64 = sphi 0, %s61
    %s65 = sphi 0, %s64
    %s81 = sphi 0, %s65
    %s89 = sphi 0, %s91
    %s92 = sphi 0, %s89
    %s93 = sphi 0, %s92
    %s109 = sphi 0, %s93
    %s115 = sphi 0, %s117
    %s118 = sphi 0, %s115
    %s119 = sphi 0, %s118
    %s135 = sphi 0, %s119
  $region4: #{_forward_impl.8} parent=0 // loop_header_branch
    %12 = sbr.rel (%p10) target = $region8
  $region5: #{_forward_impl.8} parent=0 // loop_body
    %s14 = ssub.s32 %s9, 1
    %s15 = ssub.s32 %s9, 2
    %s22 = sadd.s32 1, %s17
    %p23 = scmp.ge.s32.totalorder %s22, 1
    %s24 = scalar_select %p23, 0, %s22
    %s25 = sadd.s32 1, %s16
    %s26 = scalar_select %p23, %s25, %s16
    %p27 = scmp.ge.s32.totalorder %s26, 2
    %s28 = scalar_select %p27, 0, %s26
    %s29 = ssub.s32 %s16, %s28
    %s30 = ssub.s32 %s17, %s24
    %s31 = sor.u32 %s29, %s30
    %p32 = scmp.eq.s32.totalorder %s31, 0
    %s34 = sadd.s32 %s33, 1
    %s35 = scalar_select %p32, %s33, %s34
    %p38 = pneg %p32
    %p39 = scmp.eq.s32.totalorder %s9, 1
    %p40 = por %p38, %p39
    %p41 = scmp.ne.s32.totalorder %s33, %s36
    %p42 = scmp.eq.s32.totalorder %s9, 0
    %p43 = por %p41, %p42
    %p44 = scmp.ne.s32.totalorder %s33, %s36
    %p45 = scmp.eq.s32.totalorder %s14, 1
    %p46 = por %p44, %p45
    %p47 = scmp.ne.s32.totalorder %s36, %s37
    %p48 = scmp.eq.s32.totalorder %s14, 0
    %p49 = por %p47, %p48
    %p50 = scmp.ne.s32.totalorder %s36, %s37
    %p51 = scmp.eq.s32.totalorder %s15, 1
    %p52 = por %p50, %p51
    %p54 = scmp.ne.s32.totalorder %s37, %s53
    %p55 = scmp.eq.s32.totalorder %s15, 0
    %p56 = por %p54, %p55
    %s57 = ssub.s32 %s16, %s28
    %s58 = ssub.s32 %s17, %s24
    %s59 = sor.u32 %s57, %s58
    %p60 = scmp.eq.s32.totalorder %s59, 0
    %s62 = sadd.s32 %s61, 1
    %s63 = scalar_select %p60, %s61, %s62
    %p66 = pneg %p60
    %p67 = scmp.eq.s32.totalorder %s9, 1
    %p68 = por %p66, %p67
    %p69 = scmp.ne.s32.totalorder %s61, %s64
    %p70 = scmp.eq.s32.totalorder %s9, 0
    %p71 = por %p69, %p70
    %p72 = scmp.ne.s32.totalorder %s61, %s64
    %p73 = scmp.eq.s32.totalorder %s14, 1
    %p74 = por %p72, %p73
    %p75 = scmp.ne.s32.totalorder %s64, %s65
    %p76 = scmp.eq.s32.totalorder %s14, 0
    %p77 = por %p75, %p76
    %p78 = scmp.ne.s32.totalorder %s64, %s65
    %p79 = scmp.eq.s32.totalorder %s15, 1
    %p80 = por %p78, %p79
    %p82 = scmp.ne.s32.totalorder %s65, %s81
    %p83 = scmp.eq.s32.totalorder %s15, 0
    %p84 = por %p82, %p83
    %s85 = ssub.s32 %s16, %s28
    %s86 = ssub.s32 %s17, %s24
    %s87 = sor.u32 %s85, %s86
    %p88 = scmp.eq.s32.totalorder %s87, 0
    %s90 = sadd.s32 %s89, 1
    %s91 = scalar_select %p88, %s89, %s90
    %p94 = pneg %p88
    %p95 = scmp.eq.s32.totalorder %s9, 1
    %p96 = por %p94, %p95
    %p97 = scmp.ne.s32.totalorder %s89, %s92
    %p98 = scmp.eq.s32.totalorder %s9, 0
    %p99 = por %p97, %p98
    %p100 = scmp.ne.s32.totalorder %s89, %s92
    %p101 = scmp.eq.s32.totalorder %s14, 1
    %p102 = por %p100, %p101
    %p103 = scmp.ne.s32.totalorder %s92, %s93
    %p104 = scmp.eq.s32.totalorder %s14, 0
    %p105 = por %p103, %p104
    %p106 = scmp.ne.s32.totalorder %s92, %s93
    %p107 = scmp.eq.s32.totalorder %s15, 1
    %p108 = por %p106, %p107
    %p110 = scmp.ne.s32.totalorder %s93, %s109
    %p111 = scmp.eq.s32.totalorder %s15, 0
    %p112 = por %p110, %p111
    %s113 = ssub.s32 %s16, %s28
    %p114 = scmp.eq.s32.totalorder %s113, 0
    %s116 = sadd.s32 %s115, 1
    %s117 = scalar_select %p114, %s115, %s116
    %p120 = pneg %p114
    %p121 = scmp.eq.s32.totalorder %s9, 1
    %p122 = por %p120, %p121
    %p123 = scmp.ne.s32.totalorder %s115, %s118
    %p124 = scmp.eq.s32.totalorder %s9, 0
    %p125 = por %p123, %p124
    %p126 = scmp.ne.s32.totalorder %s115, %s118
    %p127 = scmp.eq.s32.totalorder %s14, 1
    %p128 = por %p126, %p127
    %p129 = scmp.ne.s32.totalorder %s118, %s119
    %p130 = scmp.eq.s32.totalorder %s14, 0
    %p131 = por %p129, %p130
    %p132 = scmp.ne.s32.totalorder %s118, %s119
    %p133 = scmp.eq.s32.totalorder %s15, 1
    %p134 = por %p132, %p133
    %p136 = scmp.ne.s32.totalorder %s119, %s135
    %p137 = scmp.eq.s32.totalorder %s15, 0
    %p138 = por %p136, %p137
    %p139 = scmp.le.s32.totalorder 1, %s9
    %p140 = scmp.lt.s32.totalorder %s9, 3
    %p141 = pnand %p139, %p140
    %p142 = pneg %p141
    // Predicated region
    $region9: #{_forward_impl.8} parent=5 // pred_check
      _
    $region10: #{_forward_impl.8} parent=5 // pred_check_branch
      %144 = sbr.rel (%p141) target = $region12
    $region11: #{_forward_impl.8} parent=5 // pred_region
      %s145 = ssub.s32 %s9, 1
    $region12: #{_forward_impl.8} parent=5 // pred_fallthru
      _
    %p146 = scmp.lt.s32.totalorder %s9, 2
    // Predicated region
    $region13: #{_forward_impl.8} parent=5 // pred_check
      %p147 = pneg %p146
    $region14: #{_forward_impl.8} parent=5 // pred_check_branch
      %149 = sbr.rel (%p147) target = $region16
    $region15: #{_forward_impl.8} parent=5 // pred_region
      // Predicated region
      $region17: #{_forward_impl.8} parent=15 // pred_check
        %p150 = pneg %p43
      $region18: #{_forward_impl.8} parent=15 // pred_check_branch
        %152 = sbr.rel (%p150) target = $region20
      $region19: #{_forward_impl.8} parent=15 // pred_region
        %s153 = smul.u32 12, %s17
        %p154 = scmp.lt.s32.totalorder %s16, 1
        %s155 = scalar_select %p154, %s16, 1
        %p156 = scmp.lt.s32.totalorder %s153, 11
        %s157 = scalar_select %p156, %s153, 11
        %s158 = smul.addr %s155, 12
        %s159 = sadd.s32 %s157, %s158
        %s160 = smul.addr %s159, 8
        %s161 = scalar_lea.vmem %s0, %s160
        %s162 = smul.u32 12, %s17
      $region20: #{_forward_impl.8} parent=15 // pred_fallthru
        _
      // Predicated region
      $region21: #{_forward_impl.8} parent=15 // pred_check
        %p163 = pneg %p71
      $region22: #{_forward_impl.8} parent=15 // pred_check_branch
        %165 = sbr.rel (%p163) target = $region24
      $region23: #{_forward_impl.8} parent=15 // pred_region
        %s166 = smul.u32 12, %s17
        %p167 = scmp.lt.s32.totalorder %s16, 1
        %s168 = scalar_select %p167, %s16, 1
        %p169 = scmp.lt.s32.totalorder %s166, 11
        %s170 = scalar_select %p169, %s166, 11
        %s171 = smul.addr %s168, 12
        %s172 = sadd.s32 %s170, %s171
        %s173 = smul.addr %s172, 8
        %s174 = scalar_lea.vmem %s1, %s173
        %s175 = smul.u32 12, %s17
      $region24: #{_forward_impl.8} parent=15 // pred_fallthru
        _
      // Predicated region
      $region25: #{_forward_impl.8} parent=15 // pred_check
        %p176 = pneg %p99
      $region26: #{_forward_impl.8} parent=15 // pred_check_branch
        %178 = sbr.rel (%p176) target = $region28
      $region27: #{_forward_impl.8} parent=15 // pred_region
        %s179 = smul.u32 12, %s17
        %p180 = scmp.lt.s32.totalorder %s16, 1
        %s181 = scalar_select %p180, %s16, 1
        %p182 = scmp.lt.s32.totalorder %s179, 11
        %s183 = scalar_select %p182, %s179, 11
        %s184 = smul.addr %s181, 12
        %s185 = sadd.s32 %s183, %s184
        %s186 = scalar_lea.vmem %s2, %s185
        %s187 = smul.u32 12, %s17
      $region28: #{_forward_impl.8} parent=15 // pred_fallthru
        _
    $region16: #{_forward_impl.8} parent=5 // pred_fallthru
      _
    %p188 = scmp.le.s32.totalorder 1, %s9
    %p189 = scmp.lt.s32.totalorder %s9, 3
    %p190 = pnand %p188, %p189
    %p191 = pneg %p190
    // Predicated region
    $region29: #{_forward_impl.8} parent=5 // pred_check
      _
    $region30: #{_forward_impl.8} parent=5 // pred_check_branch
      %193 = sbr.rel (%p190) target = $region32
    $region31: #{_forward_impl.8} parent=5 // pred_region
      %s194 = ssub.s32 %s9, 1
      %s195 = smul.u32 12, %s19
      %p196 = scmp.lt.s32.totalorder %s18, 1
      %s197 = scalar_select %p196, %s18, 1
      %p198 = scmp.lt.s32.totalorder %s195, 11
      %s199 = scalar_select %p198, %s195, 11
      %s200 = smul.addr %s197, 12
      %s201 = sadd.s32 %s199, %s200
      %s202 = smul.addr %s201, 8
      %s203 = scalar_lea.vmem %s0, %s202
      %p204 = pneg %p49
      %p205 = pneg %p46
      %s206 = smul.u32 12, %s19
      %p207 = scmp.lt.s32.totalorder %s18, 1
      %s208 = scalar_select %p207, %s18, 1
      %p209 = scmp.lt.s32.totalorder %s206, 11
      %s210 = scalar_select %p209, %s206, 11
      %s211 = smul.addr %s208, 12
      %s212 = sadd.s32 %s210, %s211
      %s213 = smul.addr %s212, 8
      %s214 = scalar_lea.vmem %s1, %s213
      %p215 = pneg %p77
      %p216 = pneg %p74
      %s217 = smul.u32 12, %s19
      %p218 = scmp.lt.s32.totalorder %s18, 1
      %s219 = scalar_select %p218, %s18, 1
      %p220 = scmp.lt.s32.totalorder %s217, 11
      %s221 = scalar_select %p220, %s217, 11
      %s222 = smul.addr %s219, 12
      %s223 = sadd.s32 %s221, %s222
      %s224 = scalar_lea.vmem %s2, %s223
      %p225 = pneg %p105
      %p226 = pneg %p102
      %p227 = pneg %p131
      %p228 = pneg %p128
      %p229 = scmp.lt.s32.totalorder %s18, 1
      %s230 = scalar_select %p229, %s18, 1
      %s231 = scalar_lea.vmem %s3, %s230
      %s232 = smul.u32 12, %s19
      %p233 = scmp.lt.s32.totalorder %s18, 1
      %s234 = scalar_select %p233, %s18, 1
      %p235 = scmp.lt.s32.totalorder %s232, 11
      %s236 = scalar_select %p235, %s232, 11
      %s237 = smul.addr %s234, 12
      %s238 = sadd.s32 %s236, %s237
      %s239 = smul.addr %s238, 8
      %s240 = scalar_lea.vmem %s0, %s239
      %s241 = smul.u32 12, %s19
      %s242 = smul.u32 12, %s19
      %p243 = scmp.lt.s32.totalorder %s18, 1
      %s244 = scalar_select %p243, %s18, 1
      %p245 = scmp.lt.s32.totalorder %s242, 11
      %s246 = scalar_select %p245, %s242, 11
      %s247 = smul.addr %s244, 12
      %s248 = sadd.s32 %s246, %s247
      %s249 = smul.addr %s248, 8
      %s250 = scalar_lea.vmem %s1, %s249
      %s251 = smul.u32 12, %s19
      %s252 = smul.u32 12, %s19
      %p253 = scmp.lt.s32.totalorder %s18, 1
      %s254 = scalar_select %p253, %s18, 1
      %p255 = scmp.lt.s32.totalorder %s252, 11
      %s256 = scalar_select %p255, %s252, 11
      %s257 = smul.addr %s254, 12
      %s258 = sadd.s32 %s256, %s257
      %s259 = scalar_lea.vmem %s2, %s258
      %s260 = smul.u32 12, %s19
      %p261 = scmp.lt.s32.totalorder %s18, 1
      %s262 = scalar_select %p261, %s18, 1
      %s263 = scalar_lea.vmem %s3, %s262
      %p264 = scmp.eq.s32.totalorder %s19, 0
      // Predicated region
      $region33: #{_forward_impl.8} parent=31 // pred_check
        %p265 = pneg %p264
      $region34: #{_forward_impl.8} parent=31 // pred_check_branch
        %267 = sbr.rel (%p265) target = $region36
      $region35: #{_forward_impl.8} parent=31 // pred_region
        %268 = vst [vmem:[%s263] sm:$0x1] 0.0
      $region36: #{_forward_impl.8} parent=31 // pred_fallthru
        _
      %v269 = vld [vmem:[%s240] sm:$0x3f]
      %v270 = vld [vmem:[%s240 + $0x8] sm:$0x3f]
      %v271 = vld [vmem:[%s240 + $0x10] sm:$0x3f]
      %v272 = vld [vmem:[%s240 + $0x18] sm:$0x3f]
      %v273 = vld [vmem:[%s240 + $0x20] sm:$0x3f]
      %v274 = vld [vmem:[%s240 + $0x28] sm:$0x3f]
      %v275 = vld [vmem:[%s240 + $0x30] sm:$0x3f]
      %v276 = vld [vmem:[%s240 + $0x38] sm:$0x3f]
      %v277 = vld [vmem:[%s240 + $0x40] sm:$0x3f]
      %v278 = vld [vmem:[%s240 + $0x48] sm:$0x3f]
      %v279 = vld [vmem:[%s240 + $0x50] sm:$0x3f]
      %v280 = vld [vmem:[%s240 + $0x58] sm:$0x3f]
      %v281 = vld [vmem:[%s250] sm:$0x3f]
      %v282 = vld [vmem:[%s250 + $0x8] sm:$0x3f]
      %v283 = vld [vmem:[%s250 + $0x10] sm:$0x3f]
      %v284 = vld [vmem:[%s250 + $0x18] sm:$0x3f]
      %v285 = vld [vmem:[%s250 + $0x20] sm:$0x3f]
      %v286 = vld [vmem:[%s250 + $0x28] sm:$0x3f]
      %v287 = vld [vmem:[%s250 + $0x30] sm:$0x3f]
      %v288 = vld [vmem:[%s250 + $0x38] sm:$0x3f]
      %v289 = vld [vmem:[%s250 + $0x40] sm:$0x3f]
      %v290 = vld [vmem:[%s250 + $0x48] sm:$0x3f]
      %v291 = vld [vmem:[%s250 + $0x50] sm:$0x3f]
      %v292 = vld [vmem:[%s250 + $0x58] sm:$0x3f]
      %v293 = vmul.f32 %v269, %v281
      %v294 = vmul.f32 %v270, %v282
      %v295 = vmul.f32 %v271, %v283
      %v296 = vmul.f32 %v272, %v284
      %v297 = vmul.f32 %v273, %v285
      %v298 = vmul.f32 %v274, %v286
      %v299 = vmul.f32 %v275, %v287
      %v300 = vmul.f32 %v276, %v288
      %v301 = vmul.f32 %v277, %v289
      %v302 = vmul.f32 %v278, %v290
      %v303 = vmul.f32 %v279, %v291
      %v304 = vmul.f32 %v280, %v292
      %v317 = vrot.slane %v293, 1
      %v318 = vrot.slane %v294, 1
      %v319 = vrot.slane %v295, 1
      %v320 = vrot.slane %v296, 1
      %v321 = vrot.slane %v297, 1
      %v322 = vrot.slane %v298, 1
      %v323 = vrot.slane %v299, 1
      %v324 = vrot.slane %v300, 1
      %v325 = vrot.slane %v301, 1
      %v326 = vrot.slane %v302, 1
      %v327 = vrot.slane %v303, 1
      %v328 = vrot.slane %v304, 1
      %v341 = vadd.f32 %v293, %v317
      %v342 = vadd.f32 %v294, %v318
      %v343 = vadd.f32 %v295, %v319
      %v344 = vadd.f32 %v296, %v320
      %v345 = vadd.f32 %v297, %v321
      %v346 = vadd.f32 %v298, %v322
      %v347 = vadd.f32 %v299, %v323
      %v348 = vadd.f32 %v300, %v324
      %v349 = vadd.f32 %v301, %v325
      %v350 = vadd.f32 %v302, %v326
      %v351 = vadd.f32 %v303, %v327
      %v352 = vadd.f32 %v304, %v328
      %v353 = vrot.slane %v293, 2
      %v354 = vrot.slane %v294, 2
      %v355 = vrot.slane %v295, 2
      %v356 = vrot.slane %v296, 2
      %v357 = vrot.slane %v297, 2
      %v358 = vrot.slane %v298, 2
      %v359 = vrot.slane %v299, 2
      %v360 = vrot.slane %v300, 2
      %v361 = vrot.slane %v301, 2
      %v362 = vrot.slane %v302, 2
      %v363 = vrot.slane %v303, 2
      %v364 = vrot.slane %v304, 2
      %v377 = vadd.f32 %v341, %v353
      %v378 = vadd.f32 %v342, %v354
      %v379 = vadd.f32 %v343, %v355
      %v380 = vadd.f32 %v344, %v356
      %v381 = vadd.f32 %v345, %v357
      %v382 = vadd.f32 %v346, %v358
      %v383 = vadd.f32 %v347, %v359
      %v384 = vadd.f32 %v348, %v360
      %v385 = vadd.f32 %v349, %v361
      %v386 = vadd.f32 %v350, %v362
      %v387 = vadd.f32 %v351, %v363
      %v388 = vadd.f32 %v352, %v364
      %v389 = vand.u32 2147483647, %v377
      %v390 = vand.u32 2147483647, %v378
      %v391 = vand.u32 2147483647, %v379
      %v392 = vand.u32 2147483647, %v380
      %v393 = vand.u32 2147483647, %v381
      %v394 = vand.u32 2147483647, %v382
      %v395 = vand.u32 2147483647, %v383
      %v396 = vand.u32 2147483647, %v384
      %v397 = vand.u32 2147483647, %v385
      %v398 = vand.u32 2147483647, %v386
      %v399 = vand.u32 2147483647, %v387
      %v400 = vand.u32 2147483647, %v388
      %v401 = vld [vmem:[%s259] sm:$0xff]
      %v402 = vld [vmem:[%s259 + $0x8] sm:$0xf]
      %v415 = vrot.slane %v389, 5
      %v416 = vrot.slane %v390, 5
      %v417 = vrot.slane %v391, 5
      %v418 = vrot.slane %v392, 5
      %v419 = vrot.slane %v393, 5
      %v420 = vrot.slane %v394, 5
      %v421 = vrot.slane %v395, 5
      %v422 = vrot.slane %v396, 5
      %v423 = vrot.slane %v397, 5
      %v424 = vrot.slane %v398, 5
      %v425 = vrot.slane %v399, 5
      %v426 = vrot.slane %v400, 5
      %v439 = vsub.f32 %v389, %v415
      %v440 = vsub.f32 %v390, %v416
      %v441 = vsub.f32 %v391, %v417
      %v442 = vsub.f32 %v392, %v418
      %v443 = vsub.f32 %v393, %v419
      %v444 = vsub.f32 %v394, %v420
      %v445 = vsub.f32 %v395, %v421
      %v446 = vsub.f32 %v396, %v422
      %v447 = vsub.f32 %v397, %v423
      %v448 = vsub.f32 %v398, %v424
      %v449 = vsub.f32 %v399, %v425
      %v450 = vsub.f32 %v400, %v426
      %v451 = vand.u32 2147483647, %v439
      %v452 = vand.u32 2147483647, %v440
      %v453 = vand.u32 2147483647, %v441
      %v454 = vand.u32 2147483647, %v442
      %v455 = vand.u32 2147483647, %v443
      %v456 = vand.u32 2147483647, %v444
      %v457 = vand.u32 2147483647, %v445
      %v458 = vand.u32 2147483647, %v446
      %v459 = vand.u32 2147483647, %v447
      %v460 = vand.u32 2147483647, %v448
      %v461 = vand.u32 2147483647, %v449
      %v462 = vand.u32 2147483647, %v450
      %vm463 = vcmp.lt.f32.partialorder %v389, 0.3
      %vm464 = vcmp.lt.f32.partialorder %v390, 0.3
      %vm465 = vcmp.lt.f32.partialorder %v391, 0.3
      %vm466 = vcmp.lt.f32.partialorder %v392, 0.3
      %vm467 = vcmp.lt.f32.partialorder %v393, 0.3
      %vm468 = vcmp.lt.f32.partialorder %v394, 0.3
      %vm469 = vcmp.lt.f32.partialorder %v395, 0.3
      %vm470 = vcmp.lt.f32.partialorder %v396, 0.3
      %vm471 = vcmp.lt.f32.partialorder %v397, 0.3
      %vm472 = vcmp.lt.f32.partialorder %v398, 0.3
      %vm473 = vcmp.lt.f32.partialorder %v399, 0.3
      %vm474 = vcmp.lt.f32.partialorder %v400, 0.3
      %v475 = vsel %vm463, 1.0, 0.0
      %v476 = vsel %vm464, 1.0, 0.0
      %v477 = vsel %vm465, 1.0, 0.0
      %v478 = vsel %vm466, 1.0, 0.0
      %v479 = vsel %vm467, 1.0, 0.0
      %v480 = vsel %vm468, 1.0, 0.0
      %v481 = vsel %vm469, 1.0, 0.0
      %v482 = vsel %vm470, 1.0, 0.0
      %v483 = vsel %vm471, 1.0, 0.0
      %v484 = vsel %vm472, 1.0, 0.0
      %v485 = vsel %vm473, 1.0, 0.0
      %v486 = vsel %vm474, 1.0, 0.0
      %v489 = vperm.slane %v401, 0
      %v490 = vperm.slane %v401, 1
      %v491 = vperm.slane %v401, 2
      %v492 = vperm.slane %v401, 3
      %v493 = vperm.slane %v401, 4
      %v494 = vperm.slane %v401, 5
      %v495 = vperm.slane %v401, 6
      %v496 = vperm.slane %v401, 7
      %v497 = vperm.slane %v402, 0
      %v498 = vperm.slane %v402, 1
      %v499 = vperm.slane %v402, 2
      %v500 = vperm.slane %v402, 3
      %v513 = vmul.f32 %v475, %v489
      %v514 = vmul.f32 %v476, %v490
      %v515 = vmul.f32 %v477, %v491
      %v516 = vmul.f32 %v478, %v492
      %v517 = vmul.f32 %v479, %v493
      %v518 = vmul.f32 %v480, %v494
      %v519 = vmul.f32 %v481, %v495
      %v520 = vmul.f32 %v482, %v496
      %v521 = vmul.f32 %v483, %v497
      %v522 = vmul.f32 %v484, %v498
      %v523 = vmul.f32 %v485, %v499
      %v524 = vmul.f32 %v486, %v500
      %vm525 = vcmp.gt.f32.partialorder %v389, 0.95
      %vm526 = vcmp.gt.f32.partialorder %v390, 0.95
      %vm527 = vcmp.gt.f32.partialorder %v391, 0.95
      %vm528 = vcmp.gt.f32.partialorder %v392, 0.95
      %vm529 = vcmp.gt.f32.partialorder %v393, 0.95
      %vm530 = vcmp.gt.f32.partialorder %v394, 0.95
      %vm531 = vcmp.gt.f32.partialorder %v395, 0.95
      %vm532 = vcmp.gt.f32.partialorder %v396, 0.95
      %vm533 = vcmp.gt.f32.partialorder %v397, 0.95
      %vm534 = vcmp.gt.f32.partialorder %v398, 0.95
      %vm535 = vcmp.gt.f32.partialorder %v399, 0.95
      %vm536 = vcmp.gt.f32.partialorder %v400, 0.95
      %v537 = vsel %vm525, 1.0, 0.0
      %v538 = vsel %vm526, 1.0, 0.0
      %v539 = vsel %vm527, 1.0, 0.0
      %v540 = vsel %vm528, 1.0, 0.0
      %v541 = vsel %vm529, 1.0, 0.0
      %v542 = vsel %vm530, 1.0, 0.0
      %v543 = vsel %vm531, 1.0, 0.0
      %v544 = vsel %vm532, 1.0, 0.0
      %v545 = vsel %vm533, 1.0, 0.0
      %v546 = vsel %vm534, 1.0, 0.0
      %v547 = vsel %vm535, 1.0, 0.0
      %v548 = vsel %vm536, 1.0, 0.0
      %v549 = vmul.f32 %v537, %v489
      %v550 = vmul.f32 %v538, %v490
      %v551 = vmul.f32 %v539, %v491
      %v552 = vmul.f32 %v540, %v492
      %v553 = vmul.f32 %v541, %v493
      %v554 = vmul.f32 %v542, %v494
      %v555 = vmul.f32 %v543, %v495
      %v556 = vmul.f32 %v544, %v496
      %v557 = vmul.f32 %v545, %v497
      %v558 = vmul.f32 %v546, %v498
      %v559 = vmul.f32 %v547, %v499
      %v560 = vmul.f32 %v548, %v500
      %v561 = vmul.f32 %v451, %v513
      %v562 = vmul.f32 %v452, %v514
      %v563 = vmul.f32 %v453, %v515
      %v564 = vmul.f32 %v454, %v516
      %v565 = vmul.f32 %v455, %v517
      %v566 = vmul.f32 %v456, %v518
      %v567 = vmul.f32 %v457, %v519
      %v568 = vmul.f32 %v458, %v520
      %v569 = vmul.f32 %v459, %v521
      %v570 = vmul.f32 %v460, %v522
      %v571 = vmul.f32 %v461, %v523
      %v572 = vmul.f32 %v462, %v524
      %v585 = vrot.slane %v561, 3
      %v586 = vrot.slane %v562, 3
      %v587 = vrot.slane %v563, 3
      %v588 = vrot.slane %v564, 3
      %v589 = vrot.slane %v565, 3
      %v590 = vrot.slane %v566, 3
      %v591 = vrot.slane %v567, 3
      %v592 = vrot.slane %v568, 3
      %v593 = vrot.slane %v569, 3
      %v594 = vrot.slane %v570, 3
      %v595 = vrot.slane %v571, 3
      %v596 = vrot.slane %v572, 3
      %vm609 = vcmask 1040384
      %v610 = vsel %vm609, %v585, 0.0
      %v611 = vsel %vm609, %v586, 0.0
      %v612 = vadd.f32 %v610, %v611
      %v613 = vsel %vm609, %v587, 0.0
      %v614 = vadd.f32 %v612, %v613
      %v615 = vsel %vm609, %v588, 0.0
      %v616 = vadd.f32 %v614, %v615
      %v617 = vsel %vm609, %v589, 0.0
      %v618 = vadd.f32 %v616, %v617
      %v619 = vsel %vm609, %v590, 0.0
      %v620 = vadd.f32 %v618, %v619
      %v621 = vsel %vm609, %v591, 0.0
      %v622 = vadd.f32 %v620, %v621
      %v623 = vsel %vm609, %v592, 0.0
      %v624 = vadd.f32 %v622, %v623
      %v625 = vsel %vm609, %v593, 0.0
      %v626 = vadd.f32 %v624, %v625
      %v627 = vsel %vm609, %v594, 0.0
      %v628 = vadd.f32 %v626, %v627
      %v629 = vsel %vm609, %v595, 0.0
      %v630 = vadd.f32 %v628, %v629
      %v631 = vsel %vm609, %v596, 0.0
      %v632 = vadd.f32 %v630, %v631
      %633 = vadd.xlane.f32.xlu0 %v632
      %v634 = vpop.xlane.xlu0 %633
      %v635 = vrot.slane %v634, 4
      %v636 = vadd.f32 %v634, %v635
      %v637 = vrot.slane %v636, 2
      %v638 = vadd.f32 %v636, %v637
      %v639 = vrot.slane %v638, 1
      %v640 = vadd.f32 %v638, %v639
      %s641 = vtos %v640
      %v654 = vrot.slane %v513, 3
      %v655 = vrot.slane %v514, 3
      %v656 = vrot.slane %v515, 3
      %v657 = vrot.slane %v516, 3
      %v658 = vrot.slane %v517, 3
      %v659 = vrot.slane %v518, 3
      %v660 = vrot.slane %v519, 3
      %v661 = vrot.slane %v520, 3
      %v662 = vrot.slane %v521, 3
      %v663 = vrot.slane %v522, 3
      %v664 = vrot.slane %v523, 3
      %v665 = vrot.slane %v524, 3
      %v678 = vsel %vm609, %v654, 0.0
      %v679 = vsel %vm609, %v655, 0.0
      %v680 = vadd.f32 %v678, %v679
      %v681 = vsel %vm609, %v656, 0.0
      %v682 = vadd.f32 %v680, %v681
      %v683 = vsel %vm609, %v657, 0.0
      %v684 = vadd.f32 %v682, %v683
      %v685 = vsel %vm609, %v658, 0.0
      %v686 = vadd.f32 %v684, %v685
      %v687 = vsel %vm609, %v659, 0.0
      %v688 = vadd.f32 %v686, %v687
      %v689 = vsel %vm609, %v660, 0.0
      %v690 = vadd.f32 %v688, %v689
      %v691 = vsel %vm609, %v661, 0.0
      %v692 = vadd.f32 %v690, %v691
      %v693 = vsel %vm609, %v662, 0.0
      %v694 = vadd.f32 %v692, %v693
      %v695 = vsel %vm609, %v663, 0.0
      %v696 = vadd.f32 %v694, %v695
      %v697 = vsel %vm609, %v664, 0.0
      %v698 = vadd.f32 %v696, %v697
      %v699 = vsel %vm609, %v665, 0.0
      %v700 = vadd.f32 %v698, %v699
      %701 = vadd.xlane.f32.xlu0 %v700
      %v702 = vpop.xlane.xlu0 %701
      %v703 = vrot.slane %v702, 4
      %v704 = vadd.f32 %v702, %v703
      %v705 = vrot.slane %v704, 2
      %v706 = vadd.f32 %v704, %v705
      %v707 = vrot.slane %v706, 1
      %v708 = vadd.f32 %v706, %v707
      %s709 = vtos %v708
      %v710 = vmul.f32 %v451, %v549
      %v711 = vmul.f32 %v452, %v550
      %v712 = vmul.f32 %v453, %v551
      %v713 = vmul.f32 %v454, %v552
      %v714 = vmul.f32 %v455, %v553
      %v715 = vmul.f32 %v456, %v554
      %v716 = vmul.f32 %v457, %v555
      %v717 = vmul.f32 %v458, %v556
      %v718 = vmul.f32 %v459, %v557
      %v719 = vmul.f32 %v460, %v558
      %v720 = vmul.f32 %v461, %v559
      %v721 = vmul.f32 %v462, %v560
      %v734 = vrot.slane %v710, 3
      %v735 = vrot.slane %v711, 3
      %v736 = vrot.slane %v712, 3
      %v737 = vrot.slane %v713, 3
      %v738 = vrot.slane %v714, 3
      %v739 = vrot.slane %v715, 3
      %v740 = vrot.slane %v716, 3
      %v741 = vrot.slane %v717, 3
      %v742 = vrot.slane %v718, 3
      %v743 = vrot.slane %v719, 3
      %v744 = vrot.slane %v720, 3
      %v745 = vrot.slane %v721, 3
      %v758 = vsel %vm609, %v734, 0.0
      %v759 = vsel %vm609, %v735, 0.0
      %v760 = vadd.f32 %v758, %v759
      %v761 = vsel %vm609, %v736, 0.0
      %v762 = vadd.f32 %v760, %v761
      %v763 = vsel %vm609, %v737, 0.0
      %v764 = vadd.f32 %v762, %v763
      %v765 = vsel %vm609, %v738, 0.0
      %v766 = vadd.f32 %v764, %v765
      %v767 = vsel %vm609, %v739, 0.0
      %v768 = vadd.f32 %v766, %v767
      %v769 = vsel %vm609, %v740, 0.0
      %v770 = vadd.f32 %v768, %v769
      %v771 = vsel %vm609, %v741, 0.0
      %v772 = vadd.f32 %v770, %v771
      %v773 = vsel %vm609, %v742, 0.0
      %v774 = vadd.f32 %v772, %v773
      %v775 = vsel %vm609, %v743, 0.0
      %v776 = vadd.f32 %v774, %v775
      %v777 = vsel %vm609, %v744, 0.0
      %v778 = vadd.f32 %v776, %v777
      %v779 = vsel %vm609, %v745, 0.0
      %v780 = vadd.f32 %v778, %v779
      %781 = vadd.xlane.f32.xlu0 %v780
      %v782 = vpop.xlane.xlu0 %781
      %v783 = vrot.slane %v782, 4
      %v784 = vadd.f32 %v782, %v783
      %v785 = vrot.slane %v784, 2
      %v786 = vadd.f32 %v784, %v785
      %v787 = vrot.slane %v786, 1
      %v788 = vadd.f32 %v786, %v787
      %s789 = vtos %v788
      %v802 = vrot.slane %v549, 3
      %v803 = vrot.slane %v550, 3
      %v804 = vrot.slane %v551, 3
      %v805 = vrot.slane %v552, 3
      %v806 = vrot.slane %v553, 3
      %v807 = vrot.slane %v554, 3
      %v808 = vrot.slane %v555, 3
      %v809 = vrot.slane %v556, 3
      %v810 = vrot.slane %v557, 3
      %v811 = vrot.slane %v558, 3
      %v812 = vrot.slane %v559, 3
      %v813 = vrot.slane %v560, 3
      %v826 = vsel %vm609, %v802, 0.0
      %v827 = vsel %vm609, %v803, 0.0
      %v828 = vadd.f32 %v826, %v827
      %v829 = vsel %vm609, %v804, 0.0
      %v830 = vadd.f32 %v828, %v829
      %v831 = vsel %vm609, %v805, 0.0
      %v832 = vadd.f32 %v830, %v831
      %v833 = vsel %vm609, %v806, 0.0
      %v834 = vadd.f32 %v832, %v833
      %v835 = vsel %vm609, %v807, 0.0
      %v836 = vadd.f32 %v834, %v835
      %v837 = vsel %vm609, %v808, 0.0
      %v838 = vadd.f32 %v836, %v837
      %v839 = vsel %vm609, %v809, 0.0
      %v840 = vadd.f32 %v838, %v839
      %v841 = vsel %vm609, %v810, 0.0
      %v842 = vadd.f32 %v840, %v841
      %v843 = vsel %vm609, %v811, 0.0
      %v844 = vadd.f32 %v842, %v843
      %v845 = vsel %vm609, %v812, 0.0
      %v846 = vadd.f32 %v844, %v845
      %v847 = vsel %vm609, %v813, 0.0
      %v848 = vadd.f32 %v846, %v847
      %849 = vadd.xlane.f32.xlu0 %v848
      %v850 = vpop.xlane.xlu0 %849
      %v851 = vrot.slane %v850, 4
      %v852 = vadd.f32 %v850, %v851
      %v853 = vrot.slane %v852, 2
      %v854 = vadd.f32 %v852, %v853
      %v855 = vrot.slane %v854, 1
      %v856 = vadd.f32 %v854, %v855
      %s857 = vtos %v856
      %v858 = vlaneseq
      %v859 = vand.u32 %v858, 127
      %v860 = vld [vmem:[%s263] sm:$0x1]
      %vm861 = vcmp.eq.s32.totalorder %v859, 0
      %v862 = vstv %s641
      %v863 = vsel %vm861, %v862, 0.0
      %vm864 = vcmp.eq.s32.totalorder %v859, 1
      %v865 = vstv %s709
      %v866 = vsel %vm864, %v865, 0.0
      %v867 = vadd.f32 %v863, %v866
      %vm868 = vcmp.eq.s32.totalorder %v859, 2
      %v869 = vstv %s789
      %v870 = vsel %vm868, %v869, 0.0
      %v871 = vadd.f32 %v867, %v870
      %vm872 = vcmp.eq.s32.totalorder %v859, 3
      %v873 = vstv %s857
      %v874 = vsel %vm872, %v873, 0.0
      %v875 = vadd.f32 %v871, %v874
      %v876 = vadd.f32 %v860, %v875
      %877 = vst [vmem:[%s263] sm:$0x1] %v876
      %p878 = scmp.lt.s32.totalorder %s18, 1
      %s879 = scalar_select %p878, %s18, 1
      %s880 = scalar_lea.vmem %s3, %s879
      // Predicated region
      $region37: #{_forward_impl.8} parent=31 // pred_check
        %p881 = pneg %p128
      $region38: #{_forward_impl.8} parent=31 // pred_check_branch
        %883 = sbr.rel (%p881) target = $region40
      $region39: #{_forward_impl.8} parent=31 // pred_region
        _
      $region40: #{_forward_impl.8} parent=31 // pred_fallthru
        _
    $region32: #{_forward_impl.8} parent=5 // pred_fallthru
      _
    %p884 = scmp.le.s32.totalorder 2, %s9
    // Predicated region
    $region41: #{_forward_impl.8} parent=5 // pred_check
      %p885 = pneg %p884
    $region42: #{_forward_impl.8} parent=5 // pred_check_branch
      %887 = sbr.rel (%p885) target = $region44
    $region43: #{_forward_impl.8} parent=5 // pred_region
      %s888 = ssub.s32 %s9, 2
      // Predicated region
      $region45: #{_forward_impl.8} parent=43 // pred_check
        %p889 = pneg %p134
      $region46: #{_forward_impl.8} parent=43 // pred_check_branch
        %891 = sbr.rel (%p889) target = $region48
      $region47: #{_forward_impl.8} parent=43 // pred_region
        %p892 = scmp.lt.s32.totalorder %s20, 1
        %s893 = scalar_select %p892, %s20, 1
        %s894 = scalar_lea.vmem %s3, %s893
      $region48: #{_forward_impl.8} parent=43 // pred_fallthru
        _
    $region44: #{_forward_impl.8} parent=5 // pred_fallthru
      _
  $region6: #{_forward_impl.8} parent=0 // loop_footer
    %s13 = sadd.s32 1, %s9
  $region7: #{_forward_impl.8} parent=0 // loop_footer_branch
    %8 = sbr.rel target = $region3
  $region8: #{_forward_impl.8} parent=0 // loop_exit
    _

</llo_original>
